<compile_context>
chip_gen: v6e
topology: v6e:2x2x1
jax: 0.10.0
libtpu: 0.0.40
codegen_flags: <defaults>
</compile_context>

<pallas_src>
import functools
import math

import jax
import jax.numpy as jnp
from jax import lax
from jax.experimental import pallas as pl
from jax.experimental.pallas import tpu as pltpu


def _round_up(x, m):
    return (x + m - 1) // m * m


# ----------------------------------------------------------------------------------
# Pallas kernels
# ----------------------------------------------------------------------------------
def _matmul_kernel(a_ref, b_ref, s_ref, h_ref, o_ref, acc_ref, *, act):
    @pl.when(pl.program_id(2) == 0)
    def _():
        acc_ref[...] = jnp.zeros_like(acc_ref)

    acc_ref[...] += jnp.dot(a_ref[...], b_ref[...], preferred_element_type=jnp.float32)

    @pl.when(pl.program_id(2) == pl.num_programs(2) - 1)
    def _():
        y = acc_ref[...] * s_ref[...] + h_ref[...]
        if act == "relu":
            y = jnp.maximum(y, 0.0)
        elif act == "tanh":
            y = jnp.tanh(y)
        o_ref[...] = y


def _bmm_kernel(a_ref, b_ref, bias_ref, o_ref, *, act):
    y = jnp.dot(a_ref[...], b_ref[...], preferred_element_type=jnp.float32)
    y = y + bias_ref[...]
    if act == "softplus":        # numerically stable softplus (matches F.softplus threshold=20)
        y = jnp.where(y > 20.0, y, jnp.log(1.0 + jnp.exp(jnp.minimum(y, 20.0))))
    o_ref[...] = y


def _layernorm_kernel(x_ref, g_ref, b_ref, o_ref, *, eps):
    x = x_ref[...]
    mu = jnp.mean(x, axis=-1, keepdims=True)
    xc = x - mu
    var = jnp.mean(xc * xc, axis=-1, keepdims=True)
    o_ref[...] = xc * lax.rsqrt(var + eps) * g_ref[...] + b_ref[...]


def _sel_scan_kernel(u_ref, dt_ref, at_ref, b_ref, c_ref, d_ref, y_ref, h_ref):
    # block shapes: u/dt/y: (gb, L, d); at: (gb, n, d); b/c: (gb, L, n); d: (gb, 1, d)
    # dt is already softplus(delta + delta_bias) (done in the bmm epilogue).
    gb, L, dd = u_ref.shape
    n = at_ref.shape[1]
    h_ref[...] = jnp.zeros_like(h_ref)
    AT = at_ref[...]            # (gb, n, d)   -exp(A_log), transposed
    Dv = d_ref[...]             # (gb, 1, d)

    def body(l, carry):
        u_l = u_ref[:, pl.ds(l, 1), :]          # (gb, 1, d)
        dt_l = dt_ref[:, pl.ds(l, 1), :]        # (gb, 1, d)
        b_l = b_ref[:, pl.ds(l, 1), :]          # (gb, 1, n)
        c_l = c_ref[:, pl.ds(l, 1), :]          # (gb, 1, n)
        dtu = dt_l * u_l                        # (gb, 1, d)
        dA = jnp.exp(dt_l * AT)                 # (gb, n, d)  broadcast over n
        b_col = b_l.reshape(gb, n, 1)           # small lanes->sublanes relayout
        c_col = c_l.reshape(gb, n, 1)
        h = dA * h_ref[...] + b_col * dtu       # VPU outer product, no MXU round-trip
        h_ref[...] = h
        y_l = jnp.sum(c_col * h, axis=1, keepdims=True) + Dv * u_l   # (gb, 1, d)
        y_ref[:, pl.ds(l, 1), :] = y_l
        return carry

    lax.fori_loop(0, L, body, 0)


# ----------------------------------------------------------------------------------
# Pallas wrappers
# ----------------------------------------------------------------------------------
_TM, _TN, _TK = 256, 512, 512        # bf16-aligned tiles; few MiB VMEM incl. double-buffering


def matmul_fused(a, b, scale=None, shift=None, act="none"):
    """act((a @ b) * scale + shift); scale/shift broadcast over rows (per output column)."""
    M, K = a.shape
    N = b.shape[1]
    if scale is None:
        scale = jnp.ones((N,), jnp.float32)
    if shift is None:
        shift = jnp.zeros((N,), jnp.float32)
    tm = min(_TM, _round_up(M, 16))
    tk = min(_TK, _round_up(K, 128))
    tn = min(_TN, _round_up(N, 128))
    Mp, Kp, Np = _round_up(M, tm), _round_up(K, tk), _round_up(N, tn)
    ap = jnp.pad(a, ((0, Mp - M), (0, Kp - K))).astype(jnp.bfloat16)
    bp = jnp.pad(b, ((0, Kp - K), (0, Np - N))).astype(jnp.bfloat16)
    sp = jnp.pad(scale.astype(jnp.float32).reshape(1, N), ((0, 0), (0, Np - N)))
    hp = jnp.pad(shift.astype(jnp.float32).reshape(1, N), ((0, 0), (0, Np - N)))
    out = pl.pallas_call(
        functools.partial(_matmul_kernel, act=act),
        out_shape=jax.ShapeDtypeStruct((Mp, Np), jnp.float32),
        grid=(Mp // tm, Np // tn, Kp // tk),
        in_specs=[pl.BlockSpec((tm, tk), lambda i, j, k: (i, k)),
                  pl.BlockSpec((tk, tn), lambda i, j, k: (k, j)),
                  pl.BlockSpec((1, tn), lambda i, j, k: (0, j)),
                  pl.BlockSpec((1, tn), lambda i, j, k: (0, j))],
        out_specs=pl.BlockSpec((tm, tn), lambda i, j, k: (i, j)),
        scratch_shapes=[pltpu.VMEM((tm, tn), jnp.float32)],
        compiler_params=pltpu.CompilerParams(
            dimension_semantics=("parallel", "parallel", "arbitrary"),
            vmem_limit_bytes=32 * 1024 * 1024),
    )(ap, bp, sp, hp)
    return out[:M, :N]


def bmm(a, b, bias=None, act="none"):
    """Batched matmul over the leading (direction) axis, M tiled, bias+act epilogue."""
    G, M, K = a.shape
    N = b.shape[-1]
    if bias is None:
        bias = jnp.zeros((G, N), jnp.float32)
    tm = min(_TM, _round_up(M, 16))
    Kp, Np, Mp = _round_up(K, 128), _round_up(N, 128), _round_up(M, tm)
    ap = jnp.pad(a, ((0, 0), (0, Mp - M), (0, Kp - K))).astype(jnp.bfloat16)
    bp = jnp.pad(b, ((0, 0), (0, Kp - K), (0, Np - N))).astype(jnp.bfloat16)
    biasp = jnp.pad(bias.astype(jnp.float32).reshape(G, 1, N), ((0, 0), (0, 0), (0, Np - N)))
    out = pl.pallas_call(
        functools.partial(_bmm_kernel, act=act),
        out_shape=jax.ShapeDtypeStruct((G, Mp, Np), jnp.float32),
        grid=(G, Mp // tm),
        in_specs=[pl.BlockSpec((None, tm, Kp), lambda g, i: (g, i, 0)),
                  pl.BlockSpec((None, Kp, Np), lambda g, i: (g, 0, 0)),
                  pl.BlockSpec((None, 1, Np), lambda g, i: (g, 0, 0))],
        out_specs=pl.BlockSpec((None, tm, Np), lambda g, i: (g, i, 0)),
        compiler_params=pltpu.CompilerParams(
            dimension_semantics=("parallel", "parallel"),
            vmem_limit_bytes=32 * 1024 * 1024),
    )(ap, bp, biasp)
    return out[:, :M, :N]


def layernorm(x, g, b, eps=1e-5):
    M, C = x.shape
    tr = min(512, _round_up(M, 8))
    Mp = _round_up(M, tr)
    xp = jnp.pad(x.astype(jnp.float32), ((0, Mp - M), (0, 0)))
    out = pl.pallas_call(
        functools.partial(_layernorm_kernel, eps=eps),
        out_shape=jax.ShapeDtypeStruct((Mp, C), jnp.float32),
        grid=(Mp // tr,),
        in_specs=[pl.BlockSpec((tr, C), lambda i: (i, 0)),
                  pl.BlockSpec((1, C), lambda i: (0, 0)),
                  pl.BlockSpec((1, C), lambda i: (0, 0))],
        out_specs=pl.BlockSpec((tr, C), lambda i: (i, 0)),
        compiler_params=pltpu.CompilerParams(dimension_semantics=("parallel",)),
    )(xp, g.reshape(1, C).astype(jnp.float32), b.reshape(1, C).astype(jnp.float32))
    return out[:M]


def selective_scan(us, dts, AT, Bs, Cs, Ds):
    """us/dts: (G, L, d); AT: (G, n, d); Bs/Cs: (G, L, n); Ds: (G, 1, d) -> (G, L, d).
    dts must already be softplus(delta + delta_bias)."""
    G, L, d = us.shape
    n = AT.shape[1]
    gb = 8 if G % 8 == 0 else (4 if G % 4 == 0 else 1)   # sequences per grid step
    return pl.pallas_call(
        _sel_scan_kernel,
        out_shape=jax.ShapeDtypeStruct((G, L, d), jnp.float32),
        grid=(G // gb,),
        in_specs=[pl.BlockSpec((gb, L, d), lambda g: (g, 0, 0)),
                  pl.BlockSpec((gb, L, d), lambda g: (g, 0, 0)),
                  pl.BlockSpec((gb, n, d), lambda g: (g, 0, 0)),
                  pl.BlockSpec((gb, L, n), lambda g: (g, 0, 0)),
                  pl.BlockSpec((gb, L, n), lambda g: (g, 0, 0)),
                  pl.BlockSpec((gb, 1, d), lambda g: (g, 0, 0))],
        out_specs=pl.BlockSpec((gb, L, d), lambda g: (g, 0, 0)),
        scratch_shapes=[pltpu.VMEM((gb, n, d), jnp.float32)],
        compiler_params=pltpu.CompilerParams(dimension_semantics=("parallel",)),
    )(us.astype(jnp.float32), dts.astype(jnp.float32), AT.astype(jnp.float32),
      Bs.astype(jnp.float32), Cs.astype(jnp.float32), Ds.astype(jnp.float32))


# ----------------------------------------------------------------------------------
# Deterministic parameter init
# ----------------------------------------------------------------------------------
_KEY = [jax.random.PRNGKey(0)]


def _next_key():
    _KEY[0], k = jax.random.split(_KEY[0])
    return k


def randn(shape, scale=0.02):
    return (scale * jax.random.normal(_next_key(), shape)).astype(jnp.float32)


def init_double_conv(cin, cout):
    mid = cout
    return {"w1": randn((3, 3, cin, mid)),
            "bn1_g": jnp.ones((mid,), jnp.float32), "bn1_b": jnp.zeros((mid,), jnp.float32),
            "w2": randn((3, 3, mid, cout)),
            "bn2_g": jnp.ones((cout,), jnp.float32), "bn2_b": jnp.zeros((cout,), jnp.float32)}


def init_patch_embed(cin, embed_dim, patch):
    return {"w": randn((patch * patch * cin, embed_dim)),
            "b": jnp.zeros((embed_dim,), jnp.float32),
            "ln_g": jnp.ones((embed_dim,), jnp.float32),
            "ln_b": jnp.zeros((embed_dim,), jnp.float32),
            "patch": patch}


def init_rebuild(cin, embed_dim, patch):
    return {"w": randn((embed_dim, patch * patch * cin)),
            "b": jnp.zeros((patch * patch * cin,), jnp.float32),
            "patch": patch, "cin": cin}


def init_ss2d(d_model, d_state=16, expand=2):
    d_inner = expand * d_model
    dt_rank = math.ceil(d_model / 16)
    return {"in_proj": randn((d_model, 2 * d_inner)),
            "conv_w": randn((3, 3, d_inner)), "conv_b": jnp.zeros((d_inner,), jnp.float32),
            "x_proj": randn((4, d_inner, dt_rank + 2 * d_state)),
            "dt_w": randn((4, dt_rank, d_inner)),
            "dt_b": randn((4, d_inner)),
            "A_log": randn((4, d_inner, d_state), scale=0.1),
            "D": jnp.ones((4, d_inner), jnp.float32),
            "out_ln_g": jnp.ones((d_inner,), jnp.float32),
            "out_ln_b": jnp.zeros((d_inner,), jnp.float32),
            "out_proj": randn((d_inner, d_model)),
            "d_inner": d_inner, "d_state": d_state, "dt_rank": dt_rank}


def init_vss_block(d_model, d_state=16):
    return {"ln_g": jnp.ones((d_model,), jnp.float32),
            "ln_b": jnp.zeros((d_model,), jnp.float32),
            "ss2d": init_ss2d(d_model, d_state)}


def init_mamba_layer(cin, block_num, patch, residual=True, embed_dim=96, d_state=16):
    return {"embed": init_patch_embed(cin, embed_dim, patch),
            "blocks": [init_vss_block(embed_dim, d_state) for _ in range(block_num)],
            "rebuild": init_rebuild(cin, embed_dim, patch),
            "residual": residual}


def init_hybrid_block(cin, cout, mamba_blocks, patch):
    return {"conv": init_double_conv(cin, cin),
            "vss": init_mamba_layer(cin, mamba_blocks, patch),
            "mix_w": randn((2 * cin, cout))}


def init_hybrid_down(cin, cout, mamba_blocks, patch):
    return {"block": init_hybrid_block(cin, cout, mamba_blocks, patch)}


# ----------------------------------------------------------------------------------
# Forward functions (NHWC everywhere)
# ----------------------------------------------------------------------------------
def conv3x3_bn_relu(x, w, gamma, beta):
    # TODO(synk): im2col is materialized in JAX then fed to the tiled matmul; fusing the 9
    #             shifted accumulations into the kernel would cut ~8/9 of this HBM traffic.
    B, H, W, Cin = x.shape
    Cout = w.shape[-1]
    xp = jnp.pad(x, ((0, 0), (1, 1), (1, 1), (0, 0)))
    cols = [xp[:, dy:dy + H, dx:dx + W, :] for dy in range(3) for dx in range(3)]
    patches = jnp.concatenate(cols, axis=-1).reshape(B * H * W, 9 * Cin)
    wmat = w.reshape(9 * Cin, Cout)
    scale = gamma / jnp.sqrt(1.0 + 1e-5)   # BN eval-mode fold (running stats = 0/1)
    y = matmul_fused(patches, wmat, scale=scale, shift=beta, act="relu")
    return y.reshape(B, H, W, Cout)


def double_conv_fwd(p, x):
    x = conv3x3_bn_relu(x, p["w1"], p["bn1_g"], p["bn1_b"])
    x = conv3x3_bn_relu(x, p["w2"], p["bn2_g"], p["bn2_b"])
    return x


def patch_embed_fwd(p, x):
    B, H, W, C = x.shape
    ps = p["patch"]
    Hp, Wp = H // ps, W // ps
    xp = x.reshape(B, Hp, ps, Wp, ps, C).transpose(0, 1, 3, 2, 4, 5).reshape(B * Hp * Wp, ps * ps * C)
    y = matmul_fused(xp, p["w"], shift=p["b"])
    y = layernorm(y, p["ln_g"], p["ln_b"])
    return y.reshape(B, Hp, Wp, -1)


def rebuild_fwd(p, x):
    B, Hp, Wp, E = x.shape
    ps, cin = p["patch"], p["cin"]
    y = matmul_fused(x.reshape(B * Hp * Wp, E), p["w"], shift=p["b"])
    y = y.reshape(B, Hp, Wp, ps, ps, cin).transpose(0, 1, 3, 2, 4, 5).reshape(B, Hp * ps, Wp * ps, cin)
    return y


def depthwise_conv3x3(x, w, b):
    B, H, W, C = x.shape
    xp = jnp.pad(x, ((0, 0), (1, 1), (1, 1), (0, 0)))
    out = jnp.zeros_like(x)
    for dy in range(3):
        for dx in range(3):
            out = out + xp[:, dy:dy + H, dx:dx + W, :] * w[dy, dx]
    return out + b


def ss2d_fwd(p, x):
    B, H, W, C = x.shape
    d_inner, d_state, dt_rank = p["d_inner"], p["d_state"], p["dt_rank"]
    L = H * W

    xz = matmul_fused(x.reshape(B * L, C), p["in_proj"])               # (B*L, 2*d_inner)
    xpart, z = xz[:, :d_inner], xz[:, d_inner:]

    xc = xpart.reshape(B, H, W, d_inner)
    xc = depthwise_conv3x3(xc, p["conv_w"], p["conv_b"])
    xc = xc * jax.nn.sigmoid(xc)                                       # SiLU

    # 4 scan directions: row-major, col-major and their reverses
    # TODO(synk): the direction stack + reverses are still materialized in HBM; expressing
    #             them via BlockSpec index maps in bmm/scan would cut ~3x of this traffic.
    x_hw = xc.reshape(B, L, d_inner)
    x_wh = jnp.transpose(xc, (0, 2, 1, 3)).reshape(B, L, d_inner)
    xs = jnp.stack([x_hw, x_wh, x_hw[:, ::-1], x_wh[:, ::-1]], axis=1)  # (B, 4, L, d)

    xs_flat = jnp.transpose(xs, (1, 0, 2, 3)).reshape(4, B * L, d_inner)
    x_dbl = bmm(xs_flat, p["x_proj"])                                   # (4, B*L, r+2n)
    dts_r = x_dbl[..., :dt_rank]
    Bmat = x_dbl[..., dt_rank:dt_rank + d_state]
    Cmat = x_dbl[..., dt_rank + d_state:]
    # delta projection with delta_bias add + softplus folded into the bmm epilogue
    dts = bmm(dts_r, p["dt_w"], bias=p["dt_b"], act="softplus")         # (4, B*L, d)

    def to_bk(t, last):
        return jnp.transpose(t.reshape(4, B, L, last), (1, 0, 2, 3)).reshape(B * 4, L, last)

    us = xs.reshape(B * 4, L, d_inner)
    dts_bk = to_bk(dts, d_inner)
    Bs_bk = to_bk(Bmat, d_state)
    Cs_bk = to_bk(Cmat, d_state)
    A = -jnp.exp(p["A_log"])                                            # (4, d, n)
    AT = jnp.transpose(A, (0, 2, 1))                                    # (4, n, d)
    AT_bk = jnp.broadcast_to(AT[None], (B, 4, d_state, d_inner)).reshape(B * 4, d_state, d_inner)
    D_bk = jnp.broadcast_to(p["D"][None, :, None, :], (B, 4, 1, d_inner)).reshape(B * 4, 1, d_inner)

    ys = selective_scan(us, dts_bk, AT_bk, Bs_bk, Cs_bk, D_bk).reshape(B, 4, L, d_inner)

    def un_wh(y):  # (B, L, d) in (w, h) order -> (h, w) order
        return jnp.transpose(y.reshape(B, W, H, d_inner), (0, 2, 1, 3)).reshape(B, L, d_inner)

    y = ys[:, 0] + un_wh(ys[:, 1]) + ys[:, 2][:, ::-1] + un_wh(ys[:, 3][:, ::-1])
    y = layernorm(y.reshape(B * L, d_inner), p["out_ln_g"], p["out_ln_b"])
    y = y * (z * jax.nn.sigmoid(z))                                     # gate with SiLU(z)
    out = matmul_fused(y, p["out_proj"])
    return out.reshape(B, H, W, C)


def vss_block_fwd(p, x):
    B, H, W, C = x.shape
    xn = layernorm(x.reshape(B * H * W, C), p["ln_g"], p["ln_b"]).reshape(B, H, W, C)
    return x + ss2d_fwd(p["ss2d"], xn)          # drop_path rate 0 -> identity


def mamba_layer_fwd(p, x):
    y = patch_embed_fwd(p["embed"], x)
    for bp in p["blocks"]:
        y = vss_block_fwd(bp, y)
    y = rebuild_fwd(p["rebuild"], y)
    return x + y if p["residual"] else y


def hybrid_block_fwd(p, x):
    a = double_conv_fwd(p["conv"], x)
    b = mamba_layer_fwd(p["vss"], x)
    y = jnp.concatenate([a, b], axis=-1)
    B, H, W, C2 = y.shape
    y = matmul_fused(y.reshape(B * H * W, C2), p["mix_w"])   # 1x1 mix conv, no bias
    return y.reshape(B, H, W, -1)


def maxpool2(x):
    B, H, W, C = x.shape
    return x.reshape(B, H // 2, 2, W // 2, 2, C).max(axis=(2, 4))


def mamba_hybrid_down_fwd(p, x):
    return hybrid_block_fwd(p["block"], maxpool2(x))


# ----------------------------------------------------------------------------------
if __name__ == "__main__":
    # MambaHybridDown(in_channels=4, out_channels=8, mamba_blocks=1, patch_size=2)
    # on an NCHW input of shape (2, 4, 16, 16).
    Bn, Cin, Hs, Ws = 2, 4, 16, 16
    Cout, mamba_blocks, patch = 8, 1, 2

    params = init_hybrid_down(Cin, Cout, mamba_blocks, patch)

    x_nchw = jax.random.normal(jax.random.PRNGKey(0), (Bn, Cin, Hs, Ws), jnp.float32)
    x_nhwc = jnp.transpose(x_nchw, (0, 2, 3, 1))

    fwd = jax.jit(lambda x: mamba_hybrid_down_fwd(params, x))
    y_nhwc = fwd(x_nhwc)
    y = jnp.transpose(y_nhwc, (0, 3, 1, 2))          # back to NCHW like the PyTorch module
    jax.block_until_ready(y)

    assert y.shape == (Bn, Cout, Hs // 2, Ws // 2), y.shape
    assert bool(jnp.all(jnp.isfinite(y)))
    print("KERNEL_OK")
</pallas_src>

<mosaic_0001>
module attributes {stable_mosaic.version = 11 : i64} {
  func.func @_matmul_kernel(%arg0: i32, %arg1: i32, %arg2: i32, %arg3: memref<128x128xbf16, #tpu.memory_space<vmem>>, %arg4: memref<128x128xbf16, #tpu.memory_space<vmem>>, %arg5: memref<1x128xf32, #tpu.memory_space<vmem>>, %arg6: memref<1x128xf32, #tpu.memory_space<vmem>>, %arg7: memref<128x128xf32, #tpu.memory_space<vmem>>, %arg8: memref<128x128xf32, #tpu.memory_space<vmem>>) attributes {dimension_semantics = [#tpu.dimension_semantics<parallel>, #tpu.dimension_semantics<parallel>, #tpu.dimension_semantics<arbitrary>], iteration_bounds = array<i64: 1, 1, 1>, scalar_prefetch = 0 : i64, scratch_operands = 1 : i64, tpu.core_type = #tpu.core_type<tc>, window_params = [{transform_indices = @transform_0, window_bounds = array<i64: 128, 128>}, {transform_indices = @transform_1, window_bounds = array<i64: 128, 128>}, {transform_indices = @transform_2, window_bounds = array<i64: 1, 128>}, {transform_indices = @transform_3, window_bounds = array<i64: 1, 128>}, {transform_indices = @transform_4, window_bounds = array<i64: 128, 128>}]} {
    %c0_i32 = arith.constant 0 : i32
    %0 = arith.cmpi eq, %arg2, %c0_i32 : i32
    %1 = arith.extui %0 : i1 to i32
    %c0_i32_0 = arith.constant 0 : i32
    %2 = arith.cmpi ne, %1, %c0_i32_0 : i32
    scf.if %2 {
      %cst_10 = arith.constant 0.000000e+00 : f32
      %12 = vector.broadcast %cst_10 : f32 to vector<128x128xf32>
      %c0_11 = arith.constant 0 : index
      %c0_12 = arith.constant 0 : index
      %13 = vector.load %arg8[%c0_11, %c0_12] : memref<128x128xf32, #tpu.memory_space<vmem>>, vector<128x128xf32>
      tpu.vector_store %arg8[%c0_11, %c0_12], %12 {strides = array<i32>} : memref<128x128xf32, #tpu.memory_space<vmem>>, vector<128x128xf32>,
    } else {
    }
    %c0 = arith.constant 0 : index
    %c0_1 = arith.constant 0 : index
    %3 = vector.load %arg8[%c0, %c0_1] : memref<128x128xf32, #tpu.memory_space<vmem>>, vector<128x128xf32>
    %c0_2 = arith.constant 0 : index
    %c0_3 = arith.constant 0 : index
    %4 = vector.load %arg3[%c0_2, %c0_3] : memref<128x128xbf16, #tpu.memory_space<vmem>>, vector<128x128xbf16>
    %c0_4 = arith.constant 0 : index
    %c0_5 = arith.constant 0 : index
    %5 = vector.load %arg4[%c0_4, %c0_5] : memref<128x128xbf16, #tpu.memory_space<vmem>>, vector<128x128xbf16>
    %cst = arith.constant dense<0.000000e+00> : vector<128x128xf32>
    %6 = tpu.matmul %4, %5, %cst {dimension_numbers = #tpu.dot_dimension_numbers<[1], [0], [0], [1], [0, 0, 1, 1], [], []>} : vector<128x128xbf16>, vector<128x128xbf16>, vector<128x128xf32> -> vector<128x128xf32>
    %7 = arith.addf %3, %6 : vector<128x128xf32>
    %c0_6 = arith.constant 0 : index
    %c0_7 = arith.constant 0 : index
    %8 = vector.load %arg8[%c0_6, %c0_7] : memref<128x128xf32, #tpu.memory_space<vmem>>, vector<128x128xf32>
    tpu.vector_store %arg8[%c0_6, %c0_7], %7 {strides = array<i32>} : memref<128x128xf32, #tpu.memory_space<vmem>>, vector<128x128xf32>,
    %c0_i32_8 = arith.constant 0 : i32
    %9 = arith.cmpi eq, %arg2, %c0_i32_8 : i32
    %10 = arith.extui %9 : i1 to i32
    %c0_i32_9 = arith.constant 0 : i32
    %11 = arith.cmpi ne, %10, %c0_i32_9 : i32
    scf.if %11 {
      %c0_10 = arith.constant 0 : index
      %c0_11 = arith.constant 0 : index
      %12 = vector.load %arg8[%c0_10, %c0_11] : memref<128x128xf32, #tpu.memory_space<vmem>>, vector<128x128xf32>
      %c0_12 = arith.constant 0 : index
      %c0_13 = arith.constant 0 : index
      %13 = vector.load %arg5[%c0_12, %c0_13] : memref<1x128xf32, #tpu.memory_space<vmem>>, vector<1x128xf32>
      %14 = vector.broadcast %13 : vector<1x128xf32> to vector<128x128xf32>
      %15 = arith.mulf %12, %14 : vector<128x128xf32>
      %c0_14 = arith.constant 0 : index
      %c0_15 = arith.constant 0 : index
      %16 = vector.load %arg6[%c0_14, %c0_15] : memref<1x128xf32, #tpu.memory_space<vmem>>, vector<1x128xf32>
      %17 = vector.broadcast %16 : vector<1x128xf32> to vector<128x128xf32>
      %18 = arith.addf %15, %17 : vector<128x128xf32>
      %cst_16 = arith.constant 0.000000e+00 : f32
      %19 = vector.broadcast %cst_16 : f32 to vector<128x128xf32>
      %20 = arith.maximumf %18, %19 : vector<128x128xf32>
      %c0_17 = arith.constant 0 : index
      %c0_18 = arith.constant 0 : index
      %21 = vector.load %arg7[%c0_17, %c0_18] : memref<128x128xf32, #tpu.memory_space<vmem>>, vector<128x128xf32>
      tpu.vector_store %arg7[%c0_17, %c0_18], %20 {strides = array<i32>} : memref<128x128xf32, #tpu.memory_space<vmem>>, vector<128x128xf32>,
    } else {
    }
    return
  }
  func.func @transform_0(%arg0: i32, %arg1: i32, %arg2: i32) -> (i32, i32) {
    %c0_i32 = arith.constant 0 : i32
    return %arg0, %arg2 : i32, i32
  }
  func.func @transform_1(%arg0: i32, %arg1: i32, %arg2: i32) -> (i32, i32) {
    %c0_i32 = arith.constant 0 : i32
    return %arg2, %arg1 : i32, i32
  }
  func.func @transform_2(%arg0: i32, %arg1: i32, %arg2: i32) -> (i32, i32) {
    %c0_i32 = arith.constant 0 : i32
    %c0_i32_0 = arith.constant 0 : i32
    return %c0_i32, %arg1 : i32, i32
  }
  func.func @transform_3(%arg0: i32, %arg1: i32, %arg2: i32) -> (i32, i32) {
    %c0_i32 = arith.constant 0 : i32
    %c0_i32_0 = arith.constant 0 : i32
    return %c0_i32, %arg1 : i32, i32
  }
  func.func @transform_4(%arg0: i32, %arg1: i32, %arg2: i32) -> (i32, i32) {
    %c0_i32 = arith.constant 0 : i32
    return %arg0, %arg1 : i32, i32
  }
}

module attributes {stable_mosaic.version = 11 : i64} {
  func.func @_layernorm_kernel(%arg0: i32, %arg1: memref<32x96xf32, #tpu.memory_space<vmem>>, %arg2: memref<1x96xf32, #tpu.memory_space<vmem>>, %arg3: memref<1x96xf32, #tpu.memory_space<vmem>>, %arg4: memref<32x96xf32, #tpu.memory_space<vmem>>) attributes {dimension_semantics = [#tpu.dimension_semantics<parallel>], iteration_bounds = array<i64: 1>, scalar_prefetch = 0 : i64, scratch_operands = 0 : i64, tpu.core_type = #tpu.core_type<tc>, window_params = [{transform_indices = @transform_0, window_bounds = array<i64: 32, 96>}, {pipeline_mode = #tpu.pipeline_mode<synchronous>, transform_indices = @transform_1, window_bounds = array<i64: 1, 96>}, {pipeline_mode = #tpu.pipeline_mode<synchronous>, transform_indices = @transform_2, window_bounds = array<i64: 1, 96>}, {transform_indices = @transform_3, window_bounds = array<i64: 32, 96>}]} {
    %c0 = arith.constant 0 : index
    %c0_0 = arith.constant 0 : index
    %0 = vector.load %arg1[%c0, %c0_0] : memref<32x96xf32, #tpu.memory_space<vmem>>, vector<32x96xf32>
    %cst = arith.constant dense<0.000000e+00> : vector<32xf32>
    %1 = vector.multi_reduction <add>, %0, %cst [1] : vector<32x96xf32> to vector<32xf32>
    %2 = vector.shape_cast %1 : vector<32xf32> to vector<32x1xf32>
    %cst_1 = arith.constant 9.600000e+01 : f32
    %3 = vector.broadcast %cst_1 : f32 to vector<32x1xf32>
    %4 = arith.divf %2, %3 : vector<32x1xf32>
    %5 = vector.broadcast %4 : vector<32x1xf32> to vector<32x96xf32>
    %6 = arith.subf %0, %5 : vector<32x96xf32>
    %7 = arith.mulf %6, %6 : vector<32x96xf32>
    %cst_2 = arith.constant dense<0.000000e+00> : vector<32xf32>
    %8 = vector.multi_reduction <add>, %7, %cst_2 [1] : vector<32x96xf32> to vector<32xf32>
    %9 = vector.shape_cast %8 : vector<32xf32> to vector<32x1xf32>
    %cst_3 = arith.constant 9.600000e+01 : f32
    %10 = vector.broadcast %cst_3 : f32 to vector<32x1xf32>
    %11 = arith.divf %9, %10 : vector<32x1xf32>
    %cst_4 = arith.constant 9.99999974E-6 : f32
    %12 = vector.broadcast %cst_4 : f32 to vector<32x1xf32>
    %13 = arith.addf %11, %12 : vector<32x1xf32>
    %14 = math.rsqrt %13 : vector<32x1xf32>
    %15 = vector.broadcast %14 : vector<32x1xf32> to vector<32x96xf32>
    %16 = arith.mulf %6, %15 : vector<32x96xf32>
    %c0_5 = arith.constant 0 : index
    %c0_6 = arith.constant 0 : index
    %17 = vector.load %arg2[%c0_5, %c0_6] : memref<1x96xf32, #tpu.memory_space<vmem>>, vector<1x96xf32>
    %18 = vector.broadcast %17 : vector<1x96xf32> to vector<32x96xf32>
    %19 = arith.mulf %16, %18 : vector<32x96xf32>
    %c0_7 = arith.constant 0 : index
    %c0_8 = arith.constant 0 : index
    %20 = vector.load %arg3[%c0_7, %c0_8] : memref<1x96xf32, #tpu.memory_space<vmem>>, vector<1x96xf32>
    %21 = vector.broadcast %20 : vector<1x96xf32> to vector<32x96xf32>
    %22 = arith.addf %19, %21 : vector<32x96xf32>
    %c0_9 = arith.constant 0 : index
    %c0_10 = arith.constant 0 : index
    %23 = vector.load %arg4[%c0_9, %c0_10] : memref<32x96xf32, #tpu.memory_space<vmem>>, vector<32x96xf32>
    tpu.vector_store %arg4[%c0_9, %c0_10], %22 {strides = array<i32>} : memref<32x96xf32, #tpu.memory_space<vmem>>, vector<32x96xf32>,
    return
  }
  func.func @transform_0(%arg0: i32) -> (i32, i32) {
    %c0_i32 = arith.constant 0 : i32
    %c0_i32_0 = arith.constant 0 : i32
    return %arg0, %c0_i32 : i32, i32
  }
  func.func @transform_1(%arg0: i32) -> (i32, i32) {
    %c0_i32 = arith.constant 0 : i32
    %c0_i32_0 = arith.constant 0 : i32
    %c0_i32_1 = arith.constant 0 : i32
    return %c0_i32, %c0_i32_0 : i32, i32
  }
  func.func @transform_2(%arg0: i32) -> (i32, i32) {
    %c0_i32 = arith.constant 0 : i32
    %c0_i32_0 = arith.constant 0 : i32
    %c0_i32_1 = arith.constant 0 : i32
    return %c0_i32, %c0_i32_0 : i32, i32
  }
  func.func @transform_3(%arg0: i32) -> (i32, i32) {
    %c0_i32 = arith.constant 0 : i32
    %c0_i32_0 = arith.constant 0 : i32
    return %arg0, %c0_i32 : i32, i32
  }
}

module attributes {stable_mosaic.version = 11 : i64} {
  func.func @_matmul_kernel(%arg0: i32, %arg1: i32, %arg2: i32, %arg3: memref<32x128xbf16, #tpu.memory_space<vmem>>, %arg4: memref<128x128xbf16, #tpu.memory_space<vmem>>, %arg5: memref<1x128xf32, #tpu.memory_space<vmem>>, %arg6: memref<1x128xf32, #tpu.memory_space<vmem>>, %arg7: memref<32x128xf32, #tpu.memory_space<vmem>>, %arg8: memref<32x128xf32, #tpu.memory_space<vmem>>) attributes {dimension_semantics = [#tpu.dimension_semantics<parallel>, #tpu.dimension_semantics<parallel>, #tpu.dimension_semantics<arbitrary>], iteration_bounds = array<i64: 1, 1, 1>, scalar_prefetch = 0 : i64, scratch_operands = 1 : i64, tpu.core_type = #tpu.core_type<tc>, window_params = [{transform_indices = @transform_0, window_bounds = array<i64: 32, 128>}, {transform_indices = @transform_1, window_bounds = array<i64: 128, 128>}, {transform_indices = @transform_2, window_bounds = array<i64: 1, 128>}, {transform_indices = @transform_3, window_bounds = array<i64: 1, 128>}, {transform_indices = @transform_4, window_bounds = array<i64: 32, 128>}]} {
    %c0_i32 = arith.constant 0 : i32
    %0 = arith.cmpi eq, %arg2, %c0_i32 : i32
    %1 = arith.extui %0 : i1 to i32
    %c0_i32_0 = arith.constant 0 : i32
    %2 = arith.cmpi ne, %1, %c0_i32_0 : i32
    scf.if %2 {
      %cst_10 = arith.constant 0.000000e+00 : f32
      %12 = vector.broadcast %cst_10 : f32 to vector<32x128xf32>
      %c0_11 = arith.constant 0 : index
      %c0_12 = arith.constant 0 : index
      %13 = vector.load %arg8[%c0_11, %c0_12] : memref<32x128xf32, #tpu.memory_space<vmem>>, vector<32x128xf32>
      tpu.vector_store %arg8[%c0_11, %c0_12], %12 {strides = array<i32>} : memref<32x128xf32, #tpu.memory_space<vmem>>, vector<32x128xf32>,
    } else {
    }
    %c0 = arith.constant 0 : index
    %c0_1 = arith.constant 0 : index
    %3 = vector.load %arg8[%c0, %c0_1] : memref<32x128xf32, #tpu.memory_space<vmem>>, vector<32x128xf32>
    %c0_2 = arith.constant 0 : index
    %c0_3 = arith.constant 0 : index
    %4 = vector.load %arg3[%c0_2, %c0_3] : memref<32x128xbf16, #tpu.memory_space<vmem>>, vector<32x128xbf16>
    %c0_4 = arith.constant 0 : index
    %c0_5 = arith.constant 0 : index
    %5 = vector.load %arg4[%c0_4, %c0_5] : memref<128x128xbf16, #tpu.memory_space<vmem>>, vector<128x128xbf16>
    %cst = arith.constant dense<0.000000e+00> : vector<32x128xf32>
    %6 = tpu.matmul %4, %5, %cst {dimension_numbers = #tpu.dot_dimension_numbers<[1], [0], [0], [1], [0, 0, 1, 1], [], []>} : vector<32x128xbf16>, vector<128x128xbf16>, vector<32x128xf32> -> vector<32x128xf32>
    %7 = arith.addf %3, %6 : vector<32x128xf32>
    %c0_6 = arith.constant 0 : index
    %c0_7 = arith.constant 0 : index
    %8 = vector.load %arg8[%c0_6, %c0_7] : memref<32x128xf32, #tpu.memory_space<vmem>>, vector<32x128xf32>
    tpu.vector_store %arg8[%c0_6, %c0_7], %7 {strides = array<i32>} : memref<32x128xf32, #tpu.memory_space<vmem>>, vector<32x128xf32>,
    %c0_i32_8 = arith.constant 0 : i32
    %9 = arith.cmpi eq, %arg2, %c0_i32_8 : i32
    %10 = arith.extui %9 : i1 to i32
    %c0_i32_9 = arith.constant 0 : i32
    %11 = arith.cmpi ne, %10, %c0_i32_9 : i32
    scf.if %11 {
      %c0_10 = arith.constant 0 : index
      %c0_11 = arith.constant 0 : index
      %12 = vector.load %arg8[%c0_10, %c0_11] : memref<32x128xf32, #tpu.memory_space<vmem>>, vector<32x128xf32>
      %c0_12 = arith.constant 0 : index
      %c0_13 = arith.constant 0 : index
      %13 = vector.load %arg5[%c0_12, %c0_13] : memref<1x128xf32, #tpu.memory_space<vmem>>, vector<1x128xf32>
      %14 = vector.broadcast %13 : vector<1x128xf32> to vector<32x128xf32>
      %15 = arith.mulf %12, %14 : vector<32x128xf32>
      %c0_14 = arith.constant 0 : index
      %c0_15 = arith.constant 0 : index
      %16 = vector.load %arg6[%c0_14, %c0_15] : memref<1x128xf32, #tpu.memory_space<vmem>>, vector<1x128xf32>
      %17 = vector.broadcast %16 : vector<1x128xf32> to vector<32x128xf32>
      %18 = arith.addf %15, %17 : vector<32x128xf32>
      %c0_16 = arith.constant 0 : index
      %c0_17 = arith.constant 0 : index
      %19 = vector.load %arg7[%c0_16, %c0_17] : memref<32x128xf32, #tpu.memory_space<vmem>>, vector<32x128xf32>
      tpu.vector_store %arg7[%c0_16, %c0_17], %18 {strides = array<i32>} : memref<32x128xf32, #tpu.memory_space<vmem>>, vector<32x128xf32>,
    } else {
    }
    return
  }
  func.func @transform_0(%arg0: i32, %arg1: i32, %arg2: i32) -> (i32, i32) {
    %c0_i32 = arith.constant 0 : i32
    return %arg0, %arg2 : i32, i32
  }
  func.func @transform_1(%arg0: i32, %arg1: i32, %arg2: i32) -> (i32, i32) {
    %c0_i32 = arith.constant 0 : i32
    return %arg2, %arg1 : i32, i32
  }
  func.func @transform_2(%arg0: i32, %arg1: i32, %arg2: i32) -> (i32, i32) {
    %c0_i32 = arith.constant 0 : i32
    %c0_i32_0 = arith.constant 0 : i32
    return %c0_i32, %arg1 : i32, i32
  }
  func.func @transform_3(%arg0: i32, %arg1: i32, %arg2: i32) -> (i32, i32) {
    %c0_i32 = arith.constant 0 : i32
    %c0_i32_0 = arith.constant 0 : i32
    return %c0_i32, %arg1 : i32, i32
  }
  func.func @transform_4(%arg0: i32, %arg1: i32, %arg2: i32) -> (i32, i32) {
    %c0_i32 = arith.constant 0 : i32
    return %arg0, %arg1 : i32, i32
  }
}

module attributes {stable_mosaic.version = 11 : i64} {
  func.func @_matmul_kernel(%arg0: i32, %arg1: i32, %arg2: i32, %arg3: memref<32x128xbf16, #tpu.memory_space<vmem>>, %arg4: memref<128x384xbf16, #tpu.memory_space<vmem>>, %arg5: memref<1x384xf32, #tpu.memory_space<vmem>>, %arg6: memref<1x384xf32, #tpu.memory_space<vmem>>, %arg7: memref<32x384xf32, #tpu.memory_space<vmem>>, %arg8: memref<32x384xf32, #tpu.memory_space<vmem>>) attributes {dimension_semantics = [#tpu.dimension_semantics<parallel>, #tpu.dimension_semantics<parallel>, #tpu.dimension_semantics<arbitrary>], iteration_bounds = array<i64: 1, 1, 1>, scalar_prefetch = 0 : i64, scratch_operands = 1 : i64, tpu.core_type = #tpu.core_type<tc>, window_params = [{transform_indices = @transform_0, window_bounds = array<i64: 32, 128>}, {transform_indices = @transform_1, window_bounds = array<i64: 128, 384>}, {transform_indices = @transform_2, window_bounds = array<i64: 1, 384>}, {transform_indices = @transform_3, window_bounds = array<i64: 1, 384>}, {transform_indices = @transform_4, window_bounds = array<i64: 32, 384>}]} {
    %c0_i32 = arith.constant 0 : i32
    %0 = arith.cmpi eq, %arg2, %c0_i32 : i32
    %1 = arith.extui %0 : i1 to i32
    %c0_i32_0 = arith.constant 0 : i32
    %2 = arith.cmpi ne, %1, %c0_i32_0 : i32
    scf.if %2 {
      %cst_10 = arith.constant 0.000000e+00 : f32
      %12 = vector.broadcast %cst_10 : f32 to vector<32x384xf32>
      %c0_11 = arith.constant 0 : index
      %c0_12 = arith.constant 0 : index
      %13 = vector.load %arg8[%c0_11, %c0_12] : memref<32x384xf32, #tpu.memory_space<vmem>>, vector<32x384xf32>
      tpu.vector_store %arg8[%c0_11, %c0_12], %12 {strides = array<i32>} : memref<32x384xf32, #tpu.memory_space<vmem>>, vector<32x384xf32>,
    } else {
    }
    %c0 = arith.constant 0 : index
    %c0_1 = arith.constant 0 : index
    %3 = vector.load %arg8[%c0, %c0_1] : memref<32x384xf32, #tpu.memory_space<vmem>>, vector<32x384xf32>
    %c0_2 = arith.constant 0 : index
    %c0_3 = arith.constant 0 : index
    %4 = vector.load %arg3[%c0_2, %c0_3] : memref<32x128xbf16, #tpu.memory_space<vmem>>, vector<32x128xbf16>
    %c0_4 = arith.constant 0 : index
    %c0_5 = arith.constant 0 : index
    %5 = vector.load %arg4[%c0_4, %c0_5] : memref<128x384xbf16, #tpu.memory_space<vmem>>, vector<128x384xbf16>
    %cst = arith.constant dense<0.000000e+00> : vector<32x384xf32>
    %6 = tpu.matmul %4, %5, %cst {dimension_numbers = #tpu.dot_dimension_numbers<[1], [0], [0], [1], [0, 0, 1, 1], [], []>} : vector<32x128xbf16>, vector<128x384xbf16>, vector<32x384xf32> -> vector<32x384xf32>
    %7 = arith.addf %3, %6 : vector<32x384xf32>
    %c0_6 = arith.constant 0 : index
    %c0_7 = arith.constant 0 : index
    %8 = vector.load %arg8[%c0_6, %c0_7] : memref<32x384xf32, #tpu.memory_space<vmem>>, vector<32x384xf32>
    tpu.vector_store %arg8[%c0_6, %c0_7], %7 {strides = array<i32>} : memref<32x384xf32, #tpu.memory_space<vmem>>, vector<32x384xf32>,
    %c0_i32_8 = arith.constant 0 : i32
    %9 = arith.cmpi eq, %arg2, %c0_i32_8 : i32
    %10 = arith.extui %9 : i1 to i32
    %c0_i32_9 = arith.constant 0 : i32
    %11 = arith.cmpi ne, %10, %c0_i32_9 : i32
    scf.if %11 {
      %c0_10 = arith.constant 0 : index
      %c0_11 = arith.constant 0 : index
      %12 = vector.load %arg8[%c0_10, %c0_11] : memref<32x384xf32, #tpu.memory_space<vmem>>, vector<32x384xf32>
      %c0_12 = arith.constant 0 : index
      %c0_13 = arith.constant 0 : index
      %13 = vector.load %arg5[%c0_12, %c0_13] : memref<1x384xf32, #tpu.memory_space<vmem>>, vector<1x384xf32>
      %14 = vector.broadcast %13 : vector<1x384xf32> to vector<32x384xf32>
      %15 = arith.mulf %12, %14 : vector<32x384xf32>
      %c0_14 = arith.constant 0 : index
      %c0_15 = arith.constant 0 : index
      %16 = vector.load %arg6[%c0_14, %c0_15] : memref<1x384xf32, #tpu.memory_space<vmem>>, vector<1x384xf32>
      %17 = vector.broadcast %16 : vector<1x384xf32> to vector<32x384xf32>
      %18 = arith.addf %15, %17 : vector<32x384xf32>
      %c0_16 = arith.constant 0 : index
      %c0_17 = arith.constant 0 : index
      %19 = vector.load %arg7[%c0_16, %c0_17] : memref<32x384xf32, #tpu.memory_space<vmem>>, vector<32x384xf32>
      tpu.vector_store %arg7[%c0_16, %c0_17], %18 {strides = array<i32>} : memref<32x384xf32, #tpu.memory_space<vmem>>, vector<32x384xf32>,
    } else {
    }
    return
  }
  func.func @transform_0(%arg0: i32, %arg1: i32, %arg2: i32) -> (i32, i32) {
    %c0_i32 = arith.constant 0 : i32
    return %arg0, %arg2 : i32, i32
  }
  func.func @transform_1(%arg0: i32, %arg1: i32, %arg2: i32) -> (i32, i32) {
    %c0_i32 = arith.constant 0 : i32
    return %arg2, %arg1 : i32, i32
  }
  func.func @transform_2(%arg0: i32, %arg1: i32, %arg2: i32) -> (i32, i32) {
    %c0_i32 = arith.constant 0 : i32
    %c0_i32_0 = arith.constant 0 : i32
    return %c0_i32, %arg1 : i32, i32
  }
  func.func @transform_3(%arg0: i32, %arg1: i32, %arg2: i32) -> (i32, i32) {
    %c0_i32 = arith.constant 0 : i32
    %c0_i32_0 = arith.constant 0 : i32
    return %c0_i32, %arg1 : i32, i32
  }
  func.func @transform_4(%arg0: i32, %arg1: i32, %arg2: i32) -> (i32, i32) {
    %c0_i32 = arith.constant 0 : i32
    return %arg0, %arg1 : i32, i32
  }
}

module attributes {stable_mosaic.version = 11 : i64} {
  func.func @_bmm_kernel(%arg0: i32, %arg1: i32, %arg2: memref<1x32x256xbf16, #tpu.memory_space<vmem>>, %arg3: memref<1x256x128xbf16, #tpu.memory_space<vmem>>, %arg4: memref<1x1x128xf32, #tpu.memory_space<vmem>>, %arg5: memref<1x32x128xf32, #tpu.memory_space<vmem>>) attributes {dimension_semantics = [#tpu.dimension_semantics<parallel>, #tpu.dimension_semantics<parallel>], iteration_bounds = array<i64: 4, 1>, scalar_prefetch = 0 : i64, scratch_operands = 0 : i64, tpu.core_type = #tpu.core_type<tc>, window_params = [{transform_indices = @transform_0, window_bounds = array<i64: 1, 32, 256>}, {transform_indices = @transform_1, window_bounds = array<i64: 1, 256, 128>}, {transform_indices = @transform_2, window_bounds = array<i64: 1, 1, 128>}, {transform_indices = @transform_3, window_bounds = array<i64: 1, 32, 128>}]} {
    %c0 = arith.constant 0 : index
    %c0_0 = arith.constant 0 : index
    %c0_1 = arith.constant 0 : index
    %0 = vector.load %arg2[%c0, %c0_0, %c0_1] : memref<1x32x256xbf16, #tpu.memory_space<vmem>>, vector<1x32x256xbf16>
    %1 = vector.shape_cast %0 : vector<1x32x256xbf16> to vector<32x256xbf16>
    %c0_2 = arith.constant 0 : index
    %c0_3 = arith.constant 0 : index
    %c0_4 = arith.constant 0 : index
    %2 = vector.load %arg3[%c0_2, %c0_3, %c0_4] : memref<1x256x128xbf16, #tpu.memory_space<vmem>>, vector<1x256x128xbf16>
    %3 = vector.shape_cast %2 : vector<1x256x128xbf16> to vector<256x128xbf16>
    %cst = arith.constant dense<0.000000e+00> : vector<32x128xf32>
    %4 = tpu.matmul %1, %3, %cst {dimension_numbers = #tpu.dot_dimension_numbers<[1], [0], [0], [1], [0, 0, 1, 1], [], []>} : vector<32x256xbf16>, vector<256x128xbf16>, vector<32x128xf32> -> vector<32x128xf32>
    %c0_5 = arith.constant 0 : index
    %c0_6 = arith.constant 0 : index
    %c0_7 = arith.constant 0 : index
    %5 = vector.load %arg4[%c0_5, %c0_6, %c0_7] : memref<1x1x128xf32, #tpu.memory_space<vmem>>, vector<1x1x128xf32>
    %6 = vector.shape_cast %5 : vector<1x1x128xf32> to vector<1x128xf32>
    %7 = vector.broadcast %6 : vector<1x128xf32> to vector<32x128xf32>
    %8 = arith.addf %4, %7 : vector<32x128xf32>
    %c0_8 = arith.constant 0 : index
    %c0_9 = arith.constant 0 : index
    %c0_10 = arith.constant 0 : index
    %9 = vector.load %arg5[%c0_8, %c0_9, %c0_10] : memref<1x32x128xf32, #tpu.memory_space<vmem>>, vector<1x32x128xf32>
    %10 = vector.shape_cast %9 : vector<1x32x128xf32> to vector<32x128xf32>
    %11 = vector.shape_cast %8 : vector<32x128xf32> to vector<1x32x128xf32>
    tpu.vector_store %arg5[%c0_8, %c0_9, %c0_10], %11 {strides = array<i32>} : memref<1x32x128xf32, #tpu.memory_space<vmem>>, vector<1x32x128xf32>,
    return
  }
  func.func @transform_0(%arg0: i32, %arg1: i32) -> (i32, i32, i32) {
    %c0_i32 = arith.constant 0 : i32
    %c0_i32_0 = arith.constant 0 : i32
    return %arg0, %arg1, %c0_i32 : i32, i32, i32
  }
  func.func @transform_1(%arg0: i32, %arg1: i32) -> (i32, i32, i32) {
    %c0_i32 = arith.constant 0 : i32
    %c0_i32_0 = arith.constant 0 : i32
    %c0_i32_1 = arith.constant 0 : i32
    return %arg0, %c0_i32, %c0_i32_0 : i32, i32, i32
  }
  func.func @transform_2(%arg0: i32, %arg1: i32) -> (i32, i32, i32) {
    %c0_i32 = arith.constant 0 : i32
    %c0_i32_0 = arith.constant 0 : i32
    %c0_i32_1 = arith.constant 0 : i32
    return %arg0, %c0_i32, %c0_i32_0 : i32, i32, i32
  }
  func.func @transform_3(%arg0: i32, %arg1: i32) -> (i32, i32, i32) {
    %c0_i32 = arith.constant 0 : i32
    %c0_i32_0 = arith.constant 0 : i32
    return %arg0, %arg1, %c0_i32 : i32, i32, i32
  }
}

module attributes {stable_mosaic.version = 11 : i64} {
  func.func @_bmm_kernel(%arg0: i32, %arg1: i32, %arg2: memref<1x32x128xbf16, #tpu.memory_space<vmem>>, %arg3: memref<1x128x256xbf16, #tpu.memory_space<vmem>>, %arg4: memref<1x1x256xf32, #tpu.memory_space<vmem>>, %arg5: memref<1x32x256xf32, #tpu.memory_space<vmem>>) attributes {dimension_semantics = [#tpu.dimension_semantics<parallel>, #tpu.dimension_semantics<parallel>], iteration_bounds = array<i64: 4, 1>, scalar_prefetch = 0 : i64, scratch_operands = 0 : i64, tpu.core_type = #tpu.core_type<tc>, window_params = [{transform_indices = @transform_0, window_bounds = array<i64: 1, 32, 128>}, {transform_indices = @transform_1, window_bounds = array<i64: 1, 128, 256>}, {transform_indices = @transform_2, window_bounds = array<i64: 1, 1, 256>}, {transform_indices = @transform_3, window_bounds = array<i64: 1, 32, 256>}]} {
    %c0 = arith.constant 0 : index
    %c0_0 = arith.constant 0 : index
    %c0_1 = arith.constant 0 : index
    %0 = vector.load %arg2[%c0, %c0_0, %c0_1] : memref<1x32x128xbf16, #tpu.memory_space<vmem>>, vector<1x32x128xbf16>
    %1 = vector.shape_cast %0 : vector<1x32x128xbf16> to vector<32x128xbf16>
    %c0_2 = arith.constant 0 : index
    %c0_3 = arith.constant 0 : index
    %c0_4 = arith.constant 0 : index
    %2 = vector.load %arg3[%c0_2, %c0_3, %c0_4] : memref<1x128x256xbf16, #tpu.memory_space<vmem>>, vector<1x128x256xbf16>
    %3 = vector.shape_cast %2 : vector<1x128x256xbf16> to vector<128x256xbf16>
    %cst = arith.constant dense<0.000000e+00> : vector<32x256xf32>
    %4 = tpu.matmul %1, %3, %cst {dimension_numbers = #tpu.dot_dimension_numbers<[1], [0], [0], [1], [0, 0, 1, 1], [], []>} : vector<32x128xbf16>, vector<128x256xbf16>, vector<32x256xf32> -> vector<32x256xf32>
    %c0_5 = arith.constant 0 : index
    %c0_6 = arith.constant 0 : index
    %c0_7 = arith.constant 0 : index
    %5 = vector.load %arg4[%c0_5, %c0_6, %c0_7] : memref<1x1x256xf32, #tpu.memory_space<vmem>>, vector<1x1x256xf32>
    %6 = vector.shape_cast %5 : vector<1x1x256xf32> to vector<1x256xf32>
    %7 = vector.broadcast %6 : vector<1x256xf32> to vector<32x256xf32>
    %8 = arith.addf %4, %7 : vector<32x256xf32>
    %cst_8 = arith.constant 2.000000e+01 : f32
    %9 = vector.broadcast %cst_8 : f32 to vector<32x256xf32>
    %10 = arith.cmpf ogt, %8, %9 : vector<32x256xf32>
    %cst_9 = arith.constant 2.000000e+01 : f32
    %11 = vector.broadcast %cst_9 : f32 to vector<32x256xf32>
    %12 = arith.minimumf %8, %11 : vector<32x256xf32>
    %13 = math.exp %12 : vector<32x256xf32>
    %cst_10 = arith.constant 1.000000e+00 : f32
    %14 = vector.broadcast %cst_10 : f32 to vector<32x256xf32>
    %15 = arith.addf %14, %13 : vector<32x256xf32>
    %16 = math.log %15 : vector<32x256xf32>
    %17 = arith.select %10, %8, %16 : vector<32x256xi1>, vector<32x256xf32>
    %c0_11 = arith.constant 0 : index
    %c0_12 = arith.constant 0 : index
    %c0_13 = arith.constant 0 : index
    %18 = vector.load %arg5[%c0_11, %c0_12, %c0_13] : memref<1x32x256xf32, #tpu.memory_space<vmem>>, vector<1x32x256xf32>
    %19 = vector.shape_cast %18 : vector<1x32x256xf32> to vector<32x256xf32>
    %20 = vector.shape_cast %17 : vector<32x256xf32> to vector<1x32x256xf32>
    tpu.vector_store %arg5[%c0_11, %c0_12, %c0_13], %20 {strides = array<i32>} : memref<1x32x256xf32, #tpu.memory_space<vmem>>, vector<1x32x256xf32>,
    return
  }
  func.func @transform_0(%arg0: i32, %arg1: i32) -> (i32, i32, i32) {
    %c0_i32 = arith.constant 0 : i32
    %c0_i32_0 = arith.constant 0 : i32
    return %arg0, %arg1, %c0_i32 : i32, i32, i32
  }
  func.func @transform_1(%arg0: i32, %arg1: i32) -> (i32, i32, i32) {
    %c0_i32 = arith.constant 0 : i32
    %c0_i32_0 = arith.constant 0 : i32
    %c0_i32_1 = arith.constant 0 : i32
    return %arg0, %c0_i32, %c0_i32_0 : i32, i32, i32
  }
  func.func @transform_2(%arg0: i32, %arg1: i32) -> (i32, i32, i32) {
    %c0_i32 = arith.constant 0 : i32
    %c0_i32_0 = arith.constant 0 : i32
    %c0_i32_1 = arith.constant 0 : i32
    return %arg0, %c0_i32, %c0_i32_0 : i32, i32, i32
  }
  func.func @transform_3(%arg0: i32, %arg1: i32) -> (i32, i32, i32) {
    %c0_i32 = arith.constant 0 : i32
    %c0_i32_0 = arith.constant 0 : i32
    return %arg0, %arg1, %c0_i32 : i32, i32, i32
  }
}

module attributes {stable_mosaic.version = 11 : i64} {
  func.func @_sel_scan_kernel(%arg0: i32, %arg1: memref<8x16x192xf32, #tpu.memory_space<vmem>>, %arg2: memref<8x16x192xf32, #tpu.memory_space<vmem>>, %arg3: memref<8x16x192xf32, #tpu.memory_space<vmem>>, %arg4: memref<8x16x16xf32, #tpu.memory_space<vmem>>, %arg5: memref<8x16x16xf32, #tpu.memory_space<vmem>>, %arg6: memref<8x1x192xf32, #tpu.memory_space<vmem>>, %arg7: memref<8x16x192xf32, #tpu.memory_space<vmem>>, %arg8: memref<8x16x192xf32, #tpu.memory_space<vmem>>) attributes {dimension_semantics = [#tpu.dimension_semantics<parallel>], iteration_bounds = array<i64: 1>, scalar_prefetch = 0 : i64, scratch_operands = 1 : i64, tpu.core_type = #tpu.core_type<tc>, window_params = [{transform_indices = @transform_0, window_bounds = array<i64: 8, 16, 192>}, {transform_indices = @transform_1, window_bounds = array<i64: 8, 16, 192>}, {transform_indices = @transform_2, window_bounds = array<i64: 8, 16, 192>}, {transform_indices = @transform_3, window_bounds = array<i64: 8, 16, 16>}, {transform_indices = @transform_4, window_bounds = array<i64: 8, 16, 16>}, {transform_indices = @transform_5, window_bounds = array<i64: 8, 1, 192>}, {transform_indices = @transform_6, window_bounds = array<i64: 8, 16, 192>}]} {
    %cst = arith.constant 0.000000e+00 : f32
    %0 = vector.broadcast %cst : f32 to vector<8x16x192xf32>
    %c0 = arith.constant 0 : index
    %c0_0 = arith.constant 0 : index
    %c0_1 = arith.constant 0 : index
    %1 = vector.load %arg8[%c0, %c0_0, %c0_1] : memref<8x16x192xf32, #tpu.memory_space<vmem>>, vector<8x16x192xf32>
    tpu.vector_store %arg8[%c0, %c0_0, %c0_1], %0 {strides = array<i32>} : memref<8x16x192xf32, #tpu.memory_space<vmem>>, vector<8x16x192xf32>,
    %c0_2 = arith.constant 0 : index
    %c0_3 = arith.constant 0 : index
    %c0_4 = arith.constant 0 : index
    %2 = vector.load %arg3[%c0_2, %c0_3, %c0_4] : memref<8x16x192xf32, #tpu.memory_space<vmem>>, vector<8x16x192xf32>
    %c0_5 = arith.constant 0 : index
    %c0_6 = arith.constant 0 : index
    %c0_7 = arith.constant 0 : index
    %3 = vector.load %arg6[%c0_5, %c0_6, %c0_7] : memref<8x1x192xf32, #tpu.memory_space<vmem>>, vector<8x1x192xf32>
    %c0_i32 = arith.constant 0 : i32
    %c16_i32 = arith.constant 16 : i32
    %4 = arith.addi %c0_i32, %c16_i32 : i32
    %c1_i32 = arith.constant 1 : i32
    scf.for %arg9 = %c0_i32 to %4 step %c1_i32  : i32 {
      %c0_9 = arith.constant 0 : index
      %5 = arith.index_cast %arg9 : i32 to index
      %c0_10 = arith.constant 0 : index
      %6 = vector.load %arg1[%c0_9, %5, %c0_10] : memref<8x16x192xf32, #tpu.memory_space<vmem>>, vector<8x1x192xf32>
      %c0_11 = arith.constant 0 : index
      %7 = arith.index_cast %arg9 : i32 to index
      %c0_12 = arith.constant 0 : index
      %8 = vector.load %arg2[%c0_11, %7, %c0_12] : memref<8x16x192xf32, #tpu.memory_space<vmem>>, vector<8x1x192xf32>
      %c0_13 = arith.constant 0 : index
      %9 = arith.index_cast %arg9 : i32 to index
      %c0_14 = arith.constant 0 : index
      %10 = vector.load %arg4[%c0_13, %9, %c0_14] : memref<8x16x16xf32, #tpu.memory_space<vmem>>, vector<8x1x16xf32>
      %c0_15 = arith.constant 0 : index
      %11 = arith.index_cast %arg9 : i32 to index
      %c0_16 = arith.constant 0 : index
      %12 = vector.load %arg5[%c0_15, %11, %c0_16] : memref<8x16x16xf32, #tpu.memory_space<vmem>>, vector<8x1x16xf32>
      %13 = arith.mulf %8, %6 : vector<8x1x192xf32>
      %14 = vector.broadcast %8 : vector<8x1x192xf32> to vector<8x16x192xf32>
      %15 = arith.mulf %14, %2 : vector<8x16x192xf32>
      %16 = math.exp %15 : vector<8x16x192xf32>
      %17 = vector.shape_cast %10 : vector<8x1x16xf32> to vector<8x16x1xf32>
      %18 = vector.shape_cast %12 : vector<8x1x16xf32> to vector<8x16x1xf32>
      %c0_17 = arith.constant 0 : index
      %c0_18 = arith.constant 0 : index
      %c0_19 = arith.constant 0 : index
      %19 = vector.load %arg8[%c0_17, %c0_18, %c0_19] : memref<8x16x192xf32, #tpu.memory_space<vmem>>, vector<8x16x192xf32>
      %20 = arith.mulf %16, %19 : vector<8x16x192xf32>
      %21 = vector.broadcast %17 : vector<8x16x1xf32> to vector<8x16x192xf32>
      %22 = vector.broadcast %13 : vector<8x1x192xf32> to vector<8x16x192xf32>
      %23 = arith.mulf %21, %22 : vector<8x16x192xf32>
      %24 = arith.addf %20, %23 : vector<8x16x192xf32>
      %c0_20 = arith.constant 0 : index
      %c0_21 = arith.constant 0 : index
      %c0_22 = arith.constant 0 : index
      %25 = vector.load %arg8[%c0_20, %c0_21, %c0_22] : memref<8x16x192xf32, #tpu.memory_space<vmem>>, vector<8x16x192xf32>
      tpu.vector_store %arg8[%c0_20, %c0_21, %c0_22], %24 {strides = array<i32>} : memref<8x16x192xf32, #tpu.memory_space<vmem>>, vector<8x16x192xf32>,
      %26 = vector.broadcast %18 : vector<8x16x1xf32> to vector<8x16x192xf32>
      %27 = arith.mulf %26, %24 : vector<8x16x192xf32>
      %cst_23 = arith.constant dense<0.000000e+00> : vector<8x192xf32>
      %28 = vector.multi_reduction <add>, %27, %cst_23 [1] : vector<8x16x192xf32> to vector<8x192xf32>
      %29 = vector.shape_cast %28 : vector<8x192xf32> to vector<8x1x192xf32>
      %30 = arith.mulf %3, %6 : vector<8x1x192xf32>
      %31 = arith.addf %29, %30 : vector<8x1x192xf32>
      %c0_24 = arith.constant 0 : index
      %32 = arith.index_cast %arg9 : i32 to index
      %c0_25 = arith.constant 0 : index
      %33 = vector.load %arg7[%c0_24, %32, %c0_25] : memref<8x16x192xf32, #tpu.memory_space<vmem>>, vector<8x1x192xf32>
      tpu.vector_store %arg7[%c0_24, %32, %c0_25], %31 {strides = array<i32>} : memref<8x16x192xf32, #tpu.memory_space<vmem>>, vector<8x1x192xf32>,
    }
    %c16_i32_8 = arith.constant 16 : i32
    return
  }
  func.func @transform_0(%arg0: i32) -> (i32, i32, i32) {
    %c0_i32 = arith.constant 0 : i32
    %c0_i32_0 = arith.constant 0 : i32
    %c0_i32_1 = arith.constant 0 : i32
    return %arg0, %c0_i32, %c0_i32_0 : i32, i32, i32
  }
  func.func @transform_1(%arg0: i32) -> (i32, i32, i32) {
    %c0_i32 = arith.constant 0 : i32
    %c0_i32_0 = arith.constant 0 : i32
    %c0_i32_1 = arith.constant 0 : i32
    return %arg0, %c0_i32, %c0_i32_0 : i32, i32, i32
  }
  func.func @transform_2(%arg0: i32) -> (i32, i32, i32) {
    %c0_i32 = arith.constant 0 : i32
    %c0_i32_0 = arith.constant 0 : i32
    %c0_i32_1 = arith.constant 0 : i32
    return %arg0, %c0_i32, %c0_i32_0 : i32, i32, i32
  }
  func.func @transform_3(%arg0: i32) -> (i32, i32, i32) {
    %c0_i32 = arith.constant 0 : i32
    %c0_i32_0 = arith.constant 0 : i32
    %c0_i32_1 = arith.constant 0 : i32
    return %arg0, %c0_i32, %c0_i32_0 : i32, i32, i32
  }
  func.func @transform_4(%arg0: i32) -> (i32, i32, i32) {
    %c0_i32 = arith.constant 0 : i32
    %c0_i32_0 = arith.constant 0 : i32
    %c0_i32_1 = arith.constant 0 : i32
    return %arg0, %c0_i32, %c0_i32_0 : i32, i32, i32
  }
  func.func @transform_5(%arg0: i32) -> (i32, i32, i32) {
    %c0_i32 = arith.constant 0 : i32
    %c0_i32_0 = arith.constant 0 : i32
    %c0_i32_1 = arith.constant 0 : i32
    return %arg0, %c0_i32, %c0_i32_0 : i32, i32, i32
  }
  func.func @transform_6(%arg0: i32) -> (i32, i32, i32) {
    %c0_i32 = arith.constant 0 : i32
    %c0_i32_0 = arith.constant 0 : i32
    %c0_i32_1 = arith.constant 0 : i32
    return %arg0, %c0_i32, %c0_i32_0 : i32, i32, i32
  }
}

module attributes {stable_mosaic.version = 11 : i64} {
  func.func @_layernorm_kernel(%arg0: i32, %arg1: memref<32x192xf32, #tpu.memory_space<vmem>>, %arg2: memref<1x192xf32, #tpu.memory_space<vmem>>, %arg3: memref<1x192xf32, #tpu.memory_space<vmem>>, %arg4: memref<32x192xf32, #tpu.memory_space<vmem>>) attributes {dimension_semantics = [#tpu.dimension_semantics<parallel>], iteration_bounds = array<i64: 1>, scalar_prefetch = 0 : i64, scratch_operands = 0 : i64, tpu.core_type = #tpu.core_type<tc>, window_params = [{transform_indices = @transform_0, window_bounds = array<i64: 32, 192>}, {pipeline_mode = #tpu.pipeline_mode<synchronous>, transform_indices = @transform_1, window_bounds = array<i64: 1, 192>}, {pipeline_mode = #tpu.pipeline_mode<synchronous>, transform_indices = @transform_2, window_bounds = array<i64: 1, 192>}, {transform_indices = @transform_3, window_bounds = array<i64: 32, 192>}]} {
    %c0 = arith.constant 0 : index
    %c0_0 = arith.constant 0 : index
    %0 = vector.load %arg1[%c0, %c0_0] : memref<32x192xf32, #tpu.memory_space<vmem>>, vector<32x192xf32>
    %cst = arith.constant dense<0.000000e+00> : vector<32xf32>
    %1 = vector.multi_reduction <add>, %0, %cst [1] : vector<32x192xf32> to vector<32xf32>
    %2 = vector.shape_cast %1 : vector<32xf32> to vector<32x1xf32>
    %cst_1 = arith.constant 1.920000e+02 : f32
    %3 = vector.broadcast %cst_1 : f32 to vector<32x1xf32>
    %4 = arith.divf %2, %3 : vector<32x1xf32>
    %5 = vector.broadcast %4 : vector<32x1xf32> to vector<32x192xf32>
    %6 = arith.subf %0, %5 : vector<32x192xf32>
    %7 = arith.mulf %6, %6 : vector<32x192xf32>
    %cst_2 = arith.constant dense<0.000000e+00> : vector<32xf32>
    %8 = vector.multi_reduction <add>, %7, %cst_2 [1] : vector<32x192xf32> to vector<32xf32>
    %9 = vector.shape_cast %8 : vector<32xf32> to vector<32x1xf32>
    %cst_3 = arith.constant 1.920000e+02 : f32
    %10 = vector.broadcast %cst_3 : f32 to vector<32x1xf32>
    %11 = arith.divf %9, %10 : vector<32x1xf32>
    %cst_4 = arith.constant 9.99999974E-6 : f32
    %12 = vector.broadcast %cst_4 : f32 to vector<32x1xf32>
    %13 = arith.addf %11, %12 : vector<32x1xf32>
    %14 = math.rsqrt %13 : vector<32x1xf32>
    %15 = vector.broadcast %14 : vector<32x1xf32> to vector<32x192xf32>
    %16 = arith.mulf %6, %15 : vector<32x192xf32>
    %c0_5 = arith.constant 0 : index
    %c0_6 = arith.constant 0 : index
    %17 = vector.load %arg2[%c0_5, %c0_6] : memref<1x192xf32, #tpu.memory_space<vmem>>, vector<1x192xf32>
    %18 = vector.broadcast %17 : vector<1x192xf32> to vector<32x192xf32>
    %19 = arith.mulf %16, %18 : vector<32x192xf32>
    %c0_7 = arith.constant 0 : index
    %c0_8 = arith.constant 0 : index
    %20 = vector.load %arg3[%c0_7, %c0_8] : memref<1x192xf32, #tpu.memory_space<vmem>>, vector<1x192xf32>
    %21 = vector.broadcast %20 : vector<1x192xf32> to vector<32x192xf32>
    %22 = arith.addf %19, %21 : vector<32x192xf32>
    %c0_9 = arith.constant 0 : index
    %c0_10 = arith.constant 0 : index
    %23 = vector.load %arg4[%c0_9, %c0_10] : memref<32x192xf32, #tpu.memory_space<vmem>>, vector<32x192xf32>
    tpu.vector_store %arg4[%c0_9, %c0_10], %22 {strides = array<i32>} : memref<32x192xf32, #tpu.memory_space<vmem>>, vector<32x192xf32>,
    return
  }
  func.func @transform_0(%arg0: i32) -> (i32, i32) {
    %c0_i32 = arith.constant 0 : i32
    %c0_i32_0 = arith.constant 0 : i32
    return %arg0, %c0_i32 : i32, i32
  }
  func.func @transform_1(%arg0: i32) -> (i32, i32) {
    %c0_i32 = arith.constant 0 : i32
    %c0_i32_0 = arith.constant 0 : i32
    %c0_i32_1 = arith.constant 0 : i32
    return %c0_i32, %c0_i32_0 : i32, i32
  }
  func.func @transform_2(%arg0: i32) -> (i32, i32) {
    %c0_i32 = arith.constant 0 : i32
    %c0_i32_0 = arith.constant 0 : i32
    %c0_i32_1 = arith.constant 0 : i32
    return %c0_i32, %c0_i32_0 : i32, i32
  }
  func.func @transform_3(%arg0: i32) -> (i32, i32) {
    %c0_i32 = arith.constant 0 : i32
    %c0_i32_0 = arith.constant 0 : i32
    return %arg0, %c0_i32 : i32, i32
  }
}

module attributes {stable_mosaic.version = 11 : i64} {
  func.func @_matmul_kernel(%arg0: i32, %arg1: i32, %arg2: i32, %arg3: memref<32x256xbf16, #tpu.memory_space<vmem>>, %arg4: memref<256x128xbf16, #tpu.memory_space<vmem>>, %arg5: memref<1x128xf32, #tpu.memory_space<vmem>>, %arg6: memref<1x128xf32, #tpu.memory_space<vmem>>, %arg7: memref<32x128xf32, #tpu.memory_space<vmem>>, %arg8: memref<32x128xf32, #tpu.memory_space<vmem>>) attributes {dimension_semantics = [#tpu.dimension_semantics<parallel>, #tpu.dimension_semantics<parallel>, #tpu.dimension_semantics<arbitrary>], iteration_bounds = array<i64: 1, 1, 1>, scalar_prefetch = 0 : i64, scratch_operands = 1 : i64, tpu.core_type = #tpu.core_type<tc>, window_params = [{transform_indices = @transform_0, window_bounds = array<i64: 32, 256>}, {transform_indices = @transform_1, window_bounds = array<i64: 256, 128>}, {transform_indices = @transform_2, window_bounds = array<i64: 1, 128>}, {transform_indices = @transform_3, window_bounds = array<i64: 1, 128>}, {transform_indices = @transform_4, window_bounds = array<i64: 32, 128>}]} {
    %c0_i32 = arith.constant 0 : i32
    %0 = arith.cmpi eq, %arg2, %c0_i32 : i32
    %1 = arith.extui %0 : i1 to i32
    %c0_i32_0 = arith.constant 0 : i32
    %2 = arith.cmpi ne, %1, %c0_i32_0 : i32
    scf.if %2 {
      %cst_10 = arith.constant 0.000000e+00 : f32
      %12 = vector.broadcast %cst_10 : f32 to vector<32x128xf32>
      %c0_11 = arith.constant 0 : index
      %c0_12 = arith.constant 0 : index
      %13 = vector.load %arg8[%c0_11, %c0_12] : memref<32x128xf32, #tpu.memory_space<vmem>>, vector<32x128xf32>
      tpu.vector_store %arg8[%c0_11, %c0_12], %12 {strides = array<i32>} : memref<32x128xf32, #tpu.memory_space<vmem>>, vector<32x128xf32>,
    } else {
    }
    %c0 = arith.constant 0 : index
    %c0_1 = arith.constant 0 : index
    %3 = vector.load %arg8[%c0, %c0_1] : memref<32x128xf32, #tpu.memory_space<vmem>>, vector<32x128xf32>
    %c0_2 = arith.constant 0 : index
    %c0_3 = arith.constant 0 : index
    %4 = vector.load %arg3[%c0_2, %c0_3] : memref<32x256xbf16, #tpu.memory_space<vmem>>, vector<32x256xbf16>
    %c0_4 = arith.constant 0 : index
    %c0_5 = arith.constant 0 : index
    %5 = vector.load %arg4[%c0_4, %c0_5] : memref<256x128xbf16, #tpu.memory_space<vmem>>, vector<256x128xbf16>
    %cst = arith.constant dense<0.000000e+00> : vector<32x128xf32>
    %6 = tpu.matmul %4, %5, %cst {dimension_numbers = #tpu.dot_dimension_numbers<[1], [0], [0], [1], [0, 0, 1, 1], [], []>} : vector<32x256xbf16>, vector<256x128xbf16>, vector<32x128xf32> -> vector<32x128xf32>
    %7 = arith.addf %3, %6 : vector<32x128xf32>
    %c0_6 = arith.constant 0 : index
    %c0_7 = arith.constant 0 : index
    %8 = vector.load %arg8[%c0_6, %c0_7] : memref<32x128xf32, #tpu.memory_space<vmem>>, vector<32x128xf32>
    tpu.vector_store %arg8[%c0_6, %c0_7], %7 {strides = array<i32>} : memref<32x128xf32, #tpu.memory_space<vmem>>, vector<32x128xf32>,
    %c0_i32_8 = arith.constant 0 : i32
    %9 = arith.cmpi eq, %arg2, %c0_i32_8 : i32
    %10 = arith.extui %9 : i1 to i32
    %c0_i32_9 = arith.constant 0 : i32
    %11 = arith.cmpi ne, %10, %c0_i32_9 : i32
    scf.if %11 {
      %c0_10 = arith.constant 0 : index
      %c0_11 = arith.constant 0 : index
      %12 = vector.load %arg8[%c0_10, %c0_11] : memref<32x128xf32, #tpu.memory_space<vmem>>, vector<32x128xf32>
      %c0_12 = arith.constant 0 : index
      %c0_13 = arith.constant 0 : index
      %13 = vector.load %arg5[%c0_12, %c0_13] : memref<1x128xf32, #tpu.memory_space<vmem>>, vector<1x128xf32>
      %14 = vector.broadcast %13 : vector<1x128xf32> to vector<32x128xf32>
      %15 = arith.mulf %12, %14 : vector<32x128xf32>
      %c0_14 = arith.constant 0 : index
      %c0_15 = arith.constant 0 : index
      %16 = vector.load %arg6[%c0_14, %c0_15] : memref<1x128xf32, #tpu.memory_space<vmem>>, vector<1x128xf32>
      %17 = vector.broadcast %16 : vector<1x128xf32> to vector<32x128xf32>
      %18 = arith.addf %15, %17 : vector<32x128xf32>
      %c0_16 = arith.constant 0 : index
      %c0_17 = arith.constant 0 : index
      %19 = vector.load %arg7[%c0_16, %c0_17] : memref<32x128xf32, #tpu.memory_space<vmem>>, vector<32x128xf32>
      tpu.vector_store %arg7[%c0_16, %c0_17], %18 {strides = array<i32>} : memref<32x128xf32, #tpu.memory_space<vmem>>, vector<32x128xf32>,
    } else {
    }
    return
  }
  func.func @transform_0(%arg0: i32, %arg1: i32, %arg2: i32) -> (i32, i32) {
    %c0_i32 = arith.constant 0 : i32
    return %arg0, %arg2 : i32, i32
  }
  func.func @transform_1(%arg0: i32, %arg1: i32, %arg2: i32) -> (i32, i32) {
    %c0_i32 = arith.constant 0 : i32
    return %arg2, %arg1 : i32, i32
  }
  func.func @transform_2(%arg0: i32, %arg1: i32, %arg2: i32) -> (i32, i32) {
    %c0_i32 = arith.constant 0 : i32
    %c0_i32_0 = arith.constant 0 : i32
    return %c0_i32, %arg1 : i32, i32
  }
  func.func @transform_3(%arg0: i32, %arg1: i32, %arg2: i32) -> (i32, i32) {
    %c0_i32 = arith.constant 0 : i32
    %c0_i32_0 = arith.constant 0 : i32
    return %c0_i32, %arg1 : i32, i32
  }
  func.func @transform_4(%arg0: i32, %arg1: i32, %arg2: i32) -> (i32, i32) {
    %c0_i32 = arith.constant 0 : i32
    return %arg0, %arg1 : i32, i32
  }
}

module attributes {stable_mosaic.version = 11 : i64} {
  func.func @_matmul_kernel(%arg0: i32, %arg1: i32, %arg2: i32, %arg3: memref<128x128xbf16, #tpu.memory_space<vmem>>, %arg4: memref<128x128xbf16, #tpu.memory_space<vmem>>, %arg5: memref<1x128xf32, #tpu.memory_space<vmem>>, %arg6: memref<1x128xf32, #tpu.memory_space<vmem>>, %arg7: memref<128x128xf32, #tpu.memory_space<vmem>>, %arg8: memref<128x128xf32, #tpu.memory_space<vmem>>) attributes {dimension_semantics = [#tpu.dimension_semantics<parallel>, #tpu.dimension_semantics<parallel>, #tpu.dimension_semantics<arbitrary>], iteration_bounds = array<i64: 1, 1, 1>, scalar_prefetch = 0 : i64, scratch_operands = 1 : i64, tpu.core_type = #tpu.core_type<tc>, window_params = [{transform_indices = @transform_0, window_bounds = array<i64: 128, 128>}, {transform_indices = @transform_1, window_bounds = array<i64: 128, 128>}, {transform_indices = @transform_2, window_bounds = array<i64: 1, 128>}, {transform_indices = @transform_3, window_bounds = array<i64: 1, 128>}, {transform_indices = @transform_4, window_bounds = array<i64: 128, 128>}]} {
    %c0_i32 = arith.constant 0 : i32
    %0 = arith.cmpi eq, %arg2, %c0_i32 : i32
    %1 = arith.extui %0 : i1 to i32
    %c0_i32_0 = arith.constant 0 : i32
    %2 = arith.cmpi ne, %1, %c0_i32_0 : i32
    scf.if %2 {
      %cst_10 = arith.constant 0.000000e+00 : f32
      %12 = vector.broadcast %cst_10 : f32 to vector<128x128xf32>
      %c0_11 = arith.constant 0 : index
      %c0_12 = arith.constant 0 : index
      %13 = vector.load %arg8[%c0_11, %c0_12] : memref<128x128xf32, #tpu.memory_space<vmem>>, vector<128x128xf32>
      tpu.vector_store %arg8[%c0_11, %c0_12], %12 {strides = array<i32>} : memref<128x128xf32, #tpu.memory_space<vmem>>, vector<128x128xf32>,
    } else {
    }
    %c0 = arith.constant 0 : index
    %c0_1 = arith.constant 0 : index
    %3 = vector.load %arg8[%c0, %c0_1] : memref<128x128xf32, #tpu.memory_space<vmem>>, vector<128x128xf32>
    %c0_2 = arith.constant 0 : index
    %c0_3 = arith.constant 0 : index
    %4 = vector.load %arg3[%c0_2, %c0_3] : memref<128x128xbf16, #tpu.memory_space<vmem>>, vector<128x128xbf16>
    %c0_4 = arith.constant 0 : index
    %c0_5 = arith.constant 0 : index
    %5 = vector.load %arg4[%c0_4, %c0_5] : memref<128x128xbf16, #tpu.memory_space<vmem>>, vector<128x128xbf16>
    %cst = arith.constant dense<0.000000e+00> : vector<128x128xf32>
    %6 = tpu.matmul %4, %5, %cst {dimension_numbers = #tpu.dot_dimension_numbers<[1], [0], [0], [1], [0, 0, 1, 1], [], []>} : vector<128x128xbf16>, vector<128x128xbf16>, vector<128x128xf32> -> vector<128x128xf32>
    %7 = arith.addf %3, %6 : vector<128x128xf32>
    %c0_6 = arith.constant 0 : index
    %c0_7 = arith.constant 0 : index
    %8 = vector.load %arg8[%c0_6, %c0_7] : memref<128x128xf32, #tpu.memory_space<vmem>>, vector<128x128xf32>
    tpu.vector_store %arg8[%c0_6, %c0_7], %7 {strides = array<i32>} : memref<128x128xf32, #tpu.memory_space<vmem>>, vector<128x128xf32>,
    %c0_i32_8 = arith.constant 0 : i32
    %9 = arith.cmpi eq, %arg2, %c0_i32_8 : i32
    %10 = arith.extui %9 : i1 to i32
    %c0_i32_9 = arith.constant 0 : i32
    %11 = arith.cmpi ne, %10, %c0_i32_9 : i32
    scf.if %11 {
      %c0_10 = arith.constant 0 : index
      %c0_11 = arith.constant 0 : index
      %12 = vector.load %arg8[%c0_10, %c0_11] : memref<128x128xf32, #tpu.memory_space<vmem>>, vector<128x128xf32>
      %c0_12 = arith.constant 0 : index
      %c0_13 = arith.constant 0 : index
      %13 = vector.load %arg5[%c0_12, %c0_13] : memref<1x128xf32, #tpu.memory_space<vmem>>, vector<1x128xf32>
      %14 = vector.broadcast %13 : vector<1x128xf32> to vector<128x128xf32>
      %15 = arith.mulf %12, %14 : vector<128x128xf32>
      %c0_14 = arith.constant 0 : index
      %c0_15 = arith.constant 0 : index
      %16 = vector.load %arg6[%c0_14, %c0_15] : memref<1x128xf32, #tpu.memory_space<vmem>>, vector<1x128xf32>
      %17 = vector.broadcast %16 : vector<1x128xf32> to vector<128x128xf32>
      %18 = arith.addf %15, %17 : vector<128x128xf32>
      %c0_16 = arith.constant 0 : index
      %c0_17 = arith.constant 0 : index
      %19 = vector.load %arg7[%c0_16, %c0_17] : memref<128x128xf32, #tpu.memory_space<vmem>>, vector<128x128xf32>
      tpu.vector_store %arg7[%c0_16, %c0_17], %18 {strides = array<i32>} : memref<128x128xf32, #tpu.memory_space<vmem>>, vector<128x128xf32>,
    } else {
    }
    return
  }
  func.func @transform_0(%arg0: i32, %arg1: i32, %arg2: i32) -> (i32, i32) {
    %c0_i32 = arith.constant 0 : i32
    return %arg0, %arg2 : i32, i32
  }
  func.func @transform_1(%arg0: i32, %arg1: i32, %arg2: i32) -> (i32, i32) {
    %c0_i32 = arith.constant 0 : i32
    return %arg2, %arg1 : i32, i32
  }
  func.func @transform_2(%arg0: i32, %arg1: i32, %arg2: i32) -> (i32, i32) {
    %c0_i32 = arith.constant 0 : i32
    %c0_i32_0 = arith.constant 0 : i32
    return %c0_i32, %arg1 : i32, i32
  }
  func.func @transform_3(%arg0: i32, %arg1: i32, %arg2: i32) -> (i32, i32) {
    %c0_i32 = arith.constant 0 : i32
    %c0_i32_0 = arith.constant 0 : i32
    return %c0_i32, %arg1 : i32, i32
  }
  func.func @transform_4(%arg0: i32, %arg1: i32, %arg2: i32) -> (i32, i32) {
    %c0_i32 = arith.constant 0 : i32
    return %arg0, %arg1 : i32, i32
  }
}

</mosaic_0001>

<llo_original>
// kernel: _lambda_.13
$region0: #{_lambda_.13}
  #allocation0 [shape = 'u32[]', space=smem, size = 0x4, offset = 0x4, fixed_abs, tag = 'smem constant byte address 0x4 - core index']
  #allocation1 [shape = 'u32[144,128]{1,0:T(1,128)}', space=vmem, size = 0x12000, scoped, tag = 'internal scratch']
  #allocation2 [shape = 'f32[128,128]{1,0:T(8,128)}', space=vmem, size = 0x10000, scoped, tag = 'scratch operand']
  %s0 = inlined_call_operand.vmem [shape: bf16[128,128], index: 0, kind: input, shape index: {}]
  %s1 = inlined_call_operand.vmem [shape: bf16[128,128], index: 1, kind: input, shape index: {}]
  %s2 = inlined_call_operand.vmem [shape: f32[1,128], index: 2, kind: input, shape index: {}]
  %s3 = inlined_call_operand.vmem [shape: f32[1,128], index: 3, kind: input, shape index: {}]
  %s4 = inlined_call_operand.vmem [shape: f32[128,128], index: 4, kind: output, shape index: {}]
  %s5 = sld [smem:[#allocation0]]
  $region34: #{_lambda_.13} parent=0
    _
  %s7 = ssub.s32 1, %s5
  %s8 = scalar_select 0, %s7, %s5
  // Predicated region
  $region2: #{_lambda_.13} parent=0 // pred_check
    _
  $region3: #{_lambda_.13} parent=0 // pred_check_branch
    %10 = sbr.rel (0) target = $region5
  $region4: #{_lambda_.13} parent=0 // pred_region
    _
  $region5: #{_lambda_.13} parent=0 // pred_fallthru
    _
  // Predicated region
  $region6: #{_lambda_.13} parent=0 // pred_check
    _
  $region7: #{_lambda_.13} parent=0 // pred_check_branch
    %12 = sbr.rel (0) target = $region9
  $region8: #{_lambda_.13} parent=0 // pred_region
    _
  $region9: #{_lambda_.13} parent=0 // pred_fallthru
    _
  // Predicated region
  $region10: #{_lambda_.13} parent=0 // pred_check
    _
  $region11: #{_lambda_.13} parent=0 // pred_check_branch
    %14 = sbr.rel (0) target = $region13
  $region12: #{_lambda_.13} parent=0 // pred_region
    _
  $region13: #{_lambda_.13} parent=0 // pred_fallthru
    _
  // Predicated region
  $region14: #{_lambda_.13} parent=0 // pred_check
    _
  $region15: #{_lambda_.13} parent=0 // pred_check_branch
    %16 = sbr.rel (0) target = $region17
  $region16: #{_lambda_.13} parent=0 // pred_region
    _
  $region17: #{_lambda_.13} parent=0 // pred_fallthru
    _
  %p18 = scmp.eq.s32.totalorder 0, 0
  // Predicated region
  $region18: #{_lambda_.13} parent=0 // pred_check
    %p19 = pneg %p18
  $region19: #{_lambda_.13} parent=0 // pred_check_branch
    %21 = sbr.rel (%p19) target = $region21
  $region20: #{_lambda_.13} parent=0 // pred_region
    %22 = vst [vmem:[#allocation2] sm:$0xff] 0.0
    %23 = vst [vmem:[#allocation2 + $0x8] sm:$0xff] 0.0
    %24 = vst [vmem:[#allocation2 + $0x10] sm:$0xff] 0.0
    %25 = vst [vmem:[#allocation2 + $0x18] sm:$0xff] 0.0
    %26 = vst [vmem:[#allocation2 + $0x20] sm:$0xff] 0.0
    %27 = vst [vmem:[#allocation2 + $0x28] sm:$0xff] 0.0
    %28 = vst [vmem:[#allocation2 + $0x30] sm:$0xff] 0.0
    %29 = vst [vmem:[#allocation2 + $0x38] sm:$0xff] 0.0
    %30 = vst [vmem:[#allocation2 + $0x40] sm:$0xff] 0.0
    %31 = vst [vmem:[#allocation2 + $0x48] sm:$0xff] 0.0
    %32 = vst [vmem:[#allocation2 + $0x50] sm:$0xff] 0.0
    %33 = vst [vmem:[#allocation2 + $0x58] sm:$0xff] 0.0
    %34 = vst [vmem:[#allocation2 + $0x60] sm:$0xff] 0.0
    %35 = vst [vmem:[#allocation2 + $0x68] sm:$0xff] 0.0
    %36 = vst [vmem:[#allocation2 + $0x70] sm:$0xff] 0.0
    %37 = vst [vmem:[#allocation2 + $0x78] sm:$0xff] 0.0
  $region21: #{_lambda_.13} parent=0 // pred_fallthru
    _
  %v38 = vld [vmem:[#allocation2] sm:$0xff]
  %v39 = vld [vmem:[#allocation2 + $0x8] sm:$0xff]
  %v40 = vld [vmem:[#allocation2 + $0x10] sm:$0xff]
  %v41 = vld [vmem:[#allocation2 + $0x18] sm:$0xff]
  %v42 = vld [vmem:[#allocation2 + $0x20] sm:$0xff]
  %v43 = vld [vmem:[#allocation2 + $0x28] sm:$0xff]
  %v44 = vld [vmem:[#allocation2 + $0x30] sm:$0xff]
  %v45 = vld [vmem:[#allocation2 + $0x38] sm:$0xff]
  %v46 = vld [vmem:[#allocation2 + $0x40] sm:$0xff]
  %v47 = vld [vmem:[#allocation2 + $0x48] sm:$0xff]
  %v48 = vld [vmem:[#allocation2 + $0x50] sm:$0xff]
  %v49 = vld [vmem:[#allocation2 + $0x58] sm:$0xff]
  %v50 = vld [vmem:[#allocation2 + $0x60] sm:$0xff]
  %v51 = vld [vmem:[#allocation2 + $0x68] sm:$0xff]
  %v52 = vld [vmem:[#allocation2 + $0x70] sm:$0xff]
  %v53 = vld [vmem:[#allocation2 + $0x78] sm:$0xff]
  %v54 = vld [vmem:[%s0] sm:$0xf]
  %v55 = vld [vmem:[%s0 + $0x4] sm:$0xf]
  %v56 = vld [vmem:[%s0 + $0x8] sm:$0xf]
  %v57 = vld [vmem:[%s0 + $0xc] sm:$0xf]
  %v58 = vld [vmem:[%s0 + $0x10] sm:$0xf]
  %v59 = vld [vmem:[%s0 + $0x14] sm:$0xf]
  %v60 = vld [vmem:[%s0 + $0x18] sm:$0xf]
  %v61 = vld [vmem:[%s0 + $0x1c] sm:$0xf]
  %v62 = vld [vmem:[%s0 + $0x20] sm:$0xf]
  %v63 = vld [vmem:[%s0 + $0x24] sm:$0xf]
  %v64 = vld [vmem:[%s0 + $0x28] sm:$0xf]
  %v65 = vld [vmem:[%s0 + $0x2c] sm:$0xf]
  %v66 = vld [vmem:[%s0 + $0x30] sm:$0xf]
  %v67 = vld [vmem:[%s0 + $0x34] sm:$0xf]
  %v68 = vld [vmem:[%s0 + $0x38] sm:$0xf]
  %v69 = vld [vmem:[%s0 + $0x3c] sm:$0xf]
  %v70 = vld [vmem:[%s1] sm:$0xf]
  %v71 = vld [vmem:[%s1 + $0x4] sm:$0xf]
  %v72 = vld [vmem:[%s1 + $0x8] sm:$0xf]
  %v73 = vld [vmem:[%s1 + $0xc] sm:$0xf]
  %v74 = vld [vmem:[%s1 + $0x10] sm:$0xf]
  %v75 = vld [vmem:[%s1 + $0x14] sm:$0xf]
  %v76 = vld [vmem:[%s1 + $0x18] sm:$0xf]
  %v77 = vld [vmem:[%s1 + $0x1c] sm:$0xf]
  %v78 = vld [vmem:[%s1 + $0x20] sm:$0xf]
  %v79 = vld [vmem:[%s1 + $0x24] sm:$0xf]
  %v80 = vld [vmem:[%s1 + $0x28] sm:$0xf]
  %v81 = vld [vmem:[%s1 + $0x2c] sm:$0xf]
  %v82 = vld [vmem:[%s1 + $0x30] sm:$0xf]
  %v83 = vld [vmem:[%s1 + $0x34] sm:$0xf]
  %v84 = vld [vmem:[%s1 + $0x38] sm:$0xf]
  %v85 = vld [vmem:[%s1 + $0x3c] sm:$0xf]
  %v102 = vunpack.c.l.b16 %v54
  %v103 = vunpack.c.l.b16 %v55
  %v104 = vunpack.c.l.b16 %v56
  %v105 = vunpack.c.l.b16 %v57
  %v106 = vunpack.c.l.b16 %v58
  %v107 = vunpack.c.l.b16 %v59
  %v108 = vunpack.c.l.b16 %v60
  %v109 = vunpack.c.l.b16 %v61
  %v110 = vunpack.c.l.b16 %v62
  %v111 = vunpack.c.l.b16 %v63
  %v112 = vunpack.c.l.b16 %v64
  %v113 = vunpack.c.l.b16 %v65
  %v114 = vunpack.c.l.b16 %v66
  %v115 = vunpack.c.l.b16 %v67
  %v116 = vunpack.c.l.b16 %v68
  %v117 = vunpack.c.l.b16 %v69
  %v118 = vpack.c.b16 %v103, %v102
  %v119 = vpack.c.b16 %v105, %v104
  %v120 = vpack.c.b16 %v107, %v106
  %v121 = vpack.c.b16 %v109, %v108
  %v122 = vpack.c.b16 %v111, %v110
  %v123 = vpack.c.b16 %v113, %v112
  %v124 = vpack.c.b16 %v115, %v114
  %v125 = vpack.c.b16 %v117, %v116
  %v150 = vunpack.c.l.b16 %v70
  %v151 = vunpack.c.l.b16 %v71
  %v152 = vunpack.c.l.b16 %v72
  %v153 = vunpack.c.l.b16 %v73
  %v154 = vunpack.c.l.b16 %v74
  %v155 = vunpack.c.l.b16 %v75
  %v156 = vunpack.c.l.b16 %v76
  %v157 = vunpack.c.l.b16 %v77
  %v158 = vunpack.c.l.b16 %v78
  %v159 = vunpack.c.l.b16 %v79
  %v160 = vunpack.c.l.b16 %v80
  %v161 = vunpack.c.l.b16 %v81
  %v162 = vunpack.c.l.b16 %v82
  %v163 = vunpack.c.l.b16 %v83
  %v164 = vunpack.c.l.b16 %v84
  %v165 = vunpack.c.l.b16 %v85
  %v166 = vpack.c.b16 %v151, %v150
  %v167 = vpack.c.b16 %v153, %v152
  %v168 = vpack.c.b16 %v155, %v154
  %v169 = vpack.c.b16 %v157, %v156
  %v170 = vpack.c.b16 %v159, %v158
  %v171 = vpack.c.b16 %v161, %v160
  %v172 = vpack.c.b16 %v163, %v162
  %v173 = vpack.c.b16 %v165, %v164
  %182 = vmatprep.subr.bf16.mxu0 0
  %183 = vmatpush1.bf16.msra.mxu0 %v173
  %184 = vmatprep.subr.bf16.mxu0 0
  %185 = vmatpush1.bf16.msra.mxu0 %v172
  %186 = vmatprep.subr.bf16.mxu0 0
  %187 = vmatpush1.bf16.msra.mxu0 %v171
  %188 = vmatprep.subr.bf16.mxu0 0
  %189 = vmatpush1.bf16.msra.mxu0 %v170
  %190 = vmatprep.subr.bf16.mxu0 0
  %191 = vmatpush1.bf16.msra.mxu0 %v169
  %192 = vmatprep.subr.bf16.mxu0 0
  %193 = vmatpush1.bf16.msra.mxu0 %v168
  %194 = vmatprep.subr.bf16.mxu0 0
  %195 = vmatpush1.bf16.msra.mxu0 %v167
  %196 = vmatprep.subr.bf16.mxu0 0
  %197 = vmatpush1.bf16.msra.mxu0 %v166
  %198 = vmatprep.subr.bf16.mxu0 0
  %199 = vmatpush2.bf16.msra.mxu0 0
  %200 = vmatprep.subr.bf16.mxu0 0
  %201 = vmatpush2.bf16.msra.mxu0 0
  %202 = vmatprep.subr.bf16.mxu0 0
  %203 = vmatpush2.bf16.msra.mxu0 0
  %204 = vmatprep.subr.bf16.mxu0 0
  %205 = vmatpush2.bf16.msra.mxu0 0
  %206 = vmatprep.subr.bf16.mxu0 0
  %207 = vmatpush2.bf16.msra.mxu0 0
  %208 = vmatprep.subr.bf16.mxu0 0
  %209 = vmatpush2.bf16.msra.mxu0 0
  %210 = vmatprep.subr.bf16.mxu0 0
  %211 = vmatpush2.bf16.msra.mxu0 0
  %212 = vmatprep.subr.bf16.mxu0 0
  %213 = vmatpush2.bf16.msra.mxu0 0
  %214 = vmatprep.mubr.bf16.mxu0 0
  %215 = vmatmul.mubr.bf16.gmra.mxu0 %v118
  %v216 = vpop.f32.mrf.mxu0
  %v217 = vadd.f32 0.0, %v216
  %v218 = vpop.f32.mrf.mxu0
  %v219 = vpop.f32.mrf.mxu0
  %v220 = vadd.f32 0.0, %v219
  %v221 = vpop.f32.mrf.mxu0
  %222 = vmatprep.mubr.bf16.mxu0 0
  %223 = vmatmul.mubr.bf16.gmra.mxu0 %v119
  %v224 = vpop.f32.mrf.mxu0
  %v225 = vadd.f32 0.0, %v224
  %v226 = vpop.f32.mrf.mxu0
  %v227 = vpop.f32.mrf.mxu0
  %v228 = vadd.f32 0.0, %v227
  %v229 = vpop.f32.mrf.mxu0
  %230 = vmatprep.mubr.bf16.mxu0 0
  %231 = vmatmul.mubr.bf16.gmra.mxu0 %v120
  %v232 = vpop.f32.mrf.mxu0
  %v233 = vadd.f32 0.0, %v232
  %v234 = vpop.f32.mrf.mxu0
  %v235 = vpop.f32.mrf.mxu0
  %v236 = vadd.f32 0.0, %v235
  %v237 = vpop.f32.mrf.mxu0
  %238 = vmatprep.mubr.bf16.mxu0 0
  %239 = vmatmul.mubr.bf16.gmra.mxu0 %v121
  %v240 = vpop.f32.mrf.mxu0
  %v241 = vadd.f32 0.0, %v240
  %v242 = vpop.f32.mrf.mxu0
  %v243 = vpop.f32.mrf.mxu0
  %v244 = vadd.f32 0.0, %v243
  %v245 = vpop.f32.mrf.mxu0
  %246 = vmatprep.mubr.bf16.mxu0 0
  %247 = vmatmul.mubr.bf16.gmra.mxu0 %v122
  %v248 = vpop.f32.mrf.mxu0
  %v249 = vadd.f32 0.0, %v248
  %v250 = vpop.f32.mrf.mxu0
  %v251 = vpop.f32.mrf.mxu0
  %v252 = vadd.f32 0.0, %v251
  %v253 = vpop.f32.mrf.mxu0
  %254 = vmatprep.mubr.bf16.mxu0 0
  %255 = vmatmul.mubr.bf16.gmra.mxu0 %v123
  %v256 = vpop.f32.mrf.mxu0
  %v257 = vadd.f32 0.0, %v256
  %v258 = vpop.f32.mrf.mxu0
  %v259 = vpop.f32.mrf.mxu0
  %v260 = vadd.f32 0.0, %v259
  %v261 = vpop.f32.mrf.mxu0
  %262 = vmatprep.mubr.bf16.mxu0 0
  %263 = vmatmul.mubr.bf16.gmra.mxu0 %v124
  %v264 = vpop.f32.mrf.mxu0
  %v265 = vadd.f32 0.0, %v264
  %v266 = vpop.f32.mrf.mxu0
  %v267 = vpop.f32.mrf.mxu0
  %v268 = vadd.f32 0.0, %v267
  %v269 = vpop.f32.mrf.mxu0
  %270 = vmatprep.mubr.bf16.mxu0 0
  %271 = vmatmul.mubr.bf16.gmra.mxu0 %v125
  %v272 = vpop.f32.mrf.mxu0
  %v273 = vadd.f32 0.0, %v272
  %v274 = vpop.f32.mrf.mxu0
  %v275 = vpop.f32.mrf.mxu0
  %v276 = vadd.f32 0.0, %v275
  %v277 = vpop.f32.mrf.mxu0
  %278 = vdwg.mxu0
  %v279 = vadd.f32 %v38, %v217
  %v280 = vadd.f32 %v39, %v220
  %v281 = vadd.f32 %v40, %v225
  %v282 = vadd.f32 %v41, %v228
  %v283 = vadd.f32 %v42, %v233
  %v284 = vadd.f32 %v43, %v236
  %v285 = vadd.f32 %v44, %v241
  %v286 = vadd.f32 %v45, %v244
  %v287 = vadd.f32 %v46, %v249
  %v288 = vadd.f32 %v47, %v252
  %v289 = vadd.f32 %v48, %v257
  %v290 = vadd.f32 %v49, %v260
  %v291 = vadd.f32 %v50, %v265
  %v292 = vadd.f32 %v51, %v268
  %v293 = vadd.f32 %v52, %v273
  %v294 = vadd.f32 %v53, %v276
  %295 = vst [vmem:[#allocation2] sm:$0xff] %v279
  %296 = vst [vmem:[#allocation2 + $0x8] sm:$0xff] %v280
  %297 = vst [vmem:[#allocation2 + $0x10] sm:$0xff] %v281
  %298 = vst [vmem:[#allocation2 + $0x18] sm:$0xff] %v282
  %299 = vst [vmem:[#allocation2 + $0x20] sm:$0xff] %v283
  %300 = vst [vmem:[#allocation2 + $0x28] sm:$0xff] %v284
  %301 = vst [vmem:[#allocation2 + $0x30] sm:$0xff] %v285
  %302 = vst [vmem:[#allocation2 + $0x38] sm:$0xff] %v286
  %303 = vst [vmem:[#allocation2 + $0x40] sm:$0xff] %v287
  %304 = vst [vmem:[#allocation2 + $0x48] sm:$0xff] %v288
  %305 = vst [vmem:[#allocation2 + $0x50] sm:$0xff] %v289
  %306 = vst [vmem:[#allocation2 + $0x58] sm:$0xff] %v290
  %307 = vst [vmem:[#allocation2 + $0x60] sm:$0xff] %v291
  %308 = vst [vmem:[#allocation2 + $0x68] sm:$0xff] %v292
  %309 = vst [vmem:[#allocation2 + $0x70] sm:$0xff] %v293
  %310 = vst [vmem:[#allocation2 + $0x78] sm:$0xff] %v294
  // Predicated region
  $region22: #{_lambda_.13} parent=0 // pred_check
    %p311 = pneg %p18
  $region23: #{_lambda_.13} parent=0 // pred_check_branch
    %313 = sbr.rel (%p311) target = $region25
  $region24: #{_lambda_.13} parent=0 // pred_region
    %v314 = vld [vmem:[#allocation2] sm:$0xff]
    %v315 = vld [vmem:[#allocation2 + $0x8] sm:$0xff]
    %v316 = vld [vmem:[#allocation2 + $0x10] sm:$0xff]
    %v317 = vld [vmem:[#allocation2 + $0x18] sm:$0xff]
    %v318 = vld [vmem:[#allocation2 + $0x20] sm:$0xff]
    %v319 = vld [vmem:[#allocation2 + $0x28] sm:$0xff]
    %v320 = vld [vmem:[#allocation2 + $0x30] sm:$0xff]
    %v321 = vld [vmem:[#allocation2 + $0x38] sm:$0xff]
    %v322 = vld [vmem:[#allocation2 + $0x40] sm:$0xff]
    %v323 = vld [vmem:[#allocation2 + $0x48] sm:$0xff]
    %v324 = vld [vmem:[#allocation2 + $0x50] sm:$0xff]
    %v325 = vld [vmem:[#allocation2 + $0x58] sm:$0xff]
    %v326 = vld [vmem:[#allocation2 + $0x60] sm:$0xff]
    %v327 = vld [vmem:[#allocation2 + $0x68] sm:$0xff]
    %v328 = vld [vmem:[#allocation2 + $0x70] sm:$0xff]
    %v329 = vld [vmem:[#allocation2 + $0x78] sm:$0xff]
    %v330 = vld [vmem:[%s2] sm:$0x1]
    %v332 = vlaneseq
    %v333 = vshrl.u32 %v332, 7
    %v334 = vsub.s32 0, %v333
    %v335 = vrot.slane %v330, %v334
    %v337 = vmul.f32 %v314, %v335
    %v338 = vmul.f32 %v315, %v335
    %v339 = vmul.f32 %v316, %v335
    %v340 = vmul.f32 %v317, %v335
    %v341 = vmul.f32 %v318, %v335
    %v342 = vmul.f32 %v319, %v335
    %v343 = vmul.f32 %v320, %v335
    %v344 = vmul.f32 %v321, %v335
    %v345 = vmul.f32 %v322, %v335
    %v346 = vmul.f32 %v323, %v335
    %v347 = vmul.f32 %v324, %v335
    %v348 = vmul.f32 %v325, %v335
    %v349 = vmul.f32 %v326, %v335
    %v350 = vmul.f32 %v327, %v335
    %v351 = vmul.f32 %v328, %v335
    %v352 = vmul.f32 %v329, %v335
    %v353 = vld [vmem:[%s3] sm:$0x1]
    %v355 = vlaneseq
    %v356 = vshrl.u32 %v355, 7
    %v357 = vsub.s32 0, %v356
    %v358 = vrot.slane %v353, %v357
    %v360 = vadd.f32 %v337, %v358
    %v361 = vadd.f32 %v338, %v358
    %v362 = vadd.f32 %v339, %v358
    %v363 = vadd.f32 %v340, %v358
    %v364 = vadd.f32 %v341, %v358
    %v365 = vadd.f32 %v342, %v358
    %v366 = vadd.f32 %v343, %v358
    %v367 = vadd.f32 %v344, %v358
    %v368 = vadd.f32 %v345, %v358
    %v369 = vadd.f32 %v346, %v358
    %v370 = vadd.f32 %v347, %v358
    %v371 = vadd.f32 %v348, %v358
    %v372 = vadd.f32 %v349, %v358
    %v373 = vadd.f32 %v350, %v358
    %v374 = vadd.f32 %v351, %v358
    %v375 = vadd.f32 %v352, %v358
    %v376 = vmax.f32 %v360, 0.0
    %v377 = vmax.f32 %v361, 0.0
    %v378 = vmax.f32 %v362, 0.0
    %v379 = vmax.f32 %v363, 0.0
    %v380 = vmax.f32 %v364, 0.0
    %v381 = vmax.f32 %v365, 0.0
    %v382 = vmax.f32 %v366, 0.0
    %v383 = vmax.f32 %v367, 0.0
    %v384 = vmax.f32 %v368, 0.0
    %v385 = vmax.f32 %v369, 0.0
    %v386 = vmax.f32 %v370, 0.0
    %v387 = vmax.f32 %v371, 0.0
    %v388 = vmax.f32 %v372, 0.0
    %v389 = vmax.f32 %v373, 0.0
    %v390 = vmax.f32 %v374, 0.0
    %v391 = vmax.f32 %v375, 0.0
    %392 = vst [vmem:[%s4] sm:$0xff] %v376
    %393 = vst [vmem:[%s4 + $0x8] sm:$0xff] %v377
    %394 = vst [vmem:[%s4 + $0x10] sm:$0xff] %v378
    %395 = vst [vmem:[%s4 + $0x18] sm:$0xff] %v379
    %396 = vst [vmem:[%s4 + $0x20] sm:$0xff] %v380
    %397 = vst [vmem:[%s4 + $0x28] sm:$0xff] %v381
    %398 = vst [vmem:[%s4 + $0x30] sm:$0xff] %v382
    %399 = vst [vmem:[%s4 + $0x38] sm:$0xff] %v383
    %400 = vst [vmem:[%s4 + $0x40] sm:$0xff] %v384
    %401 = vst [vmem:[%s4 + $0x48] sm:$0xff] %v385
    %402 = vst [vmem:[%s4 + $0x50] sm:$0xff] %v386
    %403 = vst [vmem:[%s4 + $0x58] sm:$0xff] %v387
    %404 = vst [vmem:[%s4 + $0x60] sm:$0xff] %v388
    %405 = vst [vmem:[%s4 + $0x68] sm:$0xff] %v389
    %406 = vst [vmem:[%s4 + $0x70] sm:$0xff] %v390
    %407 = vst [vmem:[%s4 + $0x78] sm:$0xff] %v391
  $region25: #{_lambda_.13} parent=0 // pred_fallthru
    _
  // Predicated region
  $region26: #{_lambda_.13} parent=0 // pred_check
    _
  $region27: #{_lambda_.13} parent=0 // pred_check_branch
    %409 = sbr.rel (0) target = $region29
  $region28: #{_lambda_.13} parent=0 // pred_region
    _
  $region29: #{_lambda_.13} parent=0 // pred_fallthru
    _
  // Predicated region
  $region30: #{_lambda_.13} parent=0 // pred_check
    _
  $region31: #{_lambda_.13} parent=0 // pred_check_branch
    %411 = sbr.rel (0) target = $region33
  $region32: #{_lambda_.13} parent=0 // pred_region
    _
  $region33: #{_lambda_.13} parent=0 // pred_fallthru
    _

// kernel: _lambda_.16
$region0: #{_lambda_.16}
  #allocation0 [shape = 'u32[]', space=smem, size = 0x4, offset = 0x4, fixed_abs, tag = 'smem constant byte address 0x4 - core index']
  #allocation1 [shape = 'u32[144,128]{1,0:T(1,128)}', space=vmem, size = 0x12000, scoped, tag = 'internal scratch']
  %s0 = inlined_call_operand.vmem [shape: f32[32,96], index: 0, kind: input, shape index: {}]
  %s1 = inlined_call_operand.vmem [shape: f32[1,96], index: 1, kind: input, shape index: {}]
  %s2 = inlined_call_operand.vmem [shape: f32[1,96], index: 2, kind: input, shape index: {}]
  %s3 = inlined_call_operand.vmem [shape: f32[32,96], index: 3, kind: output, shape index: {}]
  %s4 = sld [smem:[#allocation0]]
  $region22: #{_lambda_.16} parent=0
    _
  %s6 = ssub.s32 1, %s4
  %s7 = scalar_select 0, %s6, %s4
  // Predicated region
  $region2: #{_lambda_.16} parent=0 // pred_check
    _
  $region3: #{_lambda_.16} parent=0 // pred_check_branch
    %9 = sbr.rel (0) target = $region5
  $region4: #{_lambda_.16} parent=0 // pred_region
    _
  $region5: #{_lambda_.16} parent=0 // pred_fallthru
    _
  // Predicated region
  $region6: #{_lambda_.16} parent=0 // pred_check
    _
  $region7: #{_lambda_.16} parent=0 // pred_check_branch
    %11 = sbr.rel (0) target = $region9
  $region8: #{_lambda_.16} parent=0 // pred_region
    _
  $region9: #{_lambda_.16} parent=0 // pred_fallthru
    _
  // Predicated region
  $region10: #{_lambda_.16} parent=0 // pred_check
    _
  $region11: #{_lambda_.16} parent=0 // pred_check_branch
    %13 = sbr.rel (0) target = $region13
  $region12: #{_lambda_.16} parent=0 // pred_region
    _
  $region13: #{_lambda_.16} parent=0 // pred_fallthru
    _
  %v14 = vld [vmem:[%s0] sm:$0xff]
  %v15 = vld [vmem:[%s0 + $0x8] sm:$0xff]
  %v16 = vld [vmem:[%s0 + $0x10] sm:$0xff]
  %v17 = vld [vmem:[%s0 + $0x18] sm:$0xff]
  %vm18 = vcmask 785408
  %v19 = vsel %vm18, %v14, 0.0
  %20 = vadd.xlane.f32.xlu0 %v19
  %v21 = vpop.xlane.xlu0 %20
  %v22 = vsel %vm18, %v15, 0.0
  %23 = vadd.xlane.f32.xlu0 %v22
  %v24 = vpop.xlane.xlu0 %23
  %v25 = vsel %vm18, %v16, 0.0
  %26 = vadd.xlane.f32.xlu0 %v25
  %v27 = vpop.xlane.xlu0 %26
  %v28 = vsel %vm18, %v17, 0.0
  %29 = vadd.xlane.f32.xlu0 %v28
  %v30 = vpop.xlane.xlu0 %29
  %v31 = vrcp.pop 96.0
  %v32 = vmul.f32 %v21, %v31
  %v33 = vmul.f32 %v24, %v31
  %v34 = vmul.f32 %v27, %v31
  %v35 = vmul.f32 %v30, %v31
  %v36 = vsub.f32 %v14, %v32
  %v37 = vsub.f32 %v15, %v33
  %v38 = vsub.f32 %v16, %v34
  %v39 = vsub.f32 %v17, %v35
  %v40 = vmul.f32 %v36, %v36
  %v41 = vmul.f32 %v37, %v37
  %v42 = vmul.f32 %v38, %v38
  %v43 = vmul.f32 %v39, %v39
  %v44 = vsel %vm18, %v40, 0.0
  %45 = vadd.xlane.f32.xlu0 %v44
  %v46 = vpop.xlane.xlu0 %45
  %v47 = vsel %vm18, %v41, 0.0
  %48 = vadd.xlane.f32.xlu0 %v47
  %v49 = vpop.xlane.xlu0 %48
  %v50 = vsel %vm18, %v42, 0.0
  %51 = vadd.xlane.f32.xlu0 %v50
  %v52 = vpop.xlane.xlu0 %51
  %v53 = vsel %vm18, %v43, 0.0
  %54 = vadd.xlane.f32.xlu0 %v53
  %v55 = vpop.xlane.xlu0 %54
  %v56 = vmul.f32 %v46, %v31
  %v57 = vmul.f32 %v49, %v31
  %v58 = vmul.f32 %v52, %v31
  %v59 = vmul.f32 %v55, %v31
  %v60 = vadd.f32 %v56, 1e-05
  %v61 = vadd.f32 %v57, 1e-05
  %v62 = vadd.f32 %v58, 1e-05
  %v63 = vadd.f32 %v59, 1e-05
  %v64 = vrsqrt.pop %v60
  %v65 = vrsqrt.pop %v61
  %v66 = vrsqrt.pop %v62
  %v67 = vrsqrt.pop %v63
  %v68 = vmul.f32 %v36, %v64
  %v69 = vmul.f32 %v37, %v65
  %v70 = vmul.f32 %v38, %v66
  %v71 = vmul.f32 %v39, %v67
  %v72 = vld [vmem:[%s1] sm:$0x1]
  %v74 = vlaneseq
  %v75 = vshrl.u32 %v74, 7
  %v76 = vsub.s32 0, %v75
  %v77 = vrot.slane %v72, %v76
  %v79 = vmul.f32 %v68, %v77
  %v80 = vmul.f32 %v69, %v77
  %v81 = vmul.f32 %v70, %v77
  %v82 = vmul.f32 %v71, %v77
  %v83 = vld [vmem:[%s2] sm:$0x1]
  %v85 = vlaneseq
  %v86 = vshrl.u32 %v85, 7
  %v87 = vsub.s32 0, %v86
  %v88 = vrot.slane %v83, %v87
  %v90 = vadd.f32 %v79, %v88
  %v91 = vadd.f32 %v80, %v88
  %v92 = vadd.f32 %v81, %v88
  %v93 = vadd.f32 %v82, %v88
  %94 = vst.msk [vmem:[%s3] sm:$0xff] %vm18, %v90
  %95 = vst.msk [vmem:[%s3 + $0x8] sm:$0xff] %vm18, %v91
  %96 = vst.msk [vmem:[%s3 + $0x10] sm:$0xff] %vm18, %v92
  %97 = vst.msk [vmem:[%s3 + $0x18] sm:$0xff] %vm18, %v93
  // Predicated region
  $region14: #{_lambda_.16} parent=0 // pred_check
    _
  $region15: #{_lambda_.16} parent=0 // pred_check_branch
    %99 = sbr.rel (0) target = $region17
  $region16: #{_lambda_.16} parent=0 // pred_region
    _
  $region17: #{_lambda_.16} parent=0 // pred_fallthru
    _
  // Predicated region
  $region18: #{_lambda_.16} parent=0 // pred_check
    _
  $region19: #{_lambda_.16} parent=0 // pred_check_branch
    %101 = sbr.rel (0) target = $region21
  $region20: #{_lambda_.16} parent=0 // pred_region
    _
  $region21: #{_lambda_.16} parent=0 // pred_fallthru
    _

// kernel: _lambda_.15
$region0: #{_lambda_.15}
  #allocation0 [shape = 'u32[]', space=smem, size = 0x4, offset = 0x4, fixed_abs, tag = 'smem constant byte address 0x4 - core index']
  #allocation1 [shape = 'u32[144,128]{1,0:T(1,128)}', space=vmem, size = 0x12000, scoped, tag = 'internal scratch']
  #allocation2 [shape = 'f32[32,128]{1,0:T(8,128)}', space=vmem, size = 0x4000, scoped, tag = 'scratch operand']
  %s0 = inlined_call_operand.vmem [shape: bf16[32,128], index: 0, kind: input, shape index: {}]
  %s1 = inlined_call_operand.vmem [shape: bf16[128,128], index: 1, kind: input, shape index: {}]
  %s2 = inlined_call_operand.vmem [shape: f32[1,128], index: 2, kind: input, shape index: {}]
  %s3 = inlined_call_operand.vmem [shape: f32[1,128], index: 3, kind: input, shape index: {}]
  %s4 = inlined_call_operand.vmem [shape: f32[32,128], index: 4, kind: output, shape index: {}]
  %s5 = sld [smem:[#allocation0]]
  $region34: #{_lambda_.15} parent=0
    _
  %s7 = ssub.s32 1, %s5
  %s8 = scalar_select 0, %s7, %s5
  // Predicated region
  $region2: #{_lambda_.15} parent=0 // pred_check
    _
  $region3: #{_lambda_.15} parent=0 // pred_check_branch
    %10 = sbr.rel (0) target = $region5
  $region4: #{_lambda_.15} parent=0 // pred_region
    _
  $region5: #{_lambda_.15} parent=0 // pred_fallthru
    _
  // Predicated region
  $region6: #{_lambda_.15} parent=0 // pred_check
    _
  $region7: #{_lambda_.15} parent=0 // pred_check_branch
    %12 = sbr.rel (0) target = $region9
  $region8: #{_lambda_.15} parent=0 // pred_region
    _
  $region9: #{_lambda_.15} parent=0 // pred_fallthru
    _
  // Predicated region
  $region10: #{_lambda_.15} parent=0 // pred_check
    _
  $region11: #{_lambda_.15} parent=0 // pred_check_branch
    %14 = sbr.rel (0) target = $region13
  $region12: #{_lambda_.15} parent=0 // pred_region
    _
  $region13: #{_lambda_.15} parent=0 // pred_fallthru
    _
  // Predicated region
  $region14: #{_lambda_.15} parent=0 // pred_check
    _
  $region15: #{_lambda_.15} parent=0 // pred_check_branch
    %16 = sbr.rel (0) target = $region17
  $region16: #{_lambda_.15} parent=0 // pred_region
    _
  $region17: #{_lambda_.15} parent=0 // pred_fallthru
    _
  %p18 = scmp.eq.s32.totalorder 0, 0
  // Predicated region
  $region18: #{_lambda_.15} parent=0 // pred_check
    %p19 = pneg %p18
  $region19: #{_lambda_.15} parent=0 // pred_check_branch
    %21 = sbr.rel (%p19) target = $region21
  $region20: #{_lambda_.15} parent=0 // pred_region
    %22 = vst [vmem:[#allocation2] sm:$0xff] 0.0
    %23 = vst [vmem:[#allocation2 + $0x8] sm:$0xff] 0.0
    %24 = vst [vmem:[#allocation2 + $0x10] sm:$0xff] 0.0
    %25 = vst [vmem:[#allocation2 + $0x18] sm:$0xff] 0.0
  $region21: #{_lambda_.15} parent=0 // pred_fallthru
    _
  %v26 = vld [vmem:[#allocation2] sm:$0xff]
  %v27 = vld [vmem:[#allocation2 + $0x8] sm:$0xff]
  %v28 = vld [vmem:[#allocation2 + $0x10] sm:$0xff]
  %v29 = vld [vmem:[#allocation2 + $0x18] sm:$0xff]
  %v30 = vld [vmem:[%s0] sm:$0xf]
  %v31 = vld [vmem:[%s0 + $0x4] sm:$0xf]
  %v32 = vld [vmem:[%s0 + $0x8] sm:$0xf]
  %v33 = vld [vmem:[%s0 + $0xc] sm:$0xf]
  %v34 = vld [vmem:[%s1] sm:$0xf]
  %v35 = vld [vmem:[%s1 + $0x4] sm:$0xf]
  %v36 = vld [vmem:[%s1 + $0x8] sm:$0xf]
  %v37 = vld [vmem:[%s1 + $0xc] sm:$0xf]
  %v38 = vld [vmem:[%s1 + $0x10] sm:$0xf]
  %v39 = vld [vmem:[%s1 + $0x14] sm:$0xf]
  %v40 = vld [vmem:[%s1 + $0x18] sm:$0xf]
  %v41 = vld [vmem:[%s1 + $0x1c] sm:$0xf]
  %v42 = vld [vmem:[%s1 + $0x20] sm:$0xf]
  %v43 = vld [vmem:[%s1 + $0x24] sm:$0xf]
  %v44 = vld [vmem:[%s1 + $0x28] sm:$0xf]
  %v45 = vld [vmem:[%s1 + $0x2c] sm:$0xf]
  %v46 = vld [vmem:[%s1 + $0x30] sm:$0xf]
  %v47 = vld [vmem:[%s1 + $0x34] sm:$0xf]
  %v48 = vld [vmem:[%s1 + $0x38] sm:$0xf]
  %v49 = vld [vmem:[%s1 + $0x3c] sm:$0xf]
  %v54 = vunpack.c.l.b16 %v30
  %v55 = vunpack.c.l.b16 %v31
  %v56 = vunpack.c.l.b16 %v32
  %v57 = vunpack.c.l.b16 %v33
  %v58 = vpack.c.b16 %v55, %v54
  %v59 = vpack.c.b16 %v57, %v56
  %v78 = vunpack.c.l.b16 %v34
  %v79 = vunpack.c.l.b16 %v35
  %v80 = vunpack.c.l.b16 %v36
  %v81 = vunpack.c.l.b16 %v37
  %v82 = vunpack.c.l.b16 %v38
  %v83 = vunpack.c.l.b16 %v39
  %v84 = vunpack.c.l.b16 %v40
  %v85 = vunpack.c.l.b16 %v41
  %v86 = vunpack.c.l.b16 %v42
  %v87 = vunpack.c.l.b16 %v43
  %v88 = vunpack.c.l.b16 %v44
  %v89 = vunpack.c.l.b16 %v45
  %v90 = vunpack.c.l.b16 %v46
  %v91 = vunpack.c.l.b16 %v47
  %v92 = vunpack.c.l.b16 %v48
  %v93 = vunpack.c.l.b16 %v49
  %v94 = vpack.c.b16 %v79, %v78
  %v95 = vpack.c.b16 %v81, %v80
  %v96 = vpack.c.b16 %v83, %v82
  %v97 = vpack.c.b16 %v85, %v84
  %v98 = vpack.c.b16 %v87, %v86
  %v99 = vpack.c.b16 %v89, %v88
  %v100 = vpack.c.b16 %v91, %v90
  %v101 = vpack.c.b16 %v93, %v92
  %110 = vmatprep.subr.bf16.mxu0 0
  %111 = vmatpush1.bf16.msra.mxu0 %v101
  %112 = vmatprep.subr.bf16.mxu0 0
  %113 = vmatpush1.bf16.msra.mxu0 %v100
  %114 = vmatprep.subr.bf16.mxu0 0
  %115 = vmatpush1.bf16.msra.mxu0 %v99
  %116 = vmatprep.subr.bf16.mxu0 0
  %117 = vmatpush1.bf16.msra.mxu0 %v98
  %118 = vmatprep.subr.bf16.mxu0 0
  %119 = vmatpush1.bf16.msra.mxu0 %v97
  %120 = vmatprep.subr.bf16.mxu0 0
  %121 = vmatpush1.bf16.msra.mxu0 %v96
  %122 = vmatprep.subr.bf16.mxu0 0
  %123 = vmatpush1.bf16.msra.mxu0 %v95
  %124 = vmatprep.subr.bf16.mxu0 0
  %125 = vmatpush1.bf16.msra.mxu0 %v94
  %126 = vmatprep.subr.bf16.mxu0 0
  %127 = vmatpush2.bf16.msra.mxu0 0
  %128 = vmatprep.subr.bf16.mxu0 0
  %129 = vmatpush2.bf16.msra.mxu0 0
  %130 = vmatprep.subr.bf16.mxu0 0
  %131 = vmatpush2.bf16.msra.mxu0 0
  %132 = vmatprep.subr.bf16.mxu0 0
  %133 = vmatpush2.bf16.msra.mxu0 0
  %134 = vmatprep.subr.bf16.mxu0 0
  %135 = vmatpush2.bf16.msra.mxu0 0
  %136 = vmatprep.subr.bf16.mxu0 0
  %137 = vmatpush2.bf16.msra.mxu0 0
  %138 = vmatprep.subr.bf16.mxu0 0
  %139 = vmatpush2.bf16.msra.mxu0 0
  %140 = vmatprep.subr.bf16.mxu0 0
  %141 = vmatpush2.bf16.msra.mxu0 0
  %142 = vmatprep.mubr.bf16.mxu0 0
  %143 = vmatmul.mubr.bf16.gmra.mxu0 %v58
  %v144 = vpop.f32.mrf.mxu0
  %v145 = vadd.f32 0.0, %v144
  %v146 = vpop.f32.mrf.mxu0
  %v147 = vpop.f32.mrf.mxu0
  %v148 = vadd.f32 0.0, %v147
  %v149 = vpop.f32.mrf.mxu0
  %150 = vmatprep.mubr.bf16.mxu0 0
  %151 = vmatmul.mubr.bf16.gmra.mxu0 %v59
  %v152 = vpop.f32.mrf.mxu0
  %v153 = vadd.f32 0.0, %v152
  %v154 = vpop.f32.mrf.mxu0
  %v155 = vpop.f32.mrf.mxu0
  %v156 = vadd.f32 0.0, %v155
  %v157 = vpop.f32.mrf.mxu0
  %158 = vdwg.mxu0
  %v159 = vadd.f32 %v26, %v145
  %v160 = vadd.f32 %v27, %v148
  %v161 = vadd.f32 %v28, %v153
  %v162 = vadd.f32 %v29, %v156
  %163 = vst [vmem:[#allocation2] sm:$0xff] %v159
  %164 = vst [vmem:[#allocation2 + $0x8] sm:$0xff] %v160
  %165 = vst [vmem:[#allocation2 + $0x10] sm:$0xff] %v161
  %166 = vst [vmem:[#allocation2 + $0x18] sm:$0xff] %v162
  // Predicated region
  $region22: #{_lambda_.15} parent=0 // pred_check
    %p167 = pneg %p18
  $region23: #{_lambda_.15} parent=0 // pred_check_branch
    %169 = sbr.rel (%p167) target = $region25
  $region24: #{_lambda_.15} parent=0 // pred_region
    %v170 = vld [vmem:[#allocation2] sm:$0xff]
    %v171 = vld [vmem:[#allocation2 + $0x8] sm:$0xff]
    %v172 = vld [vmem:[#allocation2 + $0x10] sm:$0xff]
    %v173 = vld [vmem:[#allocation2 + $0x18] sm:$0xff]
    %v174 = vld [vmem:[%s2] sm:$0x1]
    %v176 = vlaneseq
    %v177 = vshrl.u32 %v176, 7
    %v178 = vsub.s32 0, %v177
    %v179 = vrot.slane %v174, %v178
    %v181 = vmul.f32 %v170, %v179
    %v182 = vmul.f32 %v171, %v179
    %v183 = vmul.f32 %v172, %v179
    %v184 = vmul.f32 %v173, %v179
    %v185 = vld [vmem:[%s3] sm:$0x1]
    %v187 = vlaneseq
    %v188 = vshrl.u32 %v187, 7
    %v189 = vsub.s32 0, %v188
    %v190 = vrot.slane %v185, %v189
    %v192 = vadd.f32 %v181, %v190
    %v193 = vadd.f32 %v182, %v190
    %v194 = vadd.f32 %v183, %v190
    %v195 = vadd.f32 %v184, %v190
    %196 = vst [vmem:[%s4] sm:$0xff] %v192
    %197 = vst [vmem:[%s4 + $0x8] sm:$0xff] %v193
    %198 = vst [vmem:[%s4 + $0x10] sm:$0xff] %v194
    %199 = vst [vmem:[%s4 + $0x18] sm:$0xff] %v195
  $region25: #{_lambda_.15} parent=0 // pred_fallthru
    _
  // Predicated region
  $region26: #{_lambda_.15} parent=0 // pred_check
    _
  $region27: #{_lambda_.15} parent=0 // pred_check_branch
    %201 = sbr.rel (0) target = $region29
  $region28: #{_lambda_.15} parent=0 // pred_region
    _
  $region29: #{_lambda_.15} parent=0 // pred_fallthru
    _
  // Predicated region
  $region30: #{_lambda_.15} parent=0 // pred_check
    _
  $region31: #{_lambda_.15} parent=0 // pred_check_branch
    %203 = sbr.rel (0) target = $region33
  $region32: #{_lambda_.15} parent=0 // pred_region
    _
  $region33: #{_lambda_.15} parent=0 // pred_fallthru
    _

// kernel: _lambda_.18
$region0: #{_lambda_.18}
  #allocation0 [shape = 'u32[]', space=smem, size = 0x4, offset = 0x4, fixed_abs, tag = 'smem constant byte address 0x4 - core index']
  #allocation1 [shape = 'u32[144,128]{1,0:T(1,128)}', space=vmem, size = 0x12000, scoped, tag = 'internal scratch']
  #allocation2 [shape = 'f32[32,384]{1,0:T(8,128)}', space=vmem, size = 0xc000, scoped, tag = 'scratch operand']
  %s0 = inlined_call_operand.vmem [shape: bf16[32,128], index: 0, kind: input, shape index: {}]
  %s1 = inlined_call_operand.vmem [shape: bf16[128,384], index: 1, kind: input, shape index: {}]
  %s2 = inlined_call_operand.vmem [shape: f32[1,384], index: 2, kind: input, shape index: {}]
  %s3 = inlined_call_operand.vmem [shape: f32[1,384], index: 3, kind: input, shape index: {}]
  %s4 = inlined_call_operand.vmem [shape: f32[32,384], index: 4, kind: output, shape index: {}]
  %s5 = sld [smem:[#allocation0]]
  $region34: #{_lambda_.18} parent=0
    _
  %s7 = ssub.s32 1, %s5
  %s8 = scalar_select 0, %s7, %s5
  // Predicated region
  $region2: #{_lambda_.18} parent=0 // pred_check
    _
  $region3: #{_lambda_.18} parent=0 // pred_check_branch
    %10 = sbr.rel (0) target = $region5
  $region4: #{_lambda_.18} parent=0 // pred_region
    _
  $region5: #{_lambda_.18} parent=0 // pred_fallthru
    _
  // Predicated region
  $region6: #{_lambda_.18} parent=0 // pred_check
    _
  $region7: #{_lambda_.18} parent=0 // pred_check_branch
    %12 = sbr.rel (0) target = $region9
  $region8: #{_lambda_.18} parent=0 // pred_region
    _
  $region9: #{_lambda_.18} parent=0 // pred_fallthru
    _
  // Predicated region
  $region10: #{_lambda_.18} parent=0 // pred_check
    _
  $region11: #{_lambda_.18} parent=0 // pred_check_branch
    %14 = sbr.rel (0) target = $region13
  $region12: #{_lambda_.18} parent=0 // pred_region
    _
  $region13: #{_lambda_.18} parent=0 // pred_fallthru
    _
  // Predicated region
  $region14: #{_lambda_.18} parent=0 // pred_check
    _
  $region15: #{_lambda_.18} parent=0 // pred_check_branch
    %16 = sbr.rel (0) target = $region17
  $region16: #{_lambda_.18} parent=0 // pred_region
    _
  $region17: #{_lambda_.18} parent=0 // pred_fallthru
    _
  %p18 = scmp.eq.s32.totalorder 0, 0
  // Predicated region
  $region18: #{_lambda_.18} parent=0 // pred_check
    %p19 = pneg %p18
  $region19: #{_lambda_.18} parent=0 // pred_check_branch
    %21 = sbr.rel (%p19) target = $region21
  $region20: #{_lambda_.18} parent=0 // pred_region
    %22 = vst [vmem:[#allocation2] sm:$0xff] 0.0
    %23 = vst [vmem:[#allocation2 + $0x8] sm:$0xff] 0.0
    %24 = vst [vmem:[#allocation2 + $0x10] sm:$0xff] 0.0
    %25 = vst [vmem:[#allocation2 + $0x18] sm:$0xff] 0.0
    %26 = vst [vmem:[#allocation2 + $0x20] sm:$0xff] 0.0
    %27 = vst [vmem:[#allocation2 + $0x28] sm:$0xff] 0.0
    %28 = vst [vmem:[#allocation2 + $0x30] sm:$0xff] 0.0
    %29 = vst [vmem:[#allocation2 + $0x38] sm:$0xff] 0.0
    %30 = vst [vmem:[#allocation2 + $0x40] sm:$0xff] 0.0
    %31 = vst [vmem:[#allocation2 + $0x48] sm:$0xff] 0.0
    %32 = vst [vmem:[#allocation2 + $0x50] sm:$0xff] 0.0
    %33 = vst [vmem:[#allocation2 + $0x58] sm:$0xff] 0.0
  $region21: #{_lambda_.18} parent=0 // pred_fallthru
    _
  %v34 = vld [vmem:[#allocation2] sm:$0xff]
  %v35 = vld [vmem:[#allocation2 + $0x8] sm:$0xff]
  %v36 = vld [vmem:[#allocation2 + $0x10] sm:$0xff]
  %v37 = vld [vmem:[#allocation2 + $0x18] sm:$0xff]
  %v38 = vld [vmem:[#allocation2 + $0x20] sm:$0xff]
  %v39 = vld [vmem:[#allocation2 + $0x28] sm:$0xff]
  %v40 = vld [vmem:[#allocation2 + $0x30] sm:$0xff]
  %v41 = vld [vmem:[#allocation2 + $0x38] sm:$0xff]
  %v42 = vld [vmem:[#allocation2 + $0x40] sm:$0xff]
  %v43 = vld [vmem:[#allocation2 + $0x48] sm:$0xff]
  %v44 = vld [vmem:[#allocation2 + $0x50] sm:$0xff]
  %v45 = vld [vmem:[#allocation2 + $0x58] sm:$0xff]
  %v46 = vld [vmem:[%s0] sm:$0xf]
  %v47 = vld [vmem:[%s0 + $0x4] sm:$0xf]
  %v48 = vld [vmem:[%s0 + $0x8] sm:$0xf]
  %v49 = vld [vmem:[%s0 + $0xc] sm:$0xf]
  %v50 = vld [vmem:[%s1] sm:$0xff]
  %v51 = vld [vmem:[%s1 + $0x8] sm:$0xf]
  %v52 = vld [vmem:[%s1 + $0xc] sm:$0xff]
  %v53 = vld [vmem:[%s1 + $0x14] sm:$0xf]
  %v54 = vld [vmem:[%s1 + $0x18] sm:$0xff]
  %v55 = vld [vmem:[%s1 + $0x20] sm:$0xf]
  %v56 = vld [vmem:[%s1 + $0x24] sm:$0xff]
  %v57 = vld [vmem:[%s1 + $0x2c] sm:$0xf]
  %v58 = vld [vmem:[%s1 + $0x30] sm:$0xff]
  %v59 = vld [vmem:[%s1 + $0x38] sm:$0xf]
  %v60 = vld [vmem:[%s1 + $0x3c] sm:$0xff]
  %v61 = vld [vmem:[%s1 + $0x44] sm:$0xf]
  %v62 = vld [vmem:[%s1 + $0x48] sm:$0xff]
  %v63 = vld [vmem:[%s1 + $0x50] sm:$0xf]
  %v64 = vld [vmem:[%s1 + $0x54] sm:$0xff]
  %v65 = vld [vmem:[%s1 + $0x5c] sm:$0xf]
  %v66 = vld [vmem:[%s1 + $0x60] sm:$0xff]
  %v67 = vld [vmem:[%s1 + $0x68] sm:$0xf]
  %v68 = vld [vmem:[%s1 + $0x6c] sm:$0xff]
  %v69 = vld [vmem:[%s1 + $0x74] sm:$0xf]
  %v70 = vld [vmem:[%s1 + $0x78] sm:$0xff]
  %v71 = vld [vmem:[%s1 + $0x80] sm:$0xf]
  %v72 = vld [vmem:[%s1 + $0x84] sm:$0xff]
  %v73 = vld [vmem:[%s1 + $0x8c] sm:$0xf]
  %v74 = vld [vmem:[%s1 + $0x90] sm:$0xff]
  %v75 = vld [vmem:[%s1 + $0x98] sm:$0xf]
  %v76 = vld [vmem:[%s1 + $0x9c] sm:$0xff]
  %v77 = vld [vmem:[%s1 + $0xa4] sm:$0xf]
  %v78 = vld [vmem:[%s1 + $0xa8] sm:$0xff]
  %v79 = vld [vmem:[%s1 + $0xb0] sm:$0xf]
  %v80 = vld [vmem:[%s1 + $0xb4] sm:$0xff]
  %v81 = vld [vmem:[%s1 + $0xbc] sm:$0xf]
  %v86 = vunpack.c.l.b16 %v46
  %v87 = vunpack.c.l.b16 %v47
  %v88 = vunpack.c.l.b16 %v48
  %v89 = vunpack.c.l.b16 %v49
  %v90 = vpack.c.b16 %v87, %v86
  %v91 = vpack.c.b16 %v89, %v88
  %v126 = vunpack.c.l.b16 %v50
  %v127 = vunpack.c.h.b16 %v50
  %v128 = vunpack.c.l.b16 %v51
  %v129 = vunpack.c.l.b16 %v52
  %v130 = vunpack.c.h.b16 %v52
  %v131 = vunpack.c.l.b16 %v53
  %v132 = vunpack.c.l.b16 %v54
  %v133 = vunpack.c.h.b16 %v54
  %v134 = vunpack.c.l.b16 %v55
  %v135 = vunpack.c.l.b16 %v56
  %v136 = vunpack.c.h.b16 %v56
  %v137 = vunpack.c.l.b16 %v57
  %v138 = vunpack.c.l.b16 %v58
  %v139 = vunpack.c.h.b16 %v58
  %v140 = vunpack.c.l.b16 %v59
  %v141 = vunpack.c.l.b16 %v60
  %v142 = vunpack.c.h.b16 %v60
  %v143 = vunpack.c.l.b16 %v61
  %v144 = vunpack.c.l.b16 %v62
  %v145 = vunpack.c.h.b16 %v62
  %v146 = vunpack.c.l.b16 %v63
  %v147 = vunpack.c.l.b16 %v64
  %v148 = vunpack.c.h.b16 %v64
  %v149 = vunpack.c.l.b16 %v65
  %v150 = vunpack.c.l.b16 %v66
  %v151 = vunpack.c.h.b16 %v66
  %v152 = vunpack.c.l.b16 %v67
  %v153 = vunpack.c.l.b16 %v68
  %v154 = vunpack.c.h.b16 %v68
  %v155 = vunpack.c.l.b16 %v69
  %v156 = vunpack.c.l.b16 %v70
  %v157 = vunpack.c.h.b16 %v70
  %v158 = vunpack.c.l.b16 %v71
  %v159 = vunpack.c.l.b16 %v72
  %v160 = vunpack.c.h.b16 %v72
  %v161 = vunpack.c.l.b16 %v73
  %v162 = vunpack.c.l.b16 %v74
  %v163 = vunpack.c.h.b16 %v74
  %v164 = vunpack.c.l.b16 %v75
  %v165 = vunpack.c.l.b16 %v76
  %v166 = vunpack.c.h.b16 %v76
  %v167 = vunpack.c.l.b16 %v77
  %v168 = vunpack.c.l.b16 %v78
  %v169 = vunpack.c.h.b16 %v78
  %v170 = vunpack.c.l.b16 %v79
  %v171 = vunpack.c.l.b16 %v80
  %v172 = vunpack.c.h.b16 %v80
  %v173 = vunpack.c.l.b16 %v81
  %v174 = vpack.c.b16 %v129, %v126
  %v175 = vpack.c.b16 %v130, %v127
  %v176 = vpack.c.b16 %v131, %v128
  %v177 = vpack.c.b16 %v135, %v132
  %v178 = vpack.c.b16 %v136, %v133
  %v179 = vpack.c.b16 %v137, %v134
  %v180 = vpack.c.b16 %v141, %v138
  %v181 = vpack.c.b16 %v142, %v139
  %v182 = vpack.c.b16 %v143, %v140
  %v183 = vpack.c.b16 %v147, %v144
  %v184 = vpack.c.b16 %v148, %v145
  %v185 = vpack.c.b16 %v149, %v146
  %v186 = vpack.c.b16 %v153, %v150
  %v187 = vpack.c.b16 %v154, %v151
  %v188 = vpack.c.b16 %v155, %v152
  %v189 = vpack.c.b16 %v159, %v156
  %v190 = vpack.c.b16 %v160, %v157
  %v191 = vpack.c.b16 %v161, %v158
  %v192 = vpack.c.b16 %v165, %v162
  %v193 = vpack.c.b16 %v166, %v163
  %v194 = vpack.c.b16 %v167, %v164
  %v195 = vpack.c.b16 %v171, %v168
  %v196 = vpack.c.b16 %v172, %v169
  %v197 = vpack.c.b16 %v173, %v170
  %222 = vmatprep.subr.bf16.mxu0 %v196
  %223 = vmatpush1.bf16.msra.mxu0 %v195
  %224 = vmatprep.subr.bf16.mxu0 %v193
  %225 = vmatpush1.bf16.msra.mxu0 %v192
  %226 = vmatprep.subr.bf16.mxu0 %v190
  %227 = vmatpush1.bf16.msra.mxu0 %v189
  %228 = vmatprep.subr.bf16.mxu0 %v187
  %229 = vmatpush1.bf16.msra.mxu0 %v186
  %230 = vmatprep.subr.bf16.mxu0 %v184
  %231 = vmatpush1.bf16.msra.mxu0 %v183
  %232 = vmatprep.subr.bf16.mxu0 %v181
  %233 = vmatpush1.bf16.msra.mxu0 %v180
  %234 = vmatprep.subr.bf16.mxu0 %v178
  %235 = vmatpush1.bf16.msra.mxu0 %v177
  %236 = vmatprep.subr.bf16.mxu0 %v175
  %237 = vmatpush1.bf16.msra.mxu0 %v174
  %238 = vmatprep.subr.bf16.mxu0 0
  %239 = vmatpush2.bf16.msra.mxu0 0
  %240 = vmatprep.subr.bf16.mxu0 0
  %241 = vmatpush2.bf16.msra.mxu0 0
  %242 = vmatprep.subr.bf16.mxu0 0
  %243 = vmatpush2.bf16.msra.mxu0 0
  %244 = vmatprep.subr.bf16.mxu0 0
  %245 = vmatpush2.bf16.msra.mxu0 0
  %246 = vmatprep.subr.bf16.mxu0 0
  %247 = vmatpush2.bf16.msra.mxu0 0
  %248 = vmatprep.subr.bf16.mxu0 0
  %249 = vmatpush2.bf16.msra.mxu0 0
  %250 = vmatprep.subr.bf16.mxu0 0
  %251 = vmatpush2.bf16.msra.mxu0 0
  %252 = vmatprep.subr.bf16.mxu0 0
  %253 = vmatpush2.bf16.msra.mxu0 0
  %254 = vmatprep.mubr.bf16.mxu0 0
  %255 = vmatmul.mubr.bf16.gmra.mxu0 %v90
  %v256 = vpop.f32.mrf.mxu0
  %v257 = vadd.f32 0.0, %v256
  %v258 = vpop.f32.mrf.mxu0
  %v259 = vadd.f32 0.0, %v258
  %v260 = vpop.f32.mrf.mxu0
  %v261 = vadd.f32 0.0, %v260
  %v262 = vpop.f32.mrf.mxu0
  %v263 = vadd.f32 0.0, %v262
  %264 = vmatprep.mubr.bf16.mxu0 0
  %265 = vmatmul.mubr.bf16.gmra.mxu0 %v91
  %v266 = vpop.f32.mrf.mxu0
  %v267 = vadd.f32 0.0, %v266
  %v268 = vpop.f32.mrf.mxu0
  %v269 = vadd.f32 0.0, %v268
  %v270 = vpop.f32.mrf.mxu0
  %v271 = vadd.f32 0.0, %v270
  %v272 = vpop.f32.mrf.mxu0
  %v273 = vadd.f32 0.0, %v272
  %274 = vdwg.mxu0
  %275 = vmatprep.subr.bf16.mxu0 0
  %276 = vmatpush1.bf16.msra.mxu0 %v197
  %277 = vmatprep.subr.bf16.mxu0 0
  %278 = vmatpush1.bf16.msra.mxu0 %v194
  %279 = vmatprep.subr.bf16.mxu0 0
  %280 = vmatpush1.bf16.msra.mxu0 %v191
  %281 = vmatprep.subr.bf16.mxu0 0
  %282 = vmatpush1.bf16.msra.mxu0 %v188
  %283 = vmatprep.subr.bf16.mxu0 0
  %284 = vmatpush1.bf16.msra.mxu0 %v185
  %285 = vmatprep.subr.bf16.mxu0 0
  %286 = vmatpush1.bf16.msra.mxu0 %v182
  %287 = vmatprep.subr.bf16.mxu0 0
  %288 = vmatpush1.bf16.msra.mxu0 %v179
  %289 = vmatprep.subr.bf16.mxu0 0
  %290 = vmatpush1.bf16.msra.mxu0 %v176
  %291 = vmatprep.subr.bf16.mxu0 0
  %292 = vmatpush2.bf16.msra.mxu0 0
  %293 = vmatprep.subr.bf16.mxu0 0
  %294 = vmatpush2.bf16.msra.mxu0 0
  %295 = vmatprep.subr.bf16.mxu0 0
  %296 = vmatpush2.bf16.msra.mxu0 0
  %297 = vmatprep.subr.bf16.mxu0 0
  %298 = vmatpush2.bf16.msra.mxu0 0
  %299 = vmatprep.subr.bf16.mxu0 0
  %300 = vmatpush2.bf16.msra.mxu0 0
  %301 = vmatprep.subr.bf16.mxu0 0
  %302 = vmatpush2.bf16.msra.mxu0 0
  %303 = vmatprep.subr.bf16.mxu0 0
  %304 = vmatpush2.bf16.msra.mxu0 0
  %305 = vmatprep.subr.bf16.mxu0 0
  %306 = vmatpush2.bf16.msra.mxu0 0
  %307 = vmatprep.mubr.bf16.mxu0 0
  %308 = vmatmul.mubr.bf16.gmra.mxu0 %v90
  %v309 = vpop.f32.mrf.mxu0
  %v310 = vadd.f32 0.0, %v309
  %v311 = vpop.f32.mrf.mxu0
  %v312 = vpop.f32.mrf.mxu0
  %v313 = vadd.f32 0.0, %v312
  %v314 = vpop.f32.mrf.mxu0
  %315 = vmatprep.mubr.bf16.mxu0 0
  %316 = vmatmul.mubr.bf16.gmra.mxu0 %v91
  %v317 = vpop.f32.mrf.mxu0
  %v318 = vadd.f32 0.0, %v317
  %v319 = vpop.f32.mrf.mxu0
  %v320 = vpop.f32.mrf.mxu0
  %v321 = vadd.f32 0.0, %v320
  %v322 = vpop.f32.mrf.mxu0
  %323 = vdwg.mxu0
  %v324 = vadd.f32 %v34, %v257
  %v325 = vadd.f32 %v35, %v259
  %v326 = vadd.f32 %v36, %v310
  %v327 = vadd.f32 %v37, %v261
  %v328 = vadd.f32 %v38, %v263
  %v329 = vadd.f32 %v39, %v313
  %v330 = vadd.f32 %v40, %v267
  %v331 = vadd.f32 %v41, %v269
  %v332 = vadd.f32 %v42, %v318
  %v333 = vadd.f32 %v43, %v271
  %v334 = vadd.f32 %v44, %v273
  %v335 = vadd.f32 %v45, %v321
  %336 = vst [vmem:[#allocation2] sm:$0xff] %v324
  %337 = vst [vmem:[#allocation2 + $0x8] sm:$0xff] %v325
  %338 = vst [vmem:[#allocation2 + $0x10] sm:$0xff] %v326
  %339 = vst [vmem:[#allocation2 + $0x18] sm:$0xff] %v327
  %340 = vst [vmem:[#allocation2 + $0x20] sm:$0xff] %v328
  %341 = vst [vmem:[#allocation2 + $0x28] sm:$0xff] %v329
  %342 = vst [vmem:[#allocation2 + $0x30] sm:$0xff] %v330
  %343 = vst [vmem:[#allocation2 + $0x38] sm:$0xff] %v331
  %344 = vst [vmem:[#allocation2 + $0x40] sm:$0xff] %v332
  %345 = vst [vmem:[#allocation2 + $0x48] sm:$0xff] %v333
  %346 = vst [vmem:[#allocation2 + $0x50] sm:$0xff] %v334
  %347 = vst [vmem:[#allocation2 + $0x58] sm:$0xff] %v335
  // Predicated region
  $region22: #{_lambda_.18} parent=0 // pred_check
    %p348 = pneg %p18
  $region23: #{_lambda_.18} parent=0 // pred_check_branch
    %350 = sbr.rel (%p348) target = $region25
  $region24: #{_lambda_.18} parent=0 // pred_region
    %v351 = vld [vmem:[#allocation2] sm:$0xff]
    %v352 = vld [vmem:[#allocation2 + $0x8] sm:$0xff]
    %v353 = vld [vmem:[#allocation2 + $0x10] sm:$0xff]
    %v354 = vld [vmem:[#allocation2 + $0x18] sm:$0xff]
    %v355 = vld [vmem:[#allocation2 + $0x20] sm:$0xff]
    %v356 = vld [vmem:[#allocation2 + $0x28] sm:$0xff]
    %v357 = vld [vmem:[#allocation2 + $0x30] sm:$0xff]
    %v358 = vld [vmem:[#allocation2 + $0x38] sm:$0xff]
    %v359 = vld [vmem:[#allocation2 + $0x40] sm:$0xff]
    %v360 = vld [vmem:[#allocation2 + $0x48] sm:$0xff]
    %v361 = vld [vmem:[#allocation2 + $0x50] sm:$0xff]
    %v362 = vld [vmem:[#allocation2 + $0x58] sm:$0xff]
    %v363 = vld [vmem:[%s2] sm:$0x7]
    %v365 = vlaneseq
    %v366 = vshrl.u32 %v365, 7
    %v367 = vsub.s32 0, %v366
    %v368 = vrot.slane %v363, %v367
    %v369 = vlaneseq
    %v370 = vshrl.u32 %v369, 7
    %v371 = vsub.s32 1, %v370
    %v372 = vrot.slane %v363, %v371
    %v373 = vlaneseq
    %v374 = vshrl.u32 %v373, 7
    %v375 = vsub.s32 2, %v374
    %v376 = vrot.slane %v363, %v375
    %v380 = vmul.f32 %v351, %v368
    %v381 = vmul.f32 %v352, %v372
    %v382 = vmul.f32 %v353, %v376
    %v383 = vmul.f32 %v354, %v368
    %v384 = vmul.f32 %v355, %v372
    %v385 = vmul.f32 %v356, %v376
    %v386 = vmul.f32 %v357, %v368
    %v387 = vmul.f32 %v358, %v372
    %v388 = vmul.f32 %v359, %v376
    %v389 = vmul.f32 %v360, %v368
    %v390 = vmul.f32 %v361, %v372
    %v391 = vmul.f32 %v362, %v376
    %v392 = vld [vmem:[%s3] sm:$0x7]
    %v394 = vlaneseq
    %v395 = vshrl.u32 %v394, 7
    %v396 = vsub.s32 0, %v395
    %v397 = vrot.slane %v392, %v396
    %v398 = vlaneseq
    %v399 = vshrl.u32 %v398, 7
    %v400 = vsub.s32 1, %v399
    %v401 = vrot.slane %v392, %v400
    %v402 = vlaneseq
    %v403 = vshrl.u32 %v402, 7
    %v404 = vsub.s32 2, %v403
    %v405 = vrot.slane %v392, %v404
    %v409 = vadd.f32 %v380, %v397
    %v410 = vadd.f32 %v381, %v401
    %v411 = vadd.f32 %v382, %v405
    %v412 = vadd.f32 %v383, %v397
    %v413 = vadd.f32 %v384, %v401
    %v414 = vadd.f32 %v385, %v405
    %v415 = vadd.f32 %v386, %v397
    %v416 = vadd.f32 %v387, %v401
    %v417 = vadd.f32 %v388, %v405
    %v418 = vadd.f32 %v389, %v397
    %v419 = vadd.f32 %v390, %v401
    %v420 = vadd.f32 %v391, %v405
    %421 = vst [vmem:[%s4] sm:$0xff] %v409
    %422 = vst [vmem:[%s4 + $0x8] sm:$0xff] %v410
    %423 = vst [vmem:[%s4 + $0x10] sm:$0xff] %v411
    %424 = vst [vmem:[%s4 + $0x18] sm:$0xff] %v412
    %425 = vst [vmem:[%s4 + $0x20] sm:$0xff] %v413
    %426 = vst [vmem:[%s4 + $0x28] sm:$0xff] %v414
    %427 = vst [vmem:[%s4 + $0x30] sm:$0xff] %v415
    %428 = vst [vmem:[%s4 + $0x38] sm:$0xff] %v416
    %429 = vst [vmem:[%s4 + $0x40] sm:$0xff] %v417
    %430 = vst [vmem:[%s4 + $0x48] sm:$0xff] %v418
    %431 = vst [vmem:[%s4 + $0x50] sm:$0xff] %v419
    %432 = vst [vmem:[%s4 + $0x58] sm:$0xff] %v420
  $region25: #{_lambda_.18} parent=0 // pred_fallthru
    _
  // Predicated region
  $region26: #{_lambda_.18} parent=0 // pred_check
    _
  $region27: #{_lambda_.18} parent=0 // pred_check_branch
    %434 = sbr.rel (0) target = $region29
  $region28: #{_lambda_.18} parent=0 // pred_region
    _
  $region29: #{_lambda_.18} parent=0 // pred_fallthru
    _
  // Predicated region
  $region30: #{_lambda_.18} parent=0 // pred_check
    _
  $region31: #{_lambda_.18} parent=0 // pred_check_branch
    %436 = sbr.rel (0) target = $region33
  $region32: #{_lambda_.18} parent=0 // pred_region
    _
  $region33: #{_lambda_.18} parent=0 // pred_fallthru
    _

// kernel: squeeze.5
$region0: #{squeeze.5}
  %s0 = inlined_call_operand.vmem [shape: f32[2,1,16,192], index: 0, kind: input, shape index: {}]
  %s1 = inlined_call_operand.vmem [shape: f32[2,4,4,192], index: 1, kind: output, shape index: {}]
  $region1: #{squeeze.5} parent=0
    #allocation0 [shape = 'u8[65536]{0}', space=vmem, size = 0x10000, scoped, tag = 'scoped mem for output reshape']
    %s2 = scalar_lea.vmem %s0, 8
    %v3 = vld [vmem:[%s2] sm:$0xff]
    %vm4 = vcmask 523264
    %s5 = scalar_lea.vmem [#allocation0], 8
    %6 = vst.msk [vmem:[%s5] sm:$0xf] %vm4, %v3
    %s7 = scalar_lea.vmem [#allocation0], 20
    %8 = vst.msk [vmem:[%s7] sm:$0xf0] %vm4, %v3
    %s9 = scalar_lea.vmem %s0, 24
    %v10 = vld [vmem:[%s9] sm:$0xff]
    %vm11 = vcmask 523264
    %s12 = scalar_lea.vmem [#allocation0], 40
    %13 = vst.msk [vmem:[%s12] sm:$0xf] %vm11, %v10
    %s14 = scalar_lea.vmem [#allocation0], 52
    %15 = vst.msk [vmem:[%s14] sm:$0xf0] %vm11, %v10
    %s16 = scalar_lea.vmem %s0, 40
    %v17 = vld [vmem:[%s16] sm:$0xff]
    %vm18 = vcmask 523264
    %s19 = scalar_lea.vmem [#allocation0], 72
    %20 = vst.msk [vmem:[%s19] sm:$0xf] %vm18, %v17
    %s21 = scalar_lea.vmem [#allocation0], 84
    %22 = vst.msk [vmem:[%s21] sm:$0xf0] %vm18, %v17
    %s23 = scalar_lea.vmem %s0, 56
    %v24 = vld [vmem:[%s23] sm:$0xff]
    %vm25 = vcmask 523264
    %s26 = scalar_lea.vmem [#allocation0], 104
    %27 = vst.msk [vmem:[%s26] sm:$0xf] %vm25, %v24
    %s28 = scalar_lea.vmem [#allocation0], 116
    %29 = vst.msk [vmem:[%s28] sm:$0xf0] %vm25, %v24
    %v30 = vld [vmem:[%s0] sm:$0xff]
    %31 = vst [vmem:[#allocation0] sm:$0xf] %v30
    %s32 = scalar_lea.vmem [#allocation0], 12
    %33 = vst [vmem:[%s32] sm:$0xf0] %v30
    %s34 = scalar_lea.vmem %s0, 16
    %v35 = vld [vmem:[%s34] sm:$0xff]
    %s36 = scalar_lea.vmem [#allocation0], 32
    %37 = vst [vmem:[%s36] sm:$0xf] %v35
    %s38 = scalar_lea.vmem [#allocation0], 44
    %39 = vst [vmem:[%s38] sm:$0xf0] %v35
    %s40 = scalar_lea.vmem %s0, 32
    %v41 = vld [vmem:[%s40] sm:$0xff]
    %s42 = scalar_lea.vmem [#allocation0], 64
    %43 = vst [vmem:[%s42] sm:$0xf] %v41
    %s44 = scalar_lea.vmem [#allocation0], 76
    %45 = vst [vmem:[%s44] sm:$0xf0] %v41
    %s46 = scalar_lea.vmem %s0, 48
    %v47 = vld [vmem:[%s46] sm:$0xff]
    %s48 = scalar_lea.vmem [#allocation0], 96
    %49 = vst [vmem:[%s48] sm:$0xf] %v47
    %s50 = scalar_lea.vmem [#allocation0], 108
    %51 = vst [vmem:[%s50] sm:$0xf0] %v47
    %s53 = sshll.u32 1, 4
    %s54 = ssub.s32 %s53, 1
    %v56 = vld [vmem:[#allocation0] sm:%s54]
    %s57 = sshll.u32 1, 4
    %s58 = ssub.s32 %s57, 1
    %59 = vst [vmem:[%s1] sm:%s58] %v56
    %s60 = scalar_lea.vmem [#allocation0], 8
    %v61 = vld [vmem:[%s60] sm:%s54]
    %s62 = sshll.u32 1, 4
    %s63 = ssub.s32 %s62, 1
    %s64 = scalar_lea.vmem %s1, 4
    %65 = vst [vmem:[%s64] sm:%s63] %v61
    %s66 = scalar_lea.vmem [#allocation0], 16
    %v67 = vld [vmem:[%s66] sm:%s54]
    %s68 = sshll.u32 1, 4
    %s69 = ssub.s32 %s68, 1
    %s70 = smul.addr 4, 2
    %s71 = scalar_lea.vmem %s1, %s70
    %72 = vst [vmem:[%s71] sm:%s69] %v67
    %s73 = scalar_lea.vmem [#allocation0], 24
    %v74 = vld [vmem:[%s73] sm:%s54]
    %s75 = sshll.u32 1, 4
    %s76 = ssub.s32 %s75, 1
    %s77 = smul.addr 4, 3
    %s78 = scalar_lea.vmem %s1, %s77
    %79 = vst [vmem:[%s78] sm:%s76] %v74
    %s80 = scalar_lea.vmem [#allocation0], 32
    %v81 = vld [vmem:[%s80] sm:%s54]
    %s82 = sshll.u32 1, 4
    %s83 = ssub.s32 %s82, 1
    %s84 = smul.addr 4, 4
    %s85 = scalar_lea.vmem %s1, %s84
    %86 = vst [vmem:[%s85] sm:%s83] %v81
    %s87 = scalar_lea.vmem [#allocation0], 40
    %v88 = vld [vmem:[%s87] sm:%s54]
    %s89 = sshll.u32 1, 4
    %s90 = ssub.s32 %s89, 1
    %s91 = smul.addr 4, 5
    %s92 = scalar_lea.vmem %s1, %s91
    %93 = vst [vmem:[%s92] sm:%s90] %v88
    %s94 = scalar_lea.vmem [#allocation0], 48
    %v95 = vld [vmem:[%s94] sm:%s54]
    %s96 = sshll.u32 1, 4
    %s97 = ssub.s32 %s96, 1
    %s98 = smul.addr 4, 6
    %s99 = scalar_lea.vmem %s1, %s98
    %100 = vst [vmem:[%s99] sm:%s97] %v95
    %s101 = scalar_lea.vmem [#allocation0], 56
    %v102 = vld [vmem:[%s101] sm:%s54]
    %s103 = sshll.u32 1, 4
    %s104 = ssub.s32 %s103, 1
    %s105 = smul.addr 4, 7
    %s106 = scalar_lea.vmem %s1, %s105
    %107 = vst [vmem:[%s106] sm:%s104] %v102
    %s108 = scalar_lea.vmem [#allocation0], 64
    %v109 = vld [vmem:[%s108] sm:%s54]
    %s110 = sshll.u32 1, 4
    %s111 = ssub.s32 %s110, 1
    %s112 = smul.addr 4, 8
    %s113 = scalar_lea.vmem %s1, %s112
    %114 = vst [vmem:[%s113] sm:%s111] %v109
    %s115 = scalar_lea.vmem [#allocation0], 72
    %v116 = vld [vmem:[%s115] sm:%s54]
    %s117 = sshll.u32 1, 4
    %s118 = ssub.s32 %s117, 1
    %s119 = smul.addr 4, 9
    %s120 = scalar_lea.vmem %s1, %s119
    %121 = vst [vmem:[%s120] sm:%s118] %v116
    %s122 = scalar_lea.vmem [#allocation0], 80
    %v123 = vld [vmem:[%s122] sm:%s54]
    %s124 = sshll.u32 1, 4
    %s125 = ssub.s32 %s124, 1
    %s126 = smul.addr 4, 10
    %s127 = scalar_lea.vmem %s1, %s126
    %128 = vst [vmem:[%s127] sm:%s125] %v123
    %s129 = scalar_lea.vmem [#allocation0], 88
    %v130 = vld [vmem:[%s129] sm:%s54]
    %s131 = sshll.u32 1, 4
    %s132 = ssub.s32 %s131, 1
    %s133 = smul.addr 4, 11
    %s134 = scalar_lea.vmem %s1, %s133
    %135 = vst [vmem:[%s134] sm:%s132] %v130
    %s136 = scalar_lea.vmem [#allocation0], 96
    %v137 = vld [vmem:[%s136] sm:%s54]
    %s138 = sshll.u32 1, 4
    %s139 = ssub.s32 %s138, 1
    %s140 = smul.addr 4, 12
    %s141 = scalar_lea.vmem %s1, %s140
    %142 = vst [vmem:[%s141] sm:%s139] %v137
    %s143 = scalar_lea.vmem [#allocation0], 104
    %v144 = vld [vmem:[%s143] sm:%s54]
    %s145 = sshll.u32 1, 4
    %s146 = ssub.s32 %s145, 1
    %s147 = smul.addr 4, 13
    %s148 = scalar_lea.vmem %s1, %s147
    %149 = vst [vmem:[%s148] sm:%s146] %v144
    %s150 = scalar_lea.vmem [#allocation0], 112
    %v151 = vld [vmem:[%s150] sm:%s54]
    %s152 = sshll.u32 1, 4
    %s153 = ssub.s32 %s152, 1
    %s154 = smul.addr 4, 14
    %s155 = scalar_lea.vmem %s1, %s154
    %156 = vst [vmem:[%s155] sm:%s153] %v151
    %s157 = scalar_lea.vmem [#allocation0], 120
    %v158 = vld [vmem:[%s157] sm:%s54]
    %s159 = sshll.u32 1, 4
    %s160 = ssub.s32 %s159, 1
    %s161 = smul.addr 4, 15
    %s162 = scalar_lea.vmem %s1, %s161
    %163 = vst [vmem:[%s162] sm:%s160] %v158

// kernel: _lambda_.19
$region0: #{_lambda_.19}
  #allocation0 [shape = 'u32[]', space=smem, size = 0x4, offset = 0x4, fixed_abs, tag = 'smem constant byte address 0x4 - core index']
  #allocation1 [shape = 'u32[144,128]{1,0:T(1,128)}', space=vmem, size = 0x12000, scoped, tag = 'internal scratch']
  %s0 = inlined_call_operand.vmem [shape: bf16[4,32,256], index: 0, kind: input, shape index: {}]
  %s1 = inlined_call_operand.vmem [shape: bf16[4,256,128], index: 1, kind: input, shape index: {}]
  %s2 = inlined_call_operand.vmem [shape: f32[4,1,128], index: 2, kind: input, shape index: {}]
  %s3 = inlined_call_operand.vmem [shape: f32[4,32,128], index: 3, kind: output, shape index: {}]
  %s4 = sld [smem:[#allocation0]]
  $region45: #{_lambda_.19} parent=0
    _
  %s6 = ssub.s32 1, %s4
  %s7 = scalar_select 0, %s6, %s4
  loop: start=0, step=1, limit=6
  $region2: #{_lambda_.19} parent=0 // loop_pre_header
    _
  $region3: #{_lambda_.19} parent=0 // loop_header
    %s9 = sphi 0, %s13
    %p10 = scmp.ge.s32.totalorder %s9, 6
    %s16 = sphi 0, %s28
    %s17 = sphi 0, %s24
    %s18 = sphi 0, %s16
    %s19 = sphi 0, %s17
    %s20 = sphi 0, %s18
    %s21 = sphi 0, %s19
    %s33 = sphi 0, %s35
    %s36 = sphi 0, %s33
    %s37 = sphi 0, %s36
    %s53 = sphi 0, %s37
    %s59 = sphi 0, %s61
    %s62 = sphi 0, %s59
    %s63 = sphi 0, %s62
    %s79 = sphi 0, %s63
    %s85 = sphi 0, %s87
    %s88 = sphi 0, %s85
    %s89 = sphi 0, %s88
    %s105 = sphi 0, %s89
    %s113 = sphi 0, %s115
    %s116 = sphi 0, %s113
    %s117 = sphi 0, %s116
    %s133 = sphi 0, %s117
  $region4: #{_lambda_.19} parent=0 // loop_header_branch
    %12 = sbr.rel (%p10) target = $region8
  $region5: #{_lambda_.19} parent=0 // loop_body
    %s14 = ssub.s32 %s9, 1
    %s15 = ssub.s32 %s9, 2
    %s22 = sadd.s32 1, %s17
    %p23 = scmp.ge.s32.totalorder %s22, 1
    %s24 = scalar_select %p23, 0, %s22
    %s25 = sadd.s32 1, %s16
    %s26 = scalar_select %p23, %s25, %s16
    %p27 = scmp.ge.s32.totalorder %s26, 4
    %s28 = scalar_select %p27, 0, %s26
    %s29 = ssub.s32 %s16, %s28
    %s30 = ssub.s32 %s17, %s24
    %s31 = sor.u32 %s29, %s30
    %p32 = scmp.eq.s32.totalorder %s31, 0
    %s34 = sadd.s32 %s33, 1
    %s35 = scalar_select %p32, %s33, %s34
    %p38 = pneg %p32
    %p39 = scmp.eq.s32.totalorder %s9, 3
    %p40 = por %p38, %p39
    %p41 = scmp.ne.s32.totalorder %s33, %s36
    %p42 = scmp.eq.s32.totalorder %s9, 0
    %p43 = por %p41, %p42
    %p44 = scmp.ne.s32.totalorder %s33, %s36
    %p45 = scmp.eq.s32.totalorder %s14, 3
    %p46 = por %p44, %p45
    %p47 = scmp.ne.s32.totalorder %s36, %s37
    %p48 = scmp.eq.s32.totalorder %s14, 0
    %p49 = por %p47, %p48
    %p50 = scmp.ne.s32.totalorder %s36, %s37
    %p51 = scmp.eq.s32.totalorder %s15, 3
    %p52 = por %p50, %p51
    %p54 = scmp.ne.s32.totalorder %s37, %s53
    %p55 = scmp.eq.s32.totalorder %s15, 0
    %p56 = por %p54, %p55
    %s57 = ssub.s32 %s16, %s28
    %p58 = scmp.eq.s32.totalorder %s57, 0
    %s60 = sadd.s32 %s59, 1
    %s61 = scalar_select %p58, %s59, %s60
    %p64 = pneg %p58
    %p65 = scmp.eq.s32.totalorder %s9, 3
    %p66 = por %p64, %p65
    %p67 = scmp.ne.s32.totalorder %s59, %s62
    %p68 = scmp.eq.s32.totalorder %s9, 0
    %p69 = por %p67, %p68
    %p70 = scmp.ne.s32.totalorder %s59, %s62
    %p71 = scmp.eq.s32.totalorder %s14, 3
    %p72 = por %p70, %p71
    %p73 = scmp.ne.s32.totalorder %s62, %s63
    %p74 = scmp.eq.s32.totalorder %s14, 0
    %p75 = por %p73, %p74
    %p76 = scmp.ne.s32.totalorder %s62, %s63
    %p77 = scmp.eq.s32.totalorder %s15, 3
    %p78 = por %p76, %p77
    %p80 = scmp.ne.s32.totalorder %s63, %s79
    %p81 = scmp.eq.s32.totalorder %s15, 0
    %p82 = por %p80, %p81
    %s83 = ssub.s32 %s16, %s28
    %p84 = scmp.eq.s32.totalorder %s83, 0
    %s86 = sadd.s32 %s85, 1
    %s87 = scalar_select %p84, %s85, %s86
    %p90 = pneg %p84
    %p91 = scmp.eq.s32.totalorder %s9, 3
    %p92 = por %p90, %p91
    %p93 = scmp.ne.s32.totalorder %s85, %s88
    %p94 = scmp.eq.s32.totalorder %s9, 0
    %p95 = por %p93, %p94
    %p96 = scmp.ne.s32.totalorder %s85, %s88
    %p97 = scmp.eq.s32.totalorder %s14, 3
    %p98 = por %p96, %p97
    %p99 = scmp.ne.s32.totalorder %s88, %s89
    %p100 = scmp.eq.s32.totalorder %s14, 0
    %p101 = por %p99, %p100
    %p102 = scmp.ne.s32.totalorder %s88, %s89
    %p103 = scmp.eq.s32.totalorder %s15, 3
    %p104 = por %p102, %p103
    %p106 = scmp.ne.s32.totalorder %s89, %s105
    %p107 = scmp.eq.s32.totalorder %s15, 0
    %p108 = por %p106, %p107
    %s109 = ssub.s32 %s16, %s28
    %s110 = ssub.s32 %s17, %s24
    %s111 = sor.u32 %s109, %s110
    %p112 = scmp.eq.s32.totalorder %s111, 0
    %s114 = sadd.s32 %s113, 1
    %s115 = scalar_select %p112, %s113, %s114
    %p118 = pneg %p112
    %p119 = scmp.eq.s32.totalorder %s9, 3
    %p120 = por %p118, %p119
    %p121 = scmp.ne.s32.totalorder %s113, %s116
    %p122 = scmp.eq.s32.totalorder %s9, 0
    %p123 = por %p121, %p122
    %p124 = scmp.ne.s32.totalorder %s113, %s116
    %p125 = scmp.eq.s32.totalorder %s14, 3
    %p126 = por %p124, %p125
    %p127 = scmp.ne.s32.totalorder %s116, %s117
    %p128 = scmp.eq.s32.totalorder %s14, 0
    %p129 = por %p127, %p128
    %p130 = scmp.ne.s32.totalorder %s116, %s117
    %p131 = scmp.eq.s32.totalorder %s15, 3
    %p132 = por %p130, %p131
    %p134 = scmp.ne.s32.totalorder %s117, %s133
    %p135 = scmp.eq.s32.totalorder %s15, 0
    %p136 = por %p134, %p135
    %p137 = scmp.le.s32.totalorder 1, %s9
    %p138 = scmp.lt.s32.totalorder %s9, 5
    %p139 = pnand %p137, %p138
    %p140 = pneg %p139
    // Predicated region
    $region9: #{_lambda_.19} parent=5 // pred_check
      _
    $region10: #{_lambda_.19} parent=5 // pred_check_branch
      %142 = sbr.rel (%p139) target = $region12
    $region11: #{_lambda_.19} parent=5 // pred_region
      %s143 = ssub.s32 %s9, 1
    $region12: #{_lambda_.19} parent=5 // pred_fallthru
      _
    %p144 = scmp.lt.s32.totalorder %s9, 4
    // Predicated region
    $region13: #{_lambda_.19} parent=5 // pred_check
      %p145 = pneg %p144
    $region14: #{_lambda_.19} parent=5 // pred_check_branch
      %147 = sbr.rel (%p145) target = $region16
    $region15: #{_lambda_.19} parent=5 // pred_region
      // Predicated region
      $region17: #{_lambda_.19} parent=15 // pred_check
        %p148 = pneg %p43
      $region18: #{_lambda_.19} parent=15 // pred_check_branch
        %150 = sbr.rel (%p148) target = $region20
      $region19: #{_lambda_.19} parent=15 // pred_region
        %s151 = smul.u32 4, %s17
        %p152 = scmp.lt.s32.totalorder %s16, 3
        %s153 = scalar_select %p152, %s16, 3
        %p154 = scmp.lt.s32.totalorder %s151, 3
        %s155 = scalar_select %p154, %s151, 3
        %s156 = smul.addr %s155, 2
        %s157 = smul.addr %s153, 8
        %s158 = sadd.s32 %s156, %s157
        %s159 = smul.addr %s158, 4
        %s160 = scalar_lea.vmem %s0, %s159
        %s161 = smul.u32 4, %s17
      $region20: #{_lambda_.19} parent=15 // pred_fallthru
        _
      // Predicated region
      $region21: #{_lambda_.19} parent=15 // pred_check
        %p162 = pneg %p69
      $region22: #{_lambda_.19} parent=15 // pred_check_branch
        %164 = sbr.rel (%p162) target = $region24
      $region23: #{_lambda_.19} parent=15 // pred_region
        %p165 = scmp.lt.s32.totalorder %s16, 3
        %s166 = scalar_select %p165, %s16, 3
        %s167 = smul.addr %s166, 32
        %s168 = smul.addr %s167, 4
        %s169 = scalar_lea.vmem %s1, %s168
      $region24: #{_lambda_.19} parent=15 // pred_fallthru
        _
      // Predicated region
      $region25: #{_lambda_.19} parent=15 // pred_check
        %p170 = pneg %p95
      $region26: #{_lambda_.19} parent=15 // pred_check_branch
        %172 = sbr.rel (%p170) target = $region28
      $region27: #{_lambda_.19} parent=15 // pred_region
        %p173 = scmp.lt.s32.totalorder %s16, 3
        %s174 = scalar_select %p173, %s16, 3
        %s175 = scalar_lea.vmem %s2, %s174
      $region28: #{_lambda_.19} parent=15 // pred_fallthru
        _
    $region16: #{_lambda_.19} parent=5 // pred_fallthru
      _
    %p176 = scmp.le.s32.totalorder 1, %s9
    %p177 = scmp.lt.s32.totalorder %s9, 5
    %p178 = pnand %p176, %p177
    %p179 = pneg %p178
    // Predicated region
    $region29: #{_lambda_.19} parent=5 // pred_check
      _
    $region30: #{_lambda_.19} parent=5 // pred_check_branch
      %181 = sbr.rel (%p178) target = $region32
    $region31: #{_lambda_.19} parent=5 // pred_region
      %s182 = ssub.s32 %s9, 1
      %s183 = smul.u32 4, %s19
      %p184 = scmp.lt.s32.totalorder %s18, 3
      %s185 = scalar_select %p184, %s18, 3
      %p186 = scmp.lt.s32.totalorder %s183, 3
      %s187 = scalar_select %p186, %s183, 3
      %s188 = smul.addr %s187, 2
      %s189 = smul.addr %s185, 8
      %s190 = sadd.s32 %s188, %s189
      %s191 = smul.addr %s190, 4
      %s192 = scalar_lea.vmem %s0, %s191
      %p193 = pneg %p49
      %p194 = pneg %p46
      %p195 = scmp.lt.s32.totalorder %s18, 3
      %s196 = scalar_select %p195, %s18, 3
      %s197 = smul.addr %s196, 32
      %s198 = smul.addr %s197, 4
      %s199 = scalar_lea.vmem %s1, %s198
      %p200 = pneg %p75
      %p201 = pneg %p72
      %p202 = scmp.lt.s32.totalorder %s18, 3
      %s203 = scalar_select %p202, %s18, 3
      %s204 = scalar_lea.vmem %s2, %s203
      %p205 = pneg %p101
      %p206 = pneg %p98
      %p207 = pneg %p129
      %p208 = pneg %p126
      %s209 = smul.u32 4, %s19
      %p210 = scmp.lt.s32.totalorder %s18, 3
      %s211 = scalar_select %p210, %s18, 3
      %p212 = scmp.lt.s32.totalorder %s209, 3
      %s213 = scalar_select %p212, %s209, 3
      %s214 = smul.addr %s211, 4
      %s215 = sadd.s32 %s213, %s214
      %s216 = smul.addr %s215, 8
      %s217 = scalar_lea.vmem %s3, %s216
      %s218 = smul.u32 4, %s19
      %p219 = scmp.lt.s32.totalorder %s18, 3
      %s220 = scalar_select %p219, %s18, 3
      %p221 = scmp.lt.s32.totalorder %s218, 3
      %s222 = scalar_select %p221, %s218, 3
      %s223 = smul.addr %s222, 2
      %s224 = smul.addr %s220, 8
      %s225 = sadd.s32 %s223, %s224
      %s226 = smul.addr %s225, 4
      %s227 = scalar_lea.vmem %s0, %s226
      %s228 = smul.u32 4, %s19
      %p229 = scmp.lt.s32.totalorder %s18, 3
      %s230 = scalar_select %p229, %s18, 3
      %s231 = smul.addr %s230, 32
      %s232 = smul.addr %s231, 4
      %s233 = scalar_lea.vmem %s1, %s232
      %p234 = scmp.lt.s32.totalorder %s18, 3
      %s235 = scalar_select %p234, %s18, 3
      %s236 = scalar_lea.vmem %s2, %s235
      %s237 = smul.u32 4, %s19
      %p238 = scmp.lt.s32.totalorder %s18, 3
      %s239 = scalar_select %p238, %s18, 3
      %p240 = scmp.lt.s32.totalorder %s237, 3
      %s241 = scalar_select %p240, %s237, 3
      %s242 = smul.addr %s239, 4
      %s243 = sadd.s32 %s241, %s242
      %s244 = smul.addr %s243, 8
      %s245 = scalar_lea.vmem %s3, %s244
      %s246 = smul.u32 4, %s19
      %v248 = vld [vmem:[%s227] sm:$0xff]
      %v249 = vld [vmem:[%s227 + $0x8] sm:$0xff]
      %v250 = vld [vmem:[%s227 + $0x10] sm:$0xff]
      %v251 = vld [vmem:[%s227 + $0x18] sm:$0xff]
      %v252 = vld [vmem:[%s233] sm:$0xf]
      %v253 = vld [vmem:[%s233 + $0x4] sm:$0xf]
      %v254 = vld [vmem:[%s233 + $0x8] sm:$0xf]
      %v255 = vld [vmem:[%s233 + $0xc] sm:$0xf]
      %v256 = vld [vmem:[%s233 + $0x10] sm:$0xf]
      %v257 = vld [vmem:[%s233 + $0x14] sm:$0xf]
      %v258 = vld [vmem:[%s233 + $0x18] sm:$0xf]
      %v259 = vld [vmem:[%s233 + $0x1c] sm:$0xf]
      %v260 = vld [vmem:[%s233 + $0x20] sm:$0xf]
      %v261 = vld [vmem:[%s233 + $0x24] sm:$0xf]
      %v262 = vld [vmem:[%s233 + $0x28] sm:$0xf]
      %v263 = vld [vmem:[%s233 + $0x2c] sm:$0xf]
      %v264 = vld [vmem:[%s233 + $0x30] sm:$0xf]
      %v265 = vld [vmem:[%s233 + $0x34] sm:$0xf]
      %v266 = vld [vmem:[%s233 + $0x38] sm:$0xf]
      %v267 = vld [vmem:[%s233 + $0x3c] sm:$0xf]
      %v268 = vld [vmem:[%s233 + $0x40] sm:$0xf]
      %v269 = vld [vmem:[%s233 + $0x44] sm:$0xf]
      %v270 = vld [vmem:[%s233 + $0x48] sm:$0xf]
      %v271 = vld [vmem:[%s233 + $0x4c] sm:$0xf]
      %v272 = vld [vmem:[%s233 + $0x50] sm:$0xf]
      %v273 = vld [vmem:[%s233 + $0x54] sm:$0xf]
      %v274 = vld [vmem:[%s233 + $0x58] sm:$0xf]
      %v275 = vld [vmem:[%s233 + $0x5c] sm:$0xf]
      %v276 = vld [vmem:[%s233 + $0x60] sm:$0xf]
      %v277 = vld [vmem:[%s233 + $0x64] sm:$0xf]
      %v278 = vld [vmem:[%s233 + $0x68] sm:$0xf]
      %v279 = vld [vmem:[%s233 + $0x6c] sm:$0xf]
      %v280 = vld [vmem:[%s233 + $0x70] sm:$0xf]
      %v281 = vld [vmem:[%s233 + $0x74] sm:$0xf]
      %v282 = vld [vmem:[%s233 + $0x78] sm:$0xf]
      %v283 = vld [vmem:[%s233 + $0x7c] sm:$0xf]
      %v284 = vld [vmem:[%s236] sm:$0x1]
      %v286 = vlaneseq
      %v287 = vshrl.u32 %v286, 7
      %v288 = vsub.s32 0, %v287
      %v289 = vrot.slane %v284, %v288
      %v295 = vunpack.c.l.b16 %v248
      %v296 = vunpack.c.h.b16 %v248
      %v297 = vunpack.c.l.b16 %v249
      %v298 = vunpack.c.h.b16 %v249
      %v299 = vunpack.c.l.b16 %v250
      %v300 = vunpack.c.h.b16 %v250
      %v301 = vunpack.c.l.b16 %v251
      %v302 = vunpack.c.h.b16 %v251
      %v303 = vpack.c.b16 %v297, %v295
      %v304 = vpack.c.b16 %v298, %v296
      %v305 = vpack.c.b16 %v301, %v299
      %v306 = vpack.c.b16 %v302, %v300
      %v343 = vunpack.c.l.b16 %v252
      %v344 = vunpack.c.l.b16 %v253
      %v345 = vunpack.c.l.b16 %v254
      %v346 = vunpack.c.l.b16 %v255
      %v347 = vunpack.c.l.b16 %v256
      %v348 = vunpack.c.l.b16 %v257
      %v349 = vunpack.c.l.b16 %v258
      %v350 = vunpack.c.l.b16 %v259
      %v351 = vunpack.c.l.b16 %v260
      %v352 = vunpack.c.l.b16 %v261
      %v353 = vunpack.c.l.b16 %v262
      %v354 = vunpack.c.l.b16 %v263
      %v355 = vunpack.c.l.b16 %v264
      %v356 = vunpack.c.l.b16 %v265
      %v357 = vunpack.c.l.b16 %v266
      %v358 = vunpack.c.l.b16 %v267
      %v359 = vunpack.c.l.b16 %v268
      %v360 = vunpack.c.l.b16 %v269
      %v361 = vunpack.c.l.b16 %v270
      %v362 = vunpack.c.l.b16 %v271
      %v363 = vunpack.c.l.b16 %v272
      %v364 = vunpack.c.l.b16 %v273
      %v365 = vunpack.c.l.b16 %v274
      %v366 = vunpack.c.l.b16 %v275
      %v367 = vunpack.c.l.b16 %v276
      %v368 = vunpack.c.l.b16 %v277
      %v369 = vunpack.c.l.b16 %v278
      %v370 = vunpack.c.l.b16 %v279
      %v371 = vunpack.c.l.b16 %v280
      %v372 = vunpack.c.l.b16 %v281
      %v373 = vunpack.c.l.b16 %v282
      %v374 = vunpack.c.l.b16 %v283
      %v375 = vpack.c.b16 %v344, %v343
      %v376 = vpack.c.b16 %v346, %v345
      %v377 = vpack.c.b16 %v348, %v347
      %v378 = vpack.c.b16 %v350, %v349
      %v379 = vpack.c.b16 %v352, %v351
      %v380 = vpack.c.b16 %v354, %v353
      %v381 = vpack.c.b16 %v356, %v355
      %v382 = vpack.c.b16 %v358, %v357
      %v383 = vpack.c.b16 %v360, %v359
      %v384 = vpack.c.b16 %v362, %v361
      %v385 = vpack.c.b16 %v364, %v363
      %v386 = vpack.c.b16 %v366, %v365
      %v387 = vpack.c.b16 %v368, %v367
      %v388 = vpack.c.b16 %v370, %v369
      %v389 = vpack.c.b16 %v372, %v371
      %v390 = vpack.c.b16 %v374, %v373
      %407 = vmatprep.subr.bf16.mxu0 0
      %408 = vmatpush1.bf16.msra.mxu0 %v382
      %409 = vmatprep.subr.bf16.mxu0 0
      %410 = vmatpush1.bf16.msra.mxu0 %v381
      %411 = vmatprep.subr.bf16.mxu0 0
      %412 = vmatpush1.bf16.msra.mxu0 %v380
      %413 = vmatprep.subr.bf16.mxu0 0
      %414 = vmatpush1.bf16.msra.mxu0 %v379
      %415 = vmatprep.subr.bf16.mxu0 0
      %416 = vmatpush1.bf16.msra.mxu0 %v378
      %417 = vmatprep.subr.bf16.mxu0 0
      %418 = vmatpush1.bf16.msra.mxu0 %v377
      %419 = vmatprep.subr.bf16.mxu0 0
      %420 = vmatpush1.bf16.msra.mxu0 %v376
      %421 = vmatprep.subr.bf16.mxu0 0
      %422 = vmatpush1.bf16.msra.mxu0 %v375
      %423 = vmatprep.subr.bf16.mxu0 0
      %424 = vmatpush2.bf16.msra.mxu0 %v390
      %425 = vmatprep.subr.bf16.mxu0 0
      %426 = vmatpush2.bf16.msra.mxu0 %v389
      %427 = vmatprep.subr.bf16.mxu0 0
      %428 = vmatpush2.bf16.msra.mxu0 %v388
      %429 = vmatprep.subr.bf16.mxu0 0
      %430 = vmatpush2.bf16.msra.mxu0 %v387
      %431 = vmatprep.subr.bf16.mxu0 0
      %432 = vmatpush2.bf16.msra.mxu0 %v386
      %433 = vmatprep.subr.bf16.mxu0 0
      %434 = vmatpush2.bf16.msra.mxu0 %v385
      %435 = vmatprep.subr.bf16.mxu0 0
      %436 = vmatpush2.bf16.msra.mxu0 %v384
      %437 = vmatprep.subr.bf16.mxu0 0
      %438 = vmatpush2.bf16.msra.mxu0 %v383
      %439 = vmatprep.mubr.bf16.mxu0 %v304
      %440 = vmatmul.mubr.bf16.gmra.mxu0 %v303
      %v441 = vpop.f32.mrf.mxu0
      %v442 = vadd.f32 %v289, %v441
      %v443 = vpop.f32.mrf.mxu0
      %v444 = vpop.f32.mrf.mxu0
      %v445 = vadd.f32 %v289, %v444
      %v446 = vpop.f32.mrf.mxu0
      %447 = vmatprep.mubr.bf16.mxu0 %v306
      %448 = vmatmul.mubr.bf16.gmra.mxu0 %v305
      %v449 = vpop.f32.mrf.mxu0
      %v450 = vadd.f32 %v289, %v449
      %v451 = vpop.f32.mrf.mxu0
      %v452 = vpop.f32.mrf.mxu0
      %v453 = vadd.f32 %v289, %v452
      %v454 = vpop.f32.mrf.mxu0
      %455 = vdwg.mxu0
      %456 = vst [vmem:[%s245] sm:$0xff] %v442
      %457 = vst [vmem:[%s245 + $0x8] sm:$0xff] %v445
      %458 = vst [vmem:[%s245 + $0x10] sm:$0xff] %v450
      %459 = vst [vmem:[%s245 + $0x18] sm:$0xff] %v453
      %s460 = smul.u32 4, %s19
      %p461 = scmp.lt.s32.totalorder %s18, 3
      %s462 = scalar_select %p461, %s18, 3
      %p463 = scmp.lt.s32.totalorder %s460, 3
      %s464 = scalar_select %p463, %s460, 3
      %s465 = smul.addr %s462, 4
      %s466 = sadd.s32 %s464, %s465
      %s467 = smul.addr %s466, 8
      %s468 = scalar_lea.vmem %s3, %s467
      // Predicated region
      $region33: #{_lambda_.19} parent=31 // pred_check
        %p469 = pneg %p126
      $region34: #{_lambda_.19} parent=31 // pred_check_branch
        %471 = sbr.rel (%p469) target = $region36
      $region35: #{_lambda_.19} parent=31 // pred_region
        %s472 = smul.u32 4, %s19
      $region36: #{_lambda_.19} parent=31 // pred_fallthru
        _
    $region32: #{_lambda_.19} parent=5 // pred_fallthru
      _
    %p473 = scmp.le.s32.totalorder 2, %s9
    // Predicated region
    $region37: #{_lambda_.19} parent=5 // pred_check
      %p474 = pneg %p473
    $region38: #{_lambda_.19} parent=5 // pred_check_branch
      %476 = sbr.rel (%p474) target = $region40
    $region39: #{_lambda_.19} parent=5 // pred_region
      %s477 = ssub.s32 %s9, 2
      // Predicated region
      $region41: #{_lambda_.19} parent=39 // pred_check
        %p478 = pneg %p132
      $region42: #{_lambda_.19} parent=39 // pred_check_branch
        %480 = sbr.rel (%p478) target = $region44
      $region43: #{_lambda_.19} parent=39 // pred_region
        %s481 = smul.u32 4, %s21
        %p482 = scmp.lt.s32.totalorder %s20, 3
        %s483 = scalar_select %p482, %s20, 3
        %p484 = scmp.lt.s32.totalorder %s481, 3
        %s485 = scalar_select %p484, %s481, 3
        %s486 = smul.addr %s483, 4
        %s487 = sadd.s32 %s485, %s486
        %s488 = smul.addr %s487, 8
        %s489 = scalar_lea.vmem %s3, %s488
      $region44: #{_lambda_.19} parent=39 // pred_fallthru
        _
    $region40: #{_lambda_.19} parent=5 // pred_fallthru
      _
  $region6: #{_lambda_.19} parent=0 // loop_footer
    %s13 = sadd.s32 1, %s9
  $region7: #{_lambda_.19} parent=0 // loop_footer_branch
    %8 = sbr.rel target = $region3
  $region8: #{_lambda_.19} parent=0 // loop_exit
    _

// kernel: _lambda_.20
$region0: #{_lambda_.20}
  #allocation0 [shape = 'u32[]', space=smem, size = 0x4, offset = 0x4, fixed_abs, tag = 'smem constant byte address 0x4 - core index']
  #allocation1 [shape = 'u32[144,128]{1,0:T(1,128)}', space=vmem, size = 0x12000, scoped, tag = 'internal scratch']
  %s0 = inlined_call_operand.vmem [shape: bf16[4,32,128], index: 0, kind: input, shape index: {}]
  %s1 = inlined_call_operand.vmem [shape: bf16[4,128,256], index: 1, kind: input, shape index: {}]
  %s2 = inlined_call_operand.vmem [shape: f32[4,1,256], index: 2, kind: input, shape index: {}]
  %s3 = inlined_call_operand.vmem [shape: f32[4,32,256], index: 3, kind: output, shape index: {}]
  %s4 = sld [smem:[#allocation0]]
  $region45: #{_lambda_.20} parent=0
    _
  %s6 = ssub.s32 1, %s4
  %s7 = scalar_select 0, %s6, %s4
  loop: start=0, step=1, limit=6
  $region2: #{_lambda_.20} parent=0 // loop_pre_header
    _
  $region3: #{_lambda_.20} parent=0 // loop_header
    %s9 = sphi 0, %s13
    %p10 = scmp.ge.s32.totalorder %s9, 6
    %s16 = sphi 0, %s28
    %s17 = sphi 0, %s24
    %s18 = sphi 0, %s16
    %s19 = sphi 0, %s17
    %s20 = sphi 0, %s18
    %s21 = sphi 0, %s19
    %s33 = sphi 0, %s35
    %s36 = sphi 0, %s33
    %s37 = sphi 0, %s36
    %s53 = sphi 0, %s37
    %s59 = sphi 0, %s61
    %s62 = sphi 0, %s59
    %s63 = sphi 0, %s62
    %s79 = sphi 0, %s63
    %s85 = sphi 0, %s87
    %s88 = sphi 0, %s85
    %s89 = sphi 0, %s88
    %s105 = sphi 0, %s89
    %s113 = sphi 0, %s115
    %s116 = sphi 0, %s113
    %s117 = sphi 0, %s116
    %s133 = sphi 0, %s117
  $region4: #{_lambda_.20} parent=0 // loop_header_branch
    %12 = sbr.rel (%p10) target = $region8
  $region5: #{_lambda_.20} parent=0 // loop_body
    %s14 = ssub.s32 %s9, 1
    %s15 = ssub.s32 %s9, 2
    %s22 = sadd.s32 1, %s17
    %p23 = scmp.ge.s32.totalorder %s22, 1
    %s24 = scalar_select %p23, 0, %s22
    %s25 = sadd.s32 1, %s16
    %s26 = scalar_select %p23, %s25, %s16
    %p27 = scmp.ge.s32.totalorder %s26, 4
    %s28 = scalar_select %p27, 0, %s26
    %s29 = ssub.s32 %s16, %s28
    %s30 = ssub.s32 %s17, %s24
    %s31 = sor.u32 %s29, %s30
    %p32 = scmp.eq.s32.totalorder %s31, 0
    %s34 = sadd.s32 %s33, 1
    %s35 = scalar_select %p32, %s33, %s34
    %p38 = pneg %p32
    %p39 = scmp.eq.s32.totalorder %s9, 3
    %p40 = por %p38, %p39
    %p41 = scmp.ne.s32.totalorder %s33, %s36
    %p42 = scmp.eq.s32.totalorder %s9, 0
    %p43 = por %p41, %p42
    %p44 = scmp.ne.s32.totalorder %s33, %s36
    %p45 = scmp.eq.s32.totalorder %s14, 3
    %p46 = por %p44, %p45
    %p47 = scmp.ne.s32.totalorder %s36, %s37
    %p48 = scmp.eq.s32.totalorder %s14, 0
    %p49 = por %p47, %p48
    %p50 = scmp.ne.s32.totalorder %s36, %s37
    %p51 = scmp.eq.s32.totalorder %s15, 3
    %p52 = por %p50, %p51
    %p54 = scmp.ne.s32.totalorder %s37, %s53
    %p55 = scmp.eq.s32.totalorder %s15, 0
    %p56 = por %p54, %p55
    %s57 = ssub.s32 %s16, %s28
    %p58 = scmp.eq.s32.totalorder %s57, 0
    %s60 = sadd.s32 %s59, 1
    %s61 = scalar_select %p58, %s59, %s60
    %p64 = pneg %p58
    %p65 = scmp.eq.s32.totalorder %s9, 3
    %p66 = por %p64, %p65
    %p67 = scmp.ne.s32.totalorder %s59, %s62
    %p68 = scmp.eq.s32.totalorder %s9, 0
    %p69 = por %p67, %p68
    %p70 = scmp.ne.s32.totalorder %s59, %s62
    %p71 = scmp.eq.s32.totalorder %s14, 3
    %p72 = por %p70, %p71
    %p73 = scmp.ne.s32.totalorder %s62, %s63
    %p74 = scmp.eq.s32.totalorder %s14, 0
    %p75 = por %p73, %p74
    %p76 = scmp.ne.s32.totalorder %s62, %s63
    %p77 = scmp.eq.s32.totalorder %s15, 3
    %p78 = por %p76, %p77
    %p80 = scmp.ne.s32.totalorder %s63, %s79
    %p81 = scmp.eq.s32.totalorder %s15, 0
    %p82 = por %p80, %p81
    %s83 = ssub.s32 %s16, %s28
    %p84 = scmp.eq.s32.totalorder %s83, 0
    %s86 = sadd.s32 %s85, 1
    %s87 = scalar_select %p84, %s85, %s86
    %p90 = pneg %p84
    %p91 = scmp.eq.s32.totalorder %s9, 3
    %p92 = por %p90, %p91
    %p93 = scmp.ne.s32.totalorder %s85, %s88
    %p94 = scmp.eq.s32.totalorder %s9, 0
    %p95 = por %p93, %p94
    %p96 = scmp.ne.s32.totalorder %s85, %s88
    %p97 = scmp.eq.s32.totalorder %s14, 3
    %p98 = por %p96, %p97
    %p99 = scmp.ne.s32.totalorder %s88, %s89
    %p100 = scmp.eq.s32.totalorder %s14, 0
    %p101 = por %p99, %p100
    %p102 = scmp.ne.s32.totalorder %s88, %s89
    %p103 = scmp.eq.s32.totalorder %s15, 3
    %p104 = por %p102, %p103
    %p106 = scmp.ne.s32.totalorder %s89, %s105
    %p107 = scmp.eq.s32.totalorder %s15, 0
    %p108 = por %p106, %p107
    %s109 = ssub.s32 %s16, %s28
    %s110 = ssub.s32 %s17, %s24
    %s111 = sor.u32 %s109, %s110
    %p112 = scmp.eq.s32.totalorder %s111, 0
    %s114 = sadd.s32 %s113, 1
    %s115 = scalar_select %p112, %s113, %s114
    %p118 = pneg %p112
    %p119 = scmp.eq.s32.totalorder %s9, 3
    %p120 = por %p118, %p119
    %p121 = scmp.ne.s32.totalorder %s113, %s116
    %p122 = scmp.eq.s32.totalorder %s9, 0
    %p123 = por %p121, %p122
    %p124 = scmp.ne.s32.totalorder %s113, %s116
    %p125 = scmp.eq.s32.totalorder %s14, 3
    %p126 = por %p124, %p125
    %p127 = scmp.ne.s32.totalorder %s116, %s117
    %p128 = scmp.eq.s32.totalorder %s14, 0
    %p129 = por %p127, %p128
    %p130 = scmp.ne.s32.totalorder %s116, %s117
    %p131 = scmp.eq.s32.totalorder %s15, 3
    %p132 = por %p130, %p131
    %p134 = scmp.ne.s32.totalorder %s117, %s133
    %p135 = scmp.eq.s32.totalorder %s15, 0
    %p136 = por %p134, %p135
    %p137 = scmp.le.s32.totalorder 1, %s9
    %p138 = scmp.lt.s32.totalorder %s9, 5
    %p139 = pnand %p137, %p138
    %p140 = pneg %p139
    // Predicated region
    $region9: #{_lambda_.20} parent=5 // pred_check
      _
    $region10: #{_lambda_.20} parent=5 // pred_check_branch
      %142 = sbr.rel (%p139) target = $region12
    $region11: #{_lambda_.20} parent=5 // pred_region
      %s143 = ssub.s32 %s9, 1
    $region12: #{_lambda_.20} parent=5 // pred_fallthru
      _
    %p144 = scmp.lt.s32.totalorder %s9, 4
    // Predicated region
    $region13: #{_lambda_.20} parent=5 // pred_check
      %p145 = pneg %p144
    $region14: #{_lambda_.20} parent=5 // pred_check_branch
      %147 = sbr.rel (%p145) target = $region16
    $region15: #{_lambda_.20} parent=5 // pred_region
      // Predicated region
      $region17: #{_lambda_.20} parent=15 // pred_check
        %p148 = pneg %p43
      $region18: #{_lambda_.20} parent=15 // pred_check_branch
        %150 = sbr.rel (%p148) target = $region20
      $region19: #{_lambda_.20} parent=15 // pred_region
        %s151 = smul.u32 4, %s17
        %p152 = scmp.lt.s32.totalorder %s16, 3
        %s153 = scalar_select %p152, %s16, 3
        %p154 = scmp.lt.s32.totalorder %s151, 3
        %s155 = scalar_select %p154, %s151, 3
        %s156 = smul.addr %s153, 4
        %s157 = sadd.s32 %s155, %s156
        %s158 = smul.addr %s157, 4
        %s159 = scalar_lea.vmem %s0, %s158
        %s160 = smul.u32 4, %s17
      $region20: #{_lambda_.20} parent=15 // pred_fallthru
        _
      // Predicated region
      $region21: #{_lambda_.20} parent=15 // pred_check
        %p161 = pneg %p69
      $region22: #{_lambda_.20} parent=15 // pred_check_branch
        %163 = sbr.rel (%p161) target = $region24
      $region23: #{_lambda_.20} parent=15 // pred_region
        %p164 = scmp.lt.s32.totalorder %s16, 3
        %s165 = scalar_select %p164, %s16, 3
        %s166 = smul.addr %s165, 32
        %s167 = smul.addr %s166, 4
        %s168 = scalar_lea.vmem %s1, %s167
      $region24: #{_lambda_.20} parent=15 // pred_fallthru
        _
      // Predicated region
      $region25: #{_lambda_.20} parent=15 // pred_check
        %p169 = pneg %p95
      $region26: #{_lambda_.20} parent=15 // pred_check_branch
        %171 = sbr.rel (%p169) target = $region28
      $region27: #{_lambda_.20} parent=15 // pred_region
        %p172 = scmp.lt.s32.totalorder %s16, 3
        %s173 = scalar_select %p172, %s16, 3
        %s174 = smul.addr %s173, 2
        %s175 = scalar_lea.vmem %s2, %s174
      $region28: #{_lambda_.20} parent=15 // pred_fallthru
        _
    $region16: #{_lambda_.20} parent=5 // pred_fallthru
      _
    %p176 = scmp.le.s32.totalorder 1, %s9
    %p177 = scmp.lt.s32.totalorder %s9, 5
    %p178 = pnand %p176, %p177
    %p179 = pneg %p178
    // Predicated region
    $region29: #{_lambda_.20} parent=5 // pred_check
      _
    $region30: #{_lambda_.20} parent=5 // pred_check_branch
      %181 = sbr.rel (%p178) target = $region32
    $region31: #{_lambda_.20} parent=5 // pred_region
      %s182 = ssub.s32 %s9, 1
      %s183 = smul.u32 4, %s19
      %p184 = scmp.lt.s32.totalorder %s18, 3
      %s185 = scalar_select %p184, %s18, 3
      %p186 = scmp.lt.s32.totalorder %s183, 3
      %s187 = scalar_select %p186, %s183, 3
      %s188 = smul.addr %s185, 4
      %s189 = sadd.s32 %s187, %s188
      %s190 = smul.addr %s189, 4
      %s191 = scalar_lea.vmem %s0, %s190
      %p192 = pneg %p49
      %p193 = pneg %p46
      %p194 = scmp.lt.s32.totalorder %s18, 3
      %s195 = scalar_select %p194, %s18, 3
      %s196 = smul.addr %s195, 32
      %s197 = smul.addr %s196, 4
      %s198 = scalar_lea.vmem %s1, %s197
      %p199 = pneg %p75
      %p200 = pneg %p72
      %p201 = scmp.lt.s32.totalorder %s18, 3
      %s202 = scalar_select %p201, %s18, 3
      %s203 = smul.addr %s202, 2
      %s204 = scalar_lea.vmem %s2, %s203
      %p205 = pneg %p101
      %p206 = pneg %p98
      %p207 = pneg %p129
      %p208 = pneg %p126
      %s209 = smul.u32 4, %s19
      %p210 = scmp.lt.s32.totalorder %s18, 3
      %s211 = scalar_select %p210, %s18, 3
      %p212 = scmp.lt.s32.totalorder %s209, 3
      %s213 = scalar_select %p212, %s209, 3
      %s214 = smul.addr %s213, 2
      %s215 = smul.addr %s211, 8
      %s216 = sadd.s32 %s214, %s215
      %s217 = smul.addr %s216, 8
      %s218 = scalar_lea.vmem %s3, %s217
      %s219 = smul.u32 4, %s19
      %p220 = scmp.lt.s32.totalorder %s18, 3
      %s221 = scalar_select %p220, %s18, 3
      %p222 = scmp.lt.s32.totalorder %s219, 3
      %s223 = scalar_select %p222, %s219, 3
      %s224 = smul.addr %s221, 4
      %s225 = sadd.s32 %s223, %s224
      %s226 = smul.addr %s225, 4
      %s227 = scalar_lea.vmem %s0, %s226
      %s228 = smul.u32 4, %s19
      %p229 = scmp.lt.s32.totalorder %s18, 3
      %s230 = scalar_select %p229, %s18, 3
      %s231 = smul.addr %s230, 32
      %s232 = smul.addr %s231, 4
      %s233 = scalar_lea.vmem %s1, %s232
      %p234 = scmp.lt.s32.totalorder %s18, 3
      %s235 = scalar_select %p234, %s18, 3
      %s236 = smul.addr %s235, 2
      %s237 = scalar_lea.vmem %s2, %s236
      %s238 = smul.u32 4, %s19
      %p239 = scmp.lt.s32.totalorder %s18, 3
      %s240 = scalar_select %p239, %s18, 3
      %p241 = scmp.lt.s32.totalorder %s238, 3
      %s242 = scalar_select %p241, %s238, 3
      %s243 = smul.addr %s242, 2
      %s244 = smul.addr %s240, 8
      %s245 = sadd.s32 %s243, %s244
      %s246 = smul.addr %s245, 8
      %s247 = scalar_lea.vmem %s3, %s246
      %s248 = smul.u32 4, %s19
      %v250 = vld [vmem:[%s227] sm:$0xf]
      %v251 = vld [vmem:[%s227 + $0x4] sm:$0xf]
      %v252 = vld [vmem:[%s227 + $0x8] sm:$0xf]
      %v253 = vld [vmem:[%s227 + $0xc] sm:$0xf]
      %v254 = vld [vmem:[%s233] sm:$0xff]
      %v255 = vld [vmem:[%s233 + $0x8] sm:$0xff]
      %v256 = vld [vmem:[%s233 + $0x10] sm:$0xff]
      %v257 = vld [vmem:[%s233 + $0x18] sm:$0xff]
      %v258 = vld [vmem:[%s233 + $0x20] sm:$0xff]
      %v259 = vld [vmem:[%s233 + $0x28] sm:$0xff]
      %v260 = vld [vmem:[%s233 + $0x30] sm:$0xff]
      %v261 = vld [vmem:[%s233 + $0x38] sm:$0xff]
      %v262 = vld [vmem:[%s233 + $0x40] sm:$0xff]
      %v263 = vld [vmem:[%s233 + $0x48] sm:$0xff]
      %v264 = vld [vmem:[%s233 + $0x50] sm:$0xff]
      %v265 = vld [vmem:[%s233 + $0x58] sm:$0xff]
      %v266 = vld [vmem:[%s233 + $0x60] sm:$0xff]
      %v267 = vld [vmem:[%s233 + $0x68] sm:$0xff]
      %v268 = vld [vmem:[%s233 + $0x70] sm:$0xff]
      %v269 = vld [vmem:[%s233 + $0x78] sm:$0xff]
      %v270 = vld [vmem:[%s237] sm:$0x3]
      %v272 = vlaneseq
      %v273 = vshrl.u32 %v272, 7
      %v274 = vsub.s32 0, %v273
      %v275 = vrot.slane %v270, %v274
      %v276 = vlaneseq
      %v277 = vshrl.u32 %v276, 7
      %v278 = vsub.s32 1, %v277
      %v279 = vrot.slane %v270, %v278
      %v286 = vunpack.c.l.b16 %v250
      %v287 = vunpack.c.l.b16 %v251
      %v288 = vunpack.c.l.b16 %v252
      %v289 = vunpack.c.l.b16 %v253
      %v290 = vpack.c.b16 %v287, %v286
      %v291 = vpack.c.b16 %v289, %v288
      %v310 = vunpack.c.l.b16 %v254
      %v311 = vunpack.c.h.b16 %v254
      %v312 = vunpack.c.l.b16 %v255
      %v313 = vunpack.c.h.b16 %v255
      %v314 = vunpack.c.l.b16 %v256
      %v315 = vunpack.c.h.b16 %v256
      %v316 = vunpack.c.l.b16 %v257
      %v317 = vunpack.c.h.b16 %v257
      %v318 = vunpack.c.l.b16 %v258
      %v319 = vunpack.c.h.b16 %v258
      %v320 = vunpack.c.l.b16 %v259
      %v321 = vunpack.c.h.b16 %v259
      %v322 = vunpack.c.l.b16 %v260
      %v323 = vunpack.c.h.b16 %v260
      %v324 = vunpack.c.l.b16 %v261
      %v325 = vunpack.c.h.b16 %v261
      %v326 = vunpack.c.l.b16 %v262
      %v327 = vunpack.c.h.b16 %v262
      %v328 = vunpack.c.l.b16 %v263
      %v329 = vunpack.c.h.b16 %v263
      %v330 = vunpack.c.l.b16 %v264
      %v331 = vunpack.c.h.b16 %v264
      %v332 = vunpack.c.l.b16 %v265
      %v333 = vunpack.c.h.b16 %v265
      %v334 = vunpack.c.l.b16 %v266
      %v335 = vunpack.c.h.b16 %v266
      %v336 = vunpack.c.l.b16 %v267
      %v337 = vunpack.c.h.b16 %v267
      %v338 = vunpack.c.l.b16 %v268
      %v339 = vunpack.c.h.b16 %v268
      %v340 = vunpack.c.l.b16 %v269
      %v341 = vunpack.c.h.b16 %v269
      %v342 = vpack.c.b16 %v312, %v310
      %v343 = vpack.c.b16 %v313, %v311
      %v344 = vpack.c.b16 %v316, %v314
      %v345 = vpack.c.b16 %v317, %v315
      %v346 = vpack.c.b16 %v320, %v318
      %v347 = vpack.c.b16 %v321, %v319
      %v348 = vpack.c.b16 %v324, %v322
      %v349 = vpack.c.b16 %v325, %v323
      %v350 = vpack.c.b16 %v328, %v326
      %v351 = vpack.c.b16 %v329, %v327
      %v352 = vpack.c.b16 %v332, %v330
      %v353 = vpack.c.b16 %v333, %v331
      %v354 = vpack.c.b16 %v336, %v334
      %v355 = vpack.c.b16 %v337, %v335
      %v356 = vpack.c.b16 %v340, %v338
      %v357 = vpack.c.b16 %v341, %v339
      %374 = vmatprep.subr.bf16.mxu0 %v357
      %375 = vmatpush1.bf16.msra.mxu0 %v356
      %376 = vmatprep.subr.bf16.mxu0 %v355
      %377 = vmatpush1.bf16.msra.mxu0 %v354
      %378 = vmatprep.subr.bf16.mxu0 %v353
      %379 = vmatpush1.bf16.msra.mxu0 %v352
      %380 = vmatprep.subr.bf16.mxu0 %v351
      %381 = vmatpush1.bf16.msra.mxu0 %v350
      %382 = vmatprep.subr.bf16.mxu0 %v349
      %383 = vmatpush1.bf16.msra.mxu0 %v348
      %384 = vmatprep.subr.bf16.mxu0 %v347
      %385 = vmatpush1.bf16.msra.mxu0 %v346
      %386 = vmatprep.subr.bf16.mxu0 %v345
      %387 = vmatpush1.bf16.msra.mxu0 %v344
      %388 = vmatprep.subr.bf16.mxu0 %v343
      %389 = vmatpush1.bf16.msra.mxu0 %v342
      %390 = vmatprep.subr.bf16.mxu0 0
      %391 = vmatpush2.bf16.msra.mxu0 0
      %392 = vmatprep.subr.bf16.mxu0 0
      %393 = vmatpush2.bf16.msra.mxu0 0
      %394 = vmatprep.subr.bf16.mxu0 0
      %395 = vmatpush2.bf16.msra.mxu0 0
      %396 = vmatprep.subr.bf16.mxu0 0
      %397 = vmatpush2.bf16.msra.mxu0 0
      %398 = vmatprep.subr.bf16.mxu0 0
      %399 = vmatpush2.bf16.msra.mxu0 0
      %400 = vmatprep.subr.bf16.mxu0 0
      %401 = vmatpush2.bf16.msra.mxu0 0
      %402 = vmatprep.subr.bf16.mxu0 0
      %403 = vmatpush2.bf16.msra.mxu0 0
      %404 = vmatprep.subr.bf16.mxu0 0
      %405 = vmatpush2.bf16.msra.mxu0 0
      %406 = vmatprep.mubr.bf16.mxu0 0
      %407 = vmatmul.mubr.bf16.gmra.mxu0 %v290
      %v408 = vpop.f32.mrf.mxu0
      %v409 = vadd.f32 %v275, %v408
      %v410 = vpop.f32.mrf.mxu0
      %v411 = vadd.f32 %v279, %v410
      %v412 = vpop.f32.mrf.mxu0
      %v413 = vadd.f32 %v275, %v412
      %v414 = vpop.f32.mrf.mxu0
      %v415 = vadd.f32 %v279, %v414
      %416 = vmatprep.mubr.bf16.mxu0 0
      %417 = vmatmul.mubr.bf16.gmra.mxu0 %v291
      %v418 = vpop.f32.mrf.mxu0
      %v419 = vadd.f32 %v275, %v418
      %v420 = vpop.f32.mrf.mxu0
      %v421 = vadd.f32 %v279, %v420
      %v422 = vpop.f32.mrf.mxu0
      %v423 = vadd.f32 %v275, %v422
      %v424 = vpop.f32.mrf.mxu0
      %v425 = vadd.f32 %v279, %v424
      %426 = vdwg.mxu0
      %vm427 = vcmp.gt.f32.partialorder %v409, 20.0
      %vm428 = vcmp.gt.f32.partialorder %v411, 20.0
      %vm429 = vcmp.gt.f32.partialorder %v413, 20.0
      %vm430 = vcmp.gt.f32.partialorder %v415, 20.0
      %vm431 = vcmp.gt.f32.partialorder %v419, 20.0
      %vm432 = vcmp.gt.f32.partialorder %v421, 20.0
      %vm433 = vcmp.gt.f32.partialorder %v423, 20.0
      %vm434 = vcmp.gt.f32.partialorder %v425, 20.0
      %v435 = vmin.f32 %v409, 20.0
      %v436 = vmin.f32 %v411, 20.0
      %v437 = vmin.f32 %v413, 20.0
      %v438 = vmin.f32 %v415, 20.0
      %v439 = vmin.f32 %v419, 20.0
      %v440 = vmin.f32 %v421, 20.0
      %v441 = vmin.f32 %v423, 20.0
      %v442 = vmin.f32 %v425, 20.0
      %v443 = vmul.f32 %v435, 1.442695
      %v444 = vpow.pop %v443
      %v445 = vmul.f32 %v436, 1.442695
      %v446 = vpow.pop %v445
      %v447 = vmul.f32 %v437, 1.442695
      %v448 = vpow.pop %v447
      %v449 = vmul.f32 %v438, 1.442695
      %v450 = vpow.pop %v449
      %v451 = vmul.f32 %v439, 1.442695
      %v452 = vpow.pop %v451
      %v453 = vmul.f32 %v440, 1.442695
      %v454 = vpow.pop %v453
      %v455 = vmul.f32 %v441, 1.442695
      %v456 = vpow.pop %v455
      %v457 = vmul.f32 %v442, 1.442695
      %v458 = vpow.pop %v457
      %v459 = vadd.f32 %v444, 1.0
      %v460 = vadd.f32 %v446, 1.0
      %v461 = vadd.f32 %v448, 1.0
      %v462 = vadd.f32 %v450, 1.0
      %v463 = vadd.f32 %v452, 1.0
      %v464 = vadd.f32 %v454, 1.0
      %v465 = vadd.f32 %v456, 1.0
      %v466 = vadd.f32 %v458, 1.0
      %v467 = vlog2.pop %v459
      %v468 = vmul.f32 %v467, 0.6931472
      %v469 = vlog2.pop %v460
      %v470 = vmul.f32 %v469, 0.6931472
      %v471 = vlog2.pop %v461
      %v472 = vmul.f32 %v471, 0.6931472
      %v473 = vlog2.pop %v462
      %v474 = vmul.f32 %v473, 0.6931472
      %v475 = vlog2.pop %v463
      %v476 = vmul.f32 %v475, 0.6931472
      %v477 = vlog2.pop %v464
      %v478 = vmul.f32 %v477, 0.6931472
      %v479 = vlog2.pop %v465
      %v480 = vmul.f32 %v479, 0.6931472
      %v481 = vlog2.pop %v466
      %v482 = vmul.f32 %v481, 0.6931472
      %v483 = vsel %vm427, %v409, %v468
      %v484 = vsel %vm428, %v411, %v470
      %v485 = vsel %vm429, %v413, %v472
      %v486 = vsel %vm430, %v415, %v474
      %v487 = vsel %vm431, %v419, %v476
      %v488 = vsel %vm432, %v421, %v478
      %v489 = vsel %vm433, %v423, %v480
      %v490 = vsel %vm434, %v425, %v482
      %491 = vst [vmem:[%s247] sm:$0xff] %v483
      %492 = vst [vmem:[%s247 + $0x8] sm:$0xff] %v484
      %493 = vst [vmem:[%s247 + $0x10] sm:$0xff] %v485
      %494 = vst [vmem:[%s247 + $0x18] sm:$0xff] %v486
      %495 = vst [vmem:[%s247 + $0x20] sm:$0xff] %v487
      %496 = vst [vmem:[%s247 + $0x28] sm:$0xff] %v488
      %497 = vst [vmem:[%s247 + $0x30] sm:$0xff] %v489
      %498 = vst [vmem:[%s247 + $0x38] sm:$0xff] %v490
      %s499 = smul.u32 4, %s19
      %p500 = scmp.lt.s32.totalorder %s18, 3
      %s501 = scalar_select %p500, %s18, 3
      %p502 = scmp.lt.s32.totalorder %s499, 3
      %s503 = scalar_select %p502, %s499, 3
      %s504 = smul.addr %s503, 2
      %s505 = smul.addr %s501, 8
      %s506 = sadd.s32 %s504, %s505
      %s507 = smul.addr %s506, 8
      %s508 = scalar_lea.vmem %s3, %s507
      // Predicated region
      $region33: #{_lambda_.20} parent=31 // pred_check
        %p509 = pneg %p126
      $region34: #{_lambda_.20} parent=31 // pred_check_branch
        %511 = sbr.rel (%p509) target = $region36
      $region35: #{_lambda_.20} parent=31 // pred_region
        %s512 = smul.u32 4, %s19
      $region36: #{_lambda_.20} parent=31 // pred_fallthru
        _
    $region32: #{_lambda_.20} parent=5 // pred_fallthru
      _
    %p513 = scmp.le.s32.totalorder 2, %s9
    // Predicated region
    $region37: #{_lambda_.20} parent=5 // pred_check
      %p514 = pneg %p513
    $region38: #{_lambda_.20} parent=5 // pred_check_branch
      %516 = sbr.rel (%p514) target = $region40
    $region39: #{_lambda_.20} parent=5 // pred_region
      %s517 = ssub.s32 %s9, 2
      // Predicated region
      $region41: #{_lambda_.20} parent=39 // pred_check
        %p518 = pneg %p132
      $region42: #{_lambda_.20} parent=39 // pred_check_branch
        %520 = sbr.rel (%p518) target = $region44
      $region43: #{_lambda_.20} parent=39 // pred_region
        %s521 = smul.u32 4, %s21
        %p522 = scmp.lt.s32.totalorder %s20, 3
        %s523 = scalar_select %p522, %s20, 3
        %p524 = scmp.lt.s32.totalorder %s521, 3
        %s525 = scalar_select %p524, %s521, 3
        %s526 = smul.addr %s525, 2
        %s527 = smul.addr %s523, 8
        %s528 = sadd.s32 %s526, %s527
        %s529 = smul.addr %s528, 8
        %s530 = scalar_lea.vmem %s3, %s529
      $region44: #{_lambda_.20} parent=39 // pred_fallthru
        _
    $region40: #{_lambda_.20} parent=5 // pred_fallthru
      _
  $region6: #{_lambda_.20} parent=0 // loop_footer
    %s13 = sadd.s32 1, %s9
  $region7: #{_lambda_.20} parent=0 // loop_footer_branch
    %8 = sbr.rel target = $region3
  $region8: #{_lambda_.20} parent=0 // loop_exit
    _

// kernel: _lambda_.22
$region0: #{_lambda_.22}
  #allocation0 [shape = 'u32[]', space=smem, size = 0x4, offset = 0x4, fixed_abs, tag = 'smem constant byte address 0x4 - core index']
  #allocation1 [shape = 'u32[144,128]{1,0:T(1,128)}', space=vmem, size = 0x12000, scoped, tag = 'internal scratch']
  %s0 = inlined_call_operand.vmem [shape: f32[32,192], index: 0, kind: input, shape index: {}]
  %s1 = inlined_call_operand.vmem [shape: f32[1,192], index: 1, kind: input, shape index: {}]
  %s2 = inlined_call_operand.vmem [shape: f32[1,192], index: 2, kind: input, shape index: {}]
  %s3 = inlined_call_operand.vmem [shape: f32[32,192], index: 3, kind: output, shape index: {}]
  %s4 = sld [smem:[#allocation0]]
  $region22: #{_lambda_.22} parent=0
    _
  %s6 = ssub.s32 1, %s4
  %s7 = scalar_select 0, %s6, %s4
  // Predicated region
  $region2: #{_lambda_.22} parent=0 // pred_check
    _
  $region3: #{_lambda_.22} parent=0 // pred_check_branch
    %9 = sbr.rel (0) target = $region5
  $region4: #{_lambda_.22} parent=0 // pred_region
    _
  $region5: #{_lambda_.22} parent=0 // pred_fallthru
    _
  // Predicated region
  $region6: #{_lambda_.22} parent=0 // pred_check
    _
  $region7: #{_lambda_.22} parent=0 // pred_check_branch
    %11 = sbr.rel (0) target = $region9
  $region8: #{_lambda_.22} parent=0 // pred_region
    _
  $region9: #{_lambda_.22} parent=0 // pred_fallthru
    _
  // Predicated region
  $region10: #{_lambda_.22} parent=0 // pred_check
    _
  $region11: #{_lambda_.22} parent=0 // pred_check_branch
    %13 = sbr.rel (0) target = $region13
  $region12: #{_lambda_.22} parent=0 // pred_region
    _
  $region13: #{_lambda_.22} parent=0 // pred_fallthru
    _
  %v14 = vld [vmem:[%s0] sm:$0xff]
  %v15 = vld [vmem:[%s0 + $0x8] sm:$0xff]
  %v16 = vld [vmem:[%s0 + $0x10] sm:$0xff]
  %v17 = vld [vmem:[%s0 + $0x18] sm:$0xff]
  %v18 = vld [vmem:[%s0 + $0x20] sm:$0xff]
  %v19 = vld [vmem:[%s0 + $0x28] sm:$0xff]
  %v20 = vld [vmem:[%s0 + $0x30] sm:$0xff]
  %v21 = vld [vmem:[%s0 + $0x38] sm:$0xff]
  %vm22 = vcmask 523264
  %v23 = vsel %vm22, %v15, 0.0
  %v24 = vadd.f32 %v14, %v23
  %25 = vadd.xlane.f32.xlu0 %v24
  %v26 = vpop.xlane.xlu0 %25
  %v27 = vsel %vm22, %v17, 0.0
  %v28 = vadd.f32 %v16, %v27
  %29 = vadd.xlane.f32.xlu0 %v28
  %v30 = vpop.xlane.xlu0 %29
  %v31 = vsel %vm22, %v19, 0.0
  %v32 = vadd.f32 %v18, %v31
  %33 = vadd.xlane.f32.xlu0 %v32
  %v34 = vpop.xlane.xlu0 %33
  %v35 = vsel %vm22, %v21, 0.0
  %v36 = vadd.f32 %v20, %v35
  %37 = vadd.xlane.f32.xlu0 %v36
  %v38 = vpop.xlane.xlu0 %37
  %v39 = vrcp.pop 192.0
  %v40 = vmul.f32 %v26, %v39
  %v41 = vmul.f32 %v30, %v39
  %v42 = vmul.f32 %v34, %v39
  %v43 = vmul.f32 %v38, %v39
  %v44 = vsub.f32 %v14, %v40
  %v45 = vsub.f32 %v15, %v40
  %v46 = vsub.f32 %v16, %v41
  %v47 = vsub.f32 %v17, %v41
  %v48 = vsub.f32 %v18, %v42
  %v49 = vsub.f32 %v19, %v42
  %v50 = vsub.f32 %v20, %v43
  %v51 = vsub.f32 %v21, %v43
  %v52 = vmul.f32 %v44, %v44
  %v53 = vmul.f32 %v45, %v45
  %v54 = vmul.f32 %v46, %v46
  %v55 = vmul.f32 %v47, %v47
  %v56 = vmul.f32 %v48, %v48
  %v57 = vmul.f32 %v49, %v49
  %v58 = vmul.f32 %v50, %v50
  %v59 = vmul.f32 %v51, %v51
  %v60 = vsel %vm22, %v53, 0.0
  %v61 = vadd.f32 %v52, %v60
  %62 = vadd.xlane.f32.xlu0 %v61
  %v63 = vpop.xlane.xlu0 %62
  %v64 = vsel %vm22, %v55, 0.0
  %v65 = vadd.f32 %v54, %v64
  %66 = vadd.xlane.f32.xlu0 %v65
  %v67 = vpop.xlane.xlu0 %66
  %v68 = vsel %vm22, %v57, 0.0
  %v69 = vadd.f32 %v56, %v68
  %70 = vadd.xlane.f32.xlu0 %v69
  %v71 = vpop.xlane.xlu0 %70
  %v72 = vsel %vm22, %v59, 0.0
  %v73 = vadd.f32 %v58, %v72
  %74 = vadd.xlane.f32.xlu0 %v73
  %v75 = vpop.xlane.xlu0 %74
  %v76 = vmul.f32 %v63, %v39
  %v77 = vmul.f32 %v67, %v39
  %v78 = vmul.f32 %v71, %v39
  %v79 = vmul.f32 %v75, %v39
  %v80 = vadd.f32 %v76, 1e-05
  %v81 = vadd.f32 %v77, 1e-05
  %v82 = vadd.f32 %v78, 1e-05
  %v83 = vadd.f32 %v79, 1e-05
  %v84 = vrsqrt.pop %v80
  %v85 = vrsqrt.pop %v81
  %v86 = vrsqrt.pop %v82
  %v87 = vrsqrt.pop %v83
  %v88 = vmul.f32 %v44, %v84
  %v89 = vmul.f32 %v45, %v84
  %v90 = vmul.f32 %v46, %v85
  %v91 = vmul.f32 %v47, %v85
  %v92 = vmul.f32 %v48, %v86
  %v93 = vmul.f32 %v49, %v86
  %v94 = vmul.f32 %v50, %v87
  %v95 = vmul.f32 %v51, %v87
  %v96 = vld [vmem:[%s1] sm:$0x3]
  %v98 = vlaneseq
  %v99 = vshrl.u32 %v98, 7
  %v100 = vsub.s32 0, %v99
  %v101 = vrot.slane %v96, %v100
  %v102 = vlaneseq
  %v103 = vshrl.u32 %v102, 7
  %v104 = vsub.s32 1, %v103
  %v105 = vrot.slane %v96, %v104
  %v108 = vmul.f32 %v88, %v101
  %v109 = vmul.f32 %v89, %v105
  %v110 = vmul.f32 %v90, %v101
  %v111 = vmul.f32 %v91, %v105
  %v112 = vmul.f32 %v92, %v101
  %v113 = vmul.f32 %v93, %v105
  %v114 = vmul.f32 %v94, %v101
  %v115 = vmul.f32 %v95, %v105
  %v116 = vld [vmem:[%s2] sm:$0x3]
  %v118 = vlaneseq
  %v119 = vshrl.u32 %v118, 7
  %v120 = vsub.s32 0, %v119
  %v121 = vrot.slane %v116, %v120
  %v122 = vlaneseq
  %v123 = vshrl.u32 %v122, 7
  %v124 = vsub.s32 1, %v123
  %v125 = vrot.slane %v116, %v124
  %v128 = vadd.f32 %v108, %v121
  %v129 = vadd.f32 %v109, %v125
  %v130 = vadd.f32 %v110, %v121
  %v131 = vadd.f32 %v111, %v125
  %v132 = vadd.f32 %v112, %v121
  %v133 = vadd.f32 %v113, %v125
  %v134 = vadd.f32 %v114, %v121
  %v135 = vadd.f32 %v115, %v125
  %136 = vst [vmem:[%s3] sm:$0xff] %v128
  %137 = vst.msk [vmem:[%s3 + $0x8] sm:$0xff] %vm22, %v129
  %138 = vst [vmem:[%s3 + $0x10] sm:$0xff] %v130
  %139 = vst.msk [vmem:[%s3 + $0x18] sm:$0xff] %vm22, %v131
  %140 = vst [vmem:[%s3 + $0x20] sm:$0xff] %v132
  %141 = vst.msk [vmem:[%s3 + $0x28] sm:$0xff] %vm22, %v133
  %142 = vst [vmem:[%s3 + $0x30] sm:$0xff] %v134
  %143 = vst.msk [vmem:[%s3 + $0x38] sm:$0xff] %vm22, %v135
  // Predicated region
  $region14: #{_lambda_.22} parent=0 // pred_check
    _
  $region15: #{_lambda_.22} parent=0 // pred_check_branch
    %145 = sbr.rel (0) target = $region17
  $region16: #{_lambda_.22} parent=0 // pred_region
    _
  $region17: #{_lambda_.22} parent=0 // pred_fallthru
    _
  // Predicated region
  $region18: #{_lambda_.22} parent=0 // pred_check
    _
  $region19: #{_lambda_.22} parent=0 // pred_check_branch
    %147 = sbr.rel (0) target = $region21
  $region20: #{_lambda_.22} parent=0 // pred_region
    _
  $region21: #{_lambda_.22} parent=0 // pred_fallthru
    _

// kernel: _lambda_.21
$region0: #{_lambda_.21}
  #allocation0 [shape = 'u32[]', space=smem, size = 0x4, offset = 0x4, fixed_abs, tag = 'smem constant byte address 0x4 - core index']
  #allocation1 [shape = 'u32[144,128]{1,0:T(1,128)}', space=vmem, size = 0x12000, scoped, tag = 'internal scratch']
  #allocation2 [shape = 'f32[8,16,192]{2,1,0:T(8,128)}', space=vmem, size = 0x20000, scoped, tag = 'scratch operand']
  %s0 = inlined_call_operand.vmem [shape: f32[8,16,192], index: 0, kind: input, shape index: {}]
  %s1 = inlined_call_operand.vmem [shape: f32[8,16,192], index: 1, kind: input, shape index: {}]
  %s2 = inlined_call_operand.vmem [shape: f32[8,16,192], index: 2, kind: input, shape index: {}]
  %s3 = inlined_call_operand.vmem [shape: f32[8,16,16], index: 3, kind: input, shape index: {}]
  %s4 = inlined_call_operand.vmem [shape: f32[8,16,16], index: 4, kind: input, shape index: {}]
  %s5 = inlined_call_operand.vmem [shape: f32[8,1,192], index: 5, kind: input, shape index: {}]
  %s6 = inlined_call_operand.vmem [shape: f32[8,16,192], index: 6, kind: output, shape index: {}]
  %s7 = sld [smem:[#allocation0]]
  $region41: #{_lambda_.21} parent=0
    _
  %s9 = ssub.s32 1, %s7
  %s10 = scalar_select 0, %s9, %s7
  // Predicated region
  $region2: #{_lambda_.21} parent=0 // pred_check
    _
  $region3: #{_lambda_.21} parent=0 // pred_check_branch
    %12 = sbr.rel (0) target = $region5
  $region4: #{_lambda_.21} parent=0 // pred_region
    _
  $region5: #{_lambda_.21} parent=0 // pred_fallthru
    _
  // Predicated region
  $region6: #{_lambda_.21} parent=0 // pred_check
    _
  $region7: #{_lambda_.21} parent=0 // pred_check_branch
    %14 = sbr.rel (0) target = $region9
  $region8: #{_lambda_.21} parent=0 // pred_region
    _
  $region9: #{_lambda_.21} parent=0 // pred_fallthru
    _
  // Predicated region
  $region10: #{_lambda_.21} parent=0 // pred_check
    _
  $region11: #{_lambda_.21} parent=0 // pred_check_branch
    %16 = sbr.rel (0) target = $region13
  $region12: #{_lambda_.21} parent=0 // pred_region
    _
  $region13: #{_lambda_.21} parent=0 // pred_fallthru
    _
  // Predicated region
  $region14: #{_lambda_.21} parent=0 // pred_check
    _
  $region15: #{_lambda_.21} parent=0 // pred_check_branch
    %18 = sbr.rel (0) target = $region17
  $region16: #{_lambda_.21} parent=0 // pred_region
    _
  $region17: #{_lambda_.21} parent=0 // pred_fallthru
    _
  // Predicated region
  $region18: #{_lambda_.21} parent=0 // pred_check
    _
  $region19: #{_lambda_.21} parent=0 // pred_check_branch
    %20 = sbr.rel (0) target = $region21
  $region20: #{_lambda_.21} parent=0 // pred_region
    _
  $region21: #{_lambda_.21} parent=0 // pred_fallthru
    _
  // Predicated region
  $region22: #{_lambda_.21} parent=0 // pred_check
    _
  $region23: #{_lambda_.21} parent=0 // pred_check_branch
    %22 = sbr.rel (0) target = $region25
  $region24: #{_lambda_.21} parent=0 // pred_region
    _
  $region25: #{_lambda_.21} parent=0 // pred_fallthru
    _
  %23 = vst [vmem:[#allocation2] sm:$0xff] 0.0
  %vm24 = vcmask 523264
  %25 = vst.msk [vmem:[#allocation2 + $0x8] sm:$0xff] %vm24, 0.0
  %26 = vst [vmem:[#allocation2 + $0x10] sm:$0xff] 0.0
  %27 = vst.msk [vmem:[#allocation2 + $0x18] sm:$0xff] %vm24, 0.0
  %28 = vst [vmem:[#allocation2 + $0x20] sm:$0xff] 0.0
  %29 = vst.msk [vmem:[#allocation2 + $0x28] sm:$0xff] %vm24, 0.0
  %30 = vst [vmem:[#allocation2 + $0x30] sm:$0xff] 0.0
  %31 = vst.msk [vmem:[#allocation2 + $0x38] sm:$0xff] %vm24, 0.0
  %32 = vst [vmem:[#allocation2 + $0x40] sm:$0xff] 0.0
  %33 = vst.msk [vmem:[#allocation2 + $0x48] sm:$0xff] %vm24, 0.0
  %34 = vst [vmem:[#allocation2 + $0x50] sm:$0xff] 0.0
  %35 = vst.msk [vmem:[#allocation2 + $0x58] sm:$0xff] %vm24, 0.0
  %36 = vst [vmem:[#allocation2 + $0x60] sm:$0xff] 0.0
  %37 = vst.msk [vmem:[#allocation2 + $0x68] sm:$0xff] %vm24, 0.0
  %38 = vst [vmem:[#allocation2 + $0x70] sm:$0xff] 0.0
  %39 = vst.msk [vmem:[#allocation2 + $0x78] sm:$0xff] %vm24, 0.0
  %40 = vst [vmem:[#allocation2 + $0x80] sm:$0xff] 0.0
  %41 = vst.msk [vmem:[#allocation2 + $0x88] sm:$0xff] %vm24, 0.0
  %42 = vst [vmem:[#allocation2 + $0x90] sm:$0xff] 0.0
  %43 = vst.msk [vmem:[#allocation2 + $0x98] sm:$0xff] %vm24, 0.0
  %44 = vst [vmem:[#allocation2 + $0xa0] sm:$0xff] 0.0
  %45 = vst.msk [vmem:[#allocation2 + $0xa8] sm:$0xff] %vm24, 0.0
  %46 = vst [vmem:[#allocation2 + $0xb0] sm:$0xff] 0.0
  %47 = vst.msk [vmem:[#allocation2 + $0xb8] sm:$0xff] %vm24, 0.0
  %48 = vst [vmem:[#allocation2 + $0xc0] sm:$0xff] 0.0
  %49 = vst.msk [vmem:[#allocation2 + $0xc8] sm:$0xff] %vm24, 0.0
  %50 = vst [vmem:[#allocation2 + $0xd0] sm:$0xff] 0.0
  %51 = vst.msk [vmem:[#allocation2 + $0xd8] sm:$0xff] %vm24, 0.0
  %52 = vst [vmem:[#allocation2 + $0xe0] sm:$0xff] 0.0
  %53 = vst.msk [vmem:[#allocation2 + $0xe8] sm:$0xff] %vm24, 0.0
  %54 = vst [vmem:[#allocation2 + $0xf0] sm:$0xff] 0.0
  %55 = vst.msk [vmem:[#allocation2 + $0xf8] sm:$0xff] %vm24, 0.0
  %v56 = vld [vmem:[%s2] sm:$0xff]
  %v57 = vld [vmem:[%s2 + $0x8] sm:$0xff]
  %v58 = vld [vmem:[%s2 + $0x10] sm:$0xff]
  %v59 = vld [vmem:[%s2 + $0x18] sm:$0xff]
  %v60 = vld [vmem:[%s2 + $0x20] sm:$0xff]
  %v61 = vld [vmem:[%s2 + $0x28] sm:$0xff]
  %v62 = vld [vmem:[%s2 + $0x30] sm:$0xff]
  %v63 = vld [vmem:[%s2 + $0x38] sm:$0xff]
  %v64 = vld [vmem:[%s2 + $0x40] sm:$0xff]
  %v65 = vld [vmem:[%s2 + $0x48] sm:$0xff]
  %v66 = vld [vmem:[%s2 + $0x50] sm:$0xff]
  %v67 = vld [vmem:[%s2 + $0x58] sm:$0xff]
  %v68 = vld [vmem:[%s2 + $0x60] sm:$0xff]
  %v69 = vld [vmem:[%s2 + $0x68] sm:$0xff]
  %v70 = vld [vmem:[%s2 + $0x70] sm:$0xff]
  %v71 = vld [vmem:[%s2 + $0x78] sm:$0xff]
  %v72 = vld [vmem:[%s2 + $0x80] sm:$0xff]
  %v73 = vld [vmem:[%s2 + $0x88] sm:$0xff]
  %v74 = vld [vmem:[%s2 + $0x90] sm:$0xff]
  %v75 = vld [vmem:[%s2 + $0x98] sm:$0xff]
  %v76 = vld [vmem:[%s2 + $0xa0] sm:$0xff]
  %v77 = vld [vmem:[%s2 + $0xa8] sm:$0xff]
  %v78 = vld [vmem:[%s2 + $0xb0] sm:$0xff]
  %v79 = vld [vmem:[%s2 + $0xb8] sm:$0xff]
  %v80 = vld [vmem:[%s2 + $0xc0] sm:$0xff]
  %v81 = vld [vmem:[%s2 + $0xc8] sm:$0xff]
  %v82 = vld [vmem:[%s2 + $0xd0] sm:$0xff]
  %v83 = vld [vmem:[%s2 + $0xd8] sm:$0xff]
  %v84 = vld [vmem:[%s2 + $0xe0] sm:$0xff]
  %v85 = vld [vmem:[%s2 + $0xe8] sm:$0xff]
  %v86 = vld [vmem:[%s2 + $0xf0] sm:$0xff]
  %v87 = vld [vmem:[%s2 + $0xf8] sm:$0xff]
  %v88 = vld [vmem:[%s5] sm:$0x3]
  %v89 = vld [vmem:[%s5 + $0x2] sm:$0x3]
  %v90 = vld [vmem:[%s5 + $0x4] sm:$0x3]
  %v91 = vld [vmem:[%s5 + $0x6] sm:$0x3]
  %v92 = vld [vmem:[%s5 + $0x8] sm:$0x3]
  %v93 = vld [vmem:[%s5 + $0xa] sm:$0x3]
  %v94 = vld [vmem:[%s5 + $0xc] sm:$0x3]
  %v95 = vld [vmem:[%s5 + $0xe] sm:$0x3]
  loop: start=0, step=1, limit=16
  $region26: #{_lambda_.21} parent=0 // loop_pre_header
    _
  $region27: #{_lambda_.21} parent=0 // loop_header
    %s97 = sphi 0, %s101
    %p98 = scmp.ge.s32.totalorder %s97, 16
  $region28: #{_lambda_.21} parent=0 // loop_header_branch
    %100 = sbr.rel (%p98) target = $region32
  $region29: #{_lambda_.21} parent=0 // loop_body
    %s102 = sshra.s32 %s97, 3
    %s103 = sand.u32 %s97, 7
    %s104 = sshra.s32 %s97, 3
    %s105 = sand.u32 %s97, 7
    %s106 = smul.u32 %s102, 2
    %s107 = smul.u32 %s106, 8
    %s108 = sadd.s32 %s107, %s105
    %s109 = scalar_lea.vmem %s0, %s108
    %v110 = vld [vmem:[%s109] ss:$8 sm:$0x3]
    %s111 = sadd.s32 32, %s108
    %s112 = scalar_lea.vmem %s0, %s111
    %v113 = vld [vmem:[%s112] ss:$8 sm:$0x3]
    %s114 = sadd.s32 64, %s108
    %s115 = scalar_lea.vmem %s0, %s114
    %v116 = vld [vmem:[%s115] ss:$8 sm:$0x3]
    %s117 = sadd.s32 96, %s108
    %s118 = scalar_lea.vmem %s0, %s117
    %v119 = vld [vmem:[%s118] ss:$8 sm:$0x3]
    %s120 = sadd.s32 128, %s108
    %s121 = scalar_lea.vmem %s0, %s120
    %v122 = vld [vmem:[%s121] ss:$8 sm:$0x3]
    %s123 = sadd.s32 160, %s108
    %s124 = scalar_lea.vmem %s0, %s123
    %v125 = vld [vmem:[%s124] ss:$8 sm:$0x3]
    %s126 = sadd.s32 192, %s108
    %s127 = scalar_lea.vmem %s0, %s126
    %v128 = vld [vmem:[%s127] ss:$8 sm:$0x3]
    %s129 = sadd.s32 224, %s108
    %s130 = scalar_lea.vmem %s0, %s129
    %v131 = vld [vmem:[%s130] ss:$8 sm:$0x3]
    %s132 = scalar_lea.vmem %s1, %s108
    %v133 = vld [vmem:[%s132] ss:$8 sm:$0x3]
    %s134 = scalar_lea.vmem %s1, %s111
    %v135 = vld [vmem:[%s134] ss:$8 sm:$0x3]
    %s136 = scalar_lea.vmem %s1, %s114
    %v137 = vld [vmem:[%s136] ss:$8 sm:$0x3]
    %s138 = scalar_lea.vmem %s1, %s117
    %v139 = vld [vmem:[%s138] ss:$8 sm:$0x3]
    %s140 = scalar_lea.vmem %s1, %s120
    %v141 = vld [vmem:[%s140] ss:$8 sm:$0x3]
    %s142 = scalar_lea.vmem %s1, %s123
    %v143 = vld [vmem:[%s142] ss:$8 sm:$0x3]
    %s144 = scalar_lea.vmem %s1, %s126
    %v145 = vld [vmem:[%s144] ss:$8 sm:$0x3]
    %s146 = scalar_lea.vmem %s1, %s129
    %v147 = vld [vmem:[%s146] ss:$8 sm:$0x3]
    %s148 = scalar_lea.vmem %s3, %s97
    %v149 = vld [vmem:[%s148] sm:$0x1]
    %v150 = vld [vmem:[%s148 + $0x10] sm:$0x1]
    %v151 = vld [vmem:[%s148 + $0x20] sm:$0x1]
    %v152 = vld [vmem:[%s148 + $0x30] sm:$0x1]
    %v153 = vld [vmem:[%s148 + $0x40] sm:$0x1]
    %v154 = vld [vmem:[%s148 + $0x50] sm:$0x1]
    %v155 = vld [vmem:[%s148 + $0x60] sm:$0x1]
    %v156 = vld [vmem:[%s148 + $0x70] sm:$0x1]
    %s157 = scalar_lea.vmem %s4, %s97
    %v158 = vld [vmem:[%s157] sm:$0x1]
    %v159 = vld [vmem:[%s157 + $0x10] sm:$0x1]
    %v160 = vld [vmem:[%s157 + $0x20] sm:$0x1]
    %v161 = vld [vmem:[%s157 + $0x30] sm:$0x1]
    %v162 = vld [vmem:[%s157 + $0x40] sm:$0x1]
    %v163 = vld [vmem:[%s157 + $0x50] sm:$0x1]
    %v164 = vld [vmem:[%s157 + $0x60] sm:$0x1]
    %v165 = vld [vmem:[%s157 + $0x70] sm:$0x1]
    %v166 = vmul.f32 %v133, %v110
    %v167 = vmul.f32 %v135, %v113
    %v168 = vmul.f32 %v137, %v116
    %v169 = vmul.f32 %v139, %v119
    %v170 = vmul.f32 %v141, %v122
    %v171 = vmul.f32 %v143, %v125
    %v172 = vmul.f32 %v145, %v128
    %v173 = vmul.f32 %v147, %v131
    %v182 = vlaneseq
    %v183 = vshrl.u32 %v182, 7
    %v184 = vsub.s32 0, %v183
    %v185 = vrot.slane %v133, %v184
    %v186 = vlaneseq
    %v187 = vshrl.u32 %v186, 7
    %v188 = vsub.s32 1, %v187
    %v189 = vrot.slane %v133, %v188
    %v190 = vlaneseq
    %v191 = vshrl.u32 %v190, 7
    %v192 = vsub.s32 0, %v191
    %v193 = vrot.slane %v135, %v192
    %v194 = vlaneseq
    %v195 = vshrl.u32 %v194, 7
    %v196 = vsub.s32 1, %v195
    %v197 = vrot.slane %v135, %v196
    %v198 = vlaneseq
    %v199 = vshrl.u32 %v198, 7
    %v200 = vsub.s32 0, %v199
    %v201 = vrot.slane %v137, %v200
    %v202 = vlaneseq
    %v203 = vshrl.u32 %v202, 7
    %v204 = vsub.s32 1, %v203
    %v205 = vrot.slane %v137, %v204
    %v206 = vlaneseq
    %v207 = vshrl.u32 %v206, 7
    %v208 = vsub.s32 0, %v207
    %v209 = vrot.slane %v139, %v208
    %v210 = vlaneseq
    %v211 = vshrl.u32 %v210, 7
    %v212 = vsub.s32 1, %v211
    %v213 = vrot.slane %v139, %v212
    %v214 = vlaneseq
    %v215 = vshrl.u32 %v214, 7
    %v216 = vsub.s32 0, %v215
    %v217 = vrot.slane %v141, %v216
    %v218 = vlaneseq
    %v219 = vshrl.u32 %v218, 7
    %v220 = vsub.s32 1, %v219
    %v221 = vrot.slane %v141, %v220
    %v222 = vlaneseq
    %v223 = vshrl.u32 %v222, 7
    %v224 = vsub.s32 0, %v223
    %v225 = vrot.slane %v143, %v224
    %v226 = vlaneseq
    %v227 = vshrl.u32 %v226, 7
    %v228 = vsub.s32 1, %v227
    %v229 = vrot.slane %v143, %v228
    %v230 = vlaneseq
    %v231 = vshrl.u32 %v230, 7
    %v232 = vsub.s32 0, %v231
    %v233 = vrot.slane %v145, %v232
    %v234 = vlaneseq
    %v235 = vshrl.u32 %v234, 7
    %v236 = vsub.s32 1, %v235
    %v237 = vrot.slane %v145, %v236
    %v238 = vlaneseq
    %v239 = vshrl.u32 %v238, 7
    %v240 = vsub.s32 0, %v239
    %v241 = vrot.slane %v147, %v240
    %v242 = vlaneseq
    %v243 = vshrl.u32 %v242, 7
    %v244 = vsub.s32 1, %v243
    %v245 = vrot.slane %v147, %v244
    %v262 = vmul.f32 %v185, %v56
    %v263 = vmul.f32 %v189, %v57
    %v264 = vmul.f32 %v185, %v58
    %v265 = vmul.f32 %v189, %v59
    %v266 = vmul.f32 %v193, %v60
    %v267 = vmul.f32 %v197, %v61
    %v268 = vmul.f32 %v193, %v62
    %v269 = vmul.f32 %v197, %v63
    %v270 = vmul.f32 %v201, %v64
    %v271 = vmul.f32 %v205, %v65
    %v272 = vmul.f32 %v201, %v66
    %v273 = vmul.f32 %v205, %v67
    %v274 = vmul.f32 %v209, %v68
    %v275 = vmul.f32 %v213, %v69
    %v276 = vmul.f32 %v209, %v70
    %v277 = vmul.f32 %v213, %v71
    %v278 = vmul.f32 %v217, %v72
    %v279 = vmul.f32 %v221, %v73
    %v280 = vmul.f32 %v217, %v74
    %v281 = vmul.f32 %v221, %v75
    %v282 = vmul.f32 %v225, %v76
    %v283 = vmul.f32 %v229, %v77
    %v284 = vmul.f32 %v225, %v78
    %v285 = vmul.f32 %v229, %v79
    %v286 = vmul.f32 %v233, %v80
    %v287 = vmul.f32 %v237, %v81
    %v288 = vmul.f32 %v233, %v82
    %v289 = vmul.f32 %v237, %v83
    %v290 = vmul.f32 %v241, %v84
    %v291 = vmul.f32 %v245, %v85
    %v292 = vmul.f32 %v241, %v86
    %v293 = vmul.f32 %v245, %v87
    %v294 = vmul.f32 %v262, 1.442695
    %v295 = vpow.pop %v294
    %v296 = vmul.f32 %v263, 1.442695
    %v297 = vpow.pop %v296
    %v298 = vmul.f32 %v264, 1.442695
    %v299 = vpow.pop %v298
    %v300 = vmul.f32 %v265, 1.442695
    %v301 = vpow.pop %v300
    %v302 = vmul.f32 %v266, 1.442695
    %v303 = vpow.pop %v302
    %v304 = vmul.f32 %v267, 1.442695
    %v305 = vpow.pop %v304
    %v306 = vmul.f32 %v268, 1.442695
    %v307 = vpow.pop %v306
    %v308 = vmul.f32 %v269, 1.442695
    %v309 = vpow.pop %v308
    %v310 = vmul.f32 %v270, 1.442695
    %v311 = vpow.pop %v310
    %v312 = vmul.f32 %v271, 1.442695
    %v313 = vpow.pop %v312
    %v314 = vmul.f32 %v272, 1.442695
    %v315 = vpow.pop %v314
    %v316 = vmul.f32 %v273, 1.442695
    %v317 = vpow.pop %v316
    %v318 = vmul.f32 %v274, 1.442695
    %v319 = vpow.pop %v318
    %v320 = vmul.f32 %v275, 1.442695
    %v321 = vpow.pop %v320
    %v322 = vmul.f32 %v276, 1.442695
    %v323 = vpow.pop %v322
    %v324 = vmul.f32 %v277, 1.442695
    %v325 = vpow.pop %v324
    %v326 = vmul.f32 %v278, 1.442695
    %v327 = vpow.pop %v326
    %v328 = vmul.f32 %v279, 1.442695
    %v329 = vpow.pop %v328
    %v330 = vmul.f32 %v280, 1.442695
    %v331 = vpow.pop %v330
    %v332 = vmul.f32 %v281, 1.442695
    %v333 = vpow.pop %v332
    %v334 = vmul.f32 %v282, 1.442695
    %v335 = vpow.pop %v334
    %v336 = vmul.f32 %v283, 1.442695
    %v337 = vpow.pop %v336
    %v338 = vmul.f32 %v284, 1.442695
    %v339 = vpow.pop %v338
    %v340 = vmul.f32 %v285, 1.442695
    %v341 = vpow.pop %v340
    %v342 = vmul.f32 %v286, 1.442695
    %v343 = vpow.pop %v342
    %v344 = vmul.f32 %v287, 1.442695
    %v345 = vpow.pop %v344
    %v346 = vmul.f32 %v288, 1.442695
    %v347 = vpow.pop %v346
    %v348 = vmul.f32 %v289, 1.442695
    %v349 = vpow.pop %v348
    %v350 = vmul.f32 %v290, 1.442695
    %v351 = vpow.pop %v350
    %v352 = vmul.f32 %v291, 1.442695
    %v353 = vpow.pop %v352
    %v354 = vmul.f32 %v292, 1.442695
    %v355 = vpow.pop %v354
    %v356 = vmul.f32 %v293, 1.442695
    %v357 = vpow.pop %v356
    %v358 = vlaneseq
    %v359 = vshrl.u32 %v358, 7
    %v360 = vsub.s32 0, %v359
    %v361 = vrot.slane %v149, %v360
    %363 = vbcast.lane.b32.xlu0 %v361, 256
    %v364 = vpop.permute.xlu0 %363
    %s366 = sor.u32 256, 8
    %367 = vbcast.lane.b32.xlu0 %v361, %s366
    %v368 = vpop.permute.xlu0 %367
    %v369 = vlaneseq
    %v370 = vshrl.u32 %v369, 7
    %v371 = vsub.s32 0, %v370
    %v372 = vrot.slane %v150, %v371
    %374 = vbcast.lane.b32.xlu0 %v372, 256
    %v375 = vpop.permute.xlu0 %374
    %s377 = sor.u32 256, 8
    %378 = vbcast.lane.b32.xlu0 %v372, %s377
    %v379 = vpop.permute.xlu0 %378
    %v380 = vlaneseq
    %v381 = vshrl.u32 %v380, 7
    %v382 = vsub.s32 0, %v381
    %v383 = vrot.slane %v151, %v382
    %385 = vbcast.lane.b32.xlu0 %v383, 256
    %v386 = vpop.permute.xlu0 %385
    %s388 = sor.u32 256, 8
    %389 = vbcast.lane.b32.xlu0 %v383, %s388
    %v390 = vpop.permute.xlu0 %389
    %v391 = vlaneseq
    %v392 = vshrl.u32 %v391, 7
    %v393 = vsub.s32 0, %v392
    %v394 = vrot.slane %v152, %v393
    %396 = vbcast.lane.b32.xlu0 %v394, 256
    %v397 = vpop.permute.xlu0 %396
    %s399 = sor.u32 256, 8
    %400 = vbcast.lane.b32.xlu0 %v394, %s399
    %v401 = vpop.permute.xlu0 %400
    %v402 = vlaneseq
    %v403 = vshrl.u32 %v402, 7
    %v404 = vsub.s32 0, %v403
    %v405 = vrot.slane %v153, %v404
    %407 = vbcast.lane.b32.xlu0 %v405, 256
    %v408 = vpop.permute.xlu0 %407
    %s410 = sor.u32 256, 8
    %411 = vbcast.lane.b32.xlu0 %v405, %s410
    %v412 = vpop.permute.xlu0 %411
    %v413 = vlaneseq
    %v414 = vshrl.u32 %v413, 7
    %v415 = vsub.s32 0, %v414
    %v416 = vrot.slane %v154, %v415
    %418 = vbcast.lane.b32.xlu0 %v416, 256
    %v419 = vpop.permute.xlu0 %418
    %s421 = sor.u32 256, 8
    %422 = vbcast.lane.b32.xlu0 %v416, %s421
    %v423 = vpop.permute.xlu0 %422
    %v424 = vlaneseq
    %v425 = vshrl.u32 %v424, 7
    %v426 = vsub.s32 0, %v425
    %v427 = vrot.slane %v155, %v426
    %429 = vbcast.lane.b32.xlu0 %v427, 256
    %v430 = vpop.permute.xlu0 %429
    %s432 = sor.u32 256, 8
    %433 = vbcast.lane.b32.xlu0 %v427, %s432
    %v434 = vpop.permute.xlu0 %433
    %v435 = vlaneseq
    %v436 = vshrl.u32 %v435, 7
    %v437 = vsub.s32 0, %v436
    %v438 = vrot.slane %v156, %v437
    %440 = vbcast.lane.b32.xlu0 %v438, 256
    %v441 = vpop.permute.xlu0 %440
    %s443 = sor.u32 256, 8
    %444 = vbcast.lane.b32.xlu0 %v438, %s443
    %v445 = vpop.permute.xlu0 %444
    %v446 = vlaneseq
    %v447 = vshrl.u32 %v446, 7
    %v448 = vsub.s32 0, %v447
    %v449 = vrot.slane %v158, %v448
    %451 = vbcast.lane.b32.xlu0 %v449, 256
    %v452 = vpop.permute.xlu0 %451
    %s454 = sor.u32 256, 8
    %455 = vbcast.lane.b32.xlu0 %v449, %s454
    %v456 = vpop.permute.xlu0 %455
    %v457 = vlaneseq
    %v458 = vshrl.u32 %v457, 7
    %v459 = vsub.s32 0, %v458
    %v460 = vrot.slane %v159, %v459
    %462 = vbcast.lane.b32.xlu0 %v460, 256
    %v463 = vpop.permute.xlu0 %462
    %s465 = sor.u32 256, 8
    %466 = vbcast.lane.b32.xlu0 %v460, %s465
    %v467 = vpop.permute.xlu0 %466
    %v468 = vlaneseq
    %v469 = vshrl.u32 %v468, 7
    %v470 = vsub.s32 0, %v469
    %v471 = vrot.slane %v160, %v470
    %473 = vbcast.lane.b32.xlu0 %v471, 256
    %v474 = vpop.permute.xlu0 %473
    %s476 = sor.u32 256, 8
    %477 = vbcast.lane.b32.xlu0 %v471, %s476
    %v478 = vpop.permute.xlu0 %477
    %v479 = vlaneseq
    %v480 = vshrl.u32 %v479, 7
    %v481 = vsub.s32 0, %v480
    %v482 = vrot.slane %v161, %v481
    %484 = vbcast.lane.b32.xlu0 %v482, 256
    %v485 = vpop.permute.xlu0 %484
    %s487 = sor.u32 256, 8
    %488 = vbcast.lane.b32.xlu0 %v482, %s487
    %v489 = vpop.permute.xlu0 %488
    %v490 = vlaneseq
    %v491 = vshrl.u32 %v490, 7
    %v492 = vsub.s32 0, %v491
    %v493 = vrot.slane %v162, %v492
    %495 = vbcast.lane.b32.xlu0 %v493, 256
    %v496 = vpop.permute.xlu0 %495
    %s498 = sor.u32 256, 8
    %499 = vbcast.lane.b32.xlu0 %v493, %s498
    %v500 = vpop.permute.xlu0 %499
    %v501 = vlaneseq
    %v502 = vshrl.u32 %v501, 7
    %v503 = vsub.s32 0, %v502
    %v504 = vrot.slane %v163, %v503
    %506 = vbcast.lane.b32.xlu0 %v504, 256
    %v507 = vpop.permute.xlu0 %506
    %s509 = sor.u32 256, 8
    %510 = vbcast.lane.b32.xlu0 %v504, %s509
    %v511 = vpop.permute.xlu0 %510
    %v512 = vlaneseq
    %v513 = vshrl.u32 %v512, 7
    %v514 = vsub.s32 0, %v513
    %v515 = vrot.slane %v164, %v514
    %517 = vbcast.lane.b32.xlu0 %v515, 256
    %v518 = vpop.permute.xlu0 %517
    %s520 = sor.u32 256, 8
    %521 = vbcast.lane.b32.xlu0 %v515, %s520
    %v522 = vpop.permute.xlu0 %521
    %v523 = vlaneseq
    %v524 = vshrl.u32 %v523, 7
    %v525 = vsub.s32 0, %v524
    %v526 = vrot.slane %v165, %v525
    %528 = vbcast.lane.b32.xlu0 %v526, 256
    %v529 = vpop.permute.xlu0 %528
    %s531 = sor.u32 256, 8
    %532 = vbcast.lane.b32.xlu0 %v526, %s531
    %v533 = vpop.permute.xlu0 %532
    %v534 = vld [vmem:[#allocation2] sm:$0xff]
    %v535 = vld [vmem:[#allocation2 + $0x8] sm:$0xff]
    %v536 = vld [vmem:[#allocation2 + $0x10] sm:$0xff]
    %v537 = vld [vmem:[#allocation2 + $0x18] sm:$0xff]
    %v538 = vld [vmem:[#allocation2 + $0x20] sm:$0xff]
    %v539 = vld [vmem:[#allocation2 + $0x28] sm:$0xff]
    %v540 = vld [vmem:[#allocation2 + $0x30] sm:$0xff]
    %v541 = vld [vmem:[#allocation2 + $0x38] sm:$0xff]
    %v542 = vld [vmem:[#allocation2 + $0x40] sm:$0xff]
    %v543 = vld [vmem:[#allocation2 + $0x48] sm:$0xff]
    %v544 = vld [vmem:[#allocation2 + $0x50] sm:$0xff]
    %v545 = vld [vmem:[#allocation2 + $0x58] sm:$0xff]
    %v546 = vld [vmem:[#allocation2 + $0x60] sm:$0xff]
    %v547 = vld [vmem:[#allocation2 + $0x68] sm:$0xff]
    %v548 = vld [vmem:[#allocation2 + $0x70] sm:$0xff]
    %v549 = vld [vmem:[#allocation2 + $0x78] sm:$0xff]
    %v550 = vld [vmem:[#allocation2 + $0x80] sm:$0xff]
    %v551 = vld [vmem:[#allocation2 + $0x88] sm:$0xff]
    %v552 = vld [vmem:[#allocation2 + $0x90] sm:$0xff]
    %v553 = vld [vmem:[#allocation2 + $0x98] sm:$0xff]
    %v554 = vld [vmem:[#allocation2 + $0xa0] sm:$0xff]
    %v555 = vld [vmem:[#allocation2 + $0xa8] sm:$0xff]
    %v556 = vld [vmem:[#allocation2 + $0xb0] sm:$0xff]
    %v557 = vld [vmem:[#allocation2 + $0xb8] sm:$0xff]
    %v558 = vld [vmem:[#allocation2 + $0xc0] sm:$0xff]
    %v559 = vld [vmem:[#allocation2 + $0xc8] sm:$0xff]
    %v560 = vld [vmem:[#allocation2 + $0xd0] sm:$0xff]
    %v561 = vld [vmem:[#allocation2 + $0xd8] sm:$0xff]
    %v562 = vld [vmem:[#allocation2 + $0xe0] sm:$0xff]
    %v563 = vld [vmem:[#allocation2 + $0xe8] sm:$0xff]
    %v564 = vld [vmem:[#allocation2 + $0xf0] sm:$0xff]
    %v565 = vld [vmem:[#allocation2 + $0xf8] sm:$0xff]
    %v566 = vmul.f32 %v295, %v534
    %v567 = vmul.f32 %v297, %v535
    %v568 = vmul.f32 %v299, %v536
    %v569 = vmul.f32 %v301, %v537
    %v570 = vmul.f32 %v303, %v538
    %v571 = vmul.f32 %v305, %v539
    %v572 = vmul.f32 %v307, %v540
    %v573 = vmul.f32 %v309, %v541
    %v574 = vmul.f32 %v311, %v542
    %v575 = vmul.f32 %v313, %v543
    %v576 = vmul.f32 %v315, %v544
    %v577 = vmul.f32 %v317, %v545
    %v578 = vmul.f32 %v319, %v546
    %v579 = vmul.f32 %v321, %v547
    %v580 = vmul.f32 %v323, %v548
    %v581 = vmul.f32 %v325, %v549
    %v582 = vmul.f32 %v327, %v550
    %v583 = vmul.f32 %v329, %v551
    %v584 = vmul.f32 %v331, %v552
    %v585 = vmul.f32 %v333, %v553
    %v586 = vmul.f32 %v335, %v554
    %v587 = vmul.f32 %v337, %v555
    %v588 = vmul.f32 %v339, %v556
    %v589 = vmul.f32 %v341, %v557
    %v590 = vmul.f32 %v343, %v558
    %v591 = vmul.f32 %v345, %v559
    %v592 = vmul.f32 %v347, %v560
    %v593 = vmul.f32 %v349, %v561
    %v594 = vmul.f32 %v351, %v562
    %v595 = vmul.f32 %v353, %v563
    %v596 = vmul.f32 %v355, %v564
    %v597 = vmul.f32 %v357, %v565
    %v606 = vlaneseq
    %v607 = vshrl.u32 %v606, 7
    %v608 = vsub.s32 0, %v607
    %v609 = vrot.slane %v166, %v608
    %v610 = vlaneseq
    %v611 = vshrl.u32 %v610, 7
    %v612 = vsub.s32 1, %v611
    %v613 = vrot.slane %v166, %v612
    %v614 = vlaneseq
    %v615 = vshrl.u32 %v614, 7
    %v616 = vsub.s32 0, %v615
    %v617 = vrot.slane %v167, %v616
    %v618 = vlaneseq
    %v619 = vshrl.u32 %v618, 7
    %v620 = vsub.s32 1, %v619
    %v621 = vrot.slane %v167, %v620
    %v622 = vlaneseq
    %v623 = vshrl.u32 %v622, 7
    %v624 = vsub.s32 0, %v623
    %v625 = vrot.slane %v168, %v624
    %v626 = vlaneseq
    %v627 = vshrl.u32 %v626, 7
    %v628 = vsub.s32 1, %v627
    %v629 = vrot.slane %v168, %v628
    %v630 = vlaneseq
    %v631 = vshrl.u32 %v630, 7
    %v632 = vsub.s32 0, %v631
    %v633 = vrot.slane %v169, %v632
    %v634 = vlaneseq
    %v635 = vshrl.u32 %v634, 7
    %v636 = vsub.s32 1, %v635
    %v637 = vrot.slane %v169, %v636
    %v638 = vlaneseq
    %v639 = vshrl.u32 %v638, 7
    %v640 = vsub.s32 0, %v639
    %v641 = vrot.slane %v170, %v640
    %v642 = vlaneseq
    %v643 = vshrl.u32 %v642, 7
    %v644 = vsub.s32 1, %v643
    %v645 = vrot.slane %v170, %v644
    %v646 = vlaneseq
    %v647 = vshrl.u32 %v646, 7
    %v648 = vsub.s32 0, %v647
    %v649 = vrot.slane %v171, %v648
    %v650 = vlaneseq
    %v651 = vshrl.u32 %v650, 7
    %v652 = vsub.s32 1, %v651
    %v653 = vrot.slane %v171, %v652
    %v654 = vlaneseq
    %v655 = vshrl.u32 %v654, 7
    %v656 = vsub.s32 0, %v655
    %v657 = vrot.slane %v172, %v656
    %v658 = vlaneseq
    %v659 = vshrl.u32 %v658, 7
    %v660 = vsub.s32 1, %v659
    %v661 = vrot.slane %v172, %v660
    %v662 = vlaneseq
    %v663 = vshrl.u32 %v662, 7
    %v664 = vsub.s32 0, %v663
    %v665 = vrot.slane %v173, %v664
    %v666 = vlaneseq
    %v667 = vshrl.u32 %v666, 7
    %v668 = vsub.s32 1, %v667
    %v669 = vrot.slane %v173, %v668
    %v686 = vmul.f32 %v364, %v609
    %v687 = vmul.f32 %v364, %v613
    %v688 = vmul.f32 %v368, %v609
    %v689 = vmul.f32 %v368, %v613
    %v690 = vmul.f32 %v375, %v617
    %v691 = vmul.f32 %v375, %v621
    %v692 = vmul.f32 %v379, %v617
    %v693 = vmul.f32 %v379, %v621
    %v694 = vmul.f32 %v386, %v625
    %v695 = vmul.f32 %v386, %v629
    %v696 = vmul.f32 %v390, %v625
    %v697 = vmul.f32 %v390, %v629
    %v698 = vmul.f32 %v397, %v633
    %v699 = vmul.f32 %v397, %v637
    %v700 = vmul.f32 %v401, %v633
    %v701 = vmul.f32 %v401, %v637
    %v702 = vmul.f32 %v408, %v641
    %v703 = vmul.f32 %v408, %v645
    %v704 = vmul.f32 %v412, %v641
    %v705 = vmul.f32 %v412, %v645
    %v706 = vmul.f32 %v419, %v649
    %v707 = vmul.f32 %v419, %v653
    %v708 = vmul.f32 %v423, %v649
    %v709 = vmul.f32 %v423, %v653
    %v710 = vmul.f32 %v430, %v657
    %v711 = vmul.f32 %v430, %v661
    %v712 = vmul.f32 %v434, %v657
    %v713 = vmul.f32 %v434, %v661
    %v714 = vmul.f32 %v441, %v665
    %v715 = vmul.f32 %v441, %v669
    %v716 = vmul.f32 %v445, %v665
    %v717 = vmul.f32 %v445, %v669
    %v718 = vadd.f32 %v566, %v686
    %v719 = vadd.f32 %v567, %v687
    %v720 = vadd.f32 %v568, %v688
    %v721 = vadd.f32 %v569, %v689
    %v722 = vadd.f32 %v570, %v690
    %v723 = vadd.f32 %v571, %v691
    %v724 = vadd.f32 %v572, %v692
    %v725 = vadd.f32 %v573, %v693
    %v726 = vadd.f32 %v574, %v694
    %v727 = vadd.f32 %v575, %v695
    %v728 = vadd.f32 %v576, %v696
    %v729 = vadd.f32 %v577, %v697
    %v730 = vadd.f32 %v578, %v698
    %v731 = vadd.f32 %v579, %v699
    %v732 = vadd.f32 %v580, %v700
    %v733 = vadd.f32 %v581, %v701
    %v734 = vadd.f32 %v582, %v702
    %v735 = vadd.f32 %v583, %v703
    %v736 = vadd.f32 %v584, %v704
    %v737 = vadd.f32 %v585, %v705
    %v738 = vadd.f32 %v586, %v706
    %v739 = vadd.f32 %v587, %v707
    %v740 = vadd.f32 %v588, %v708
    %v741 = vadd.f32 %v589, %v709
    %v742 = vadd.f32 %v590, %v710
    %v743 = vadd.f32 %v591, %v711
    %v744 = vadd.f32 %v592, %v712
    %v745 = vadd.f32 %v593, %v713
    %v746 = vadd.f32 %v594, %v714
    %v747 = vadd.f32 %v595, %v715
    %v748 = vadd.f32 %v596, %v716
    %v749 = vadd.f32 %v597, %v717
    %750 = vst [vmem:[#allocation2] sm:$0xff] %v718
    %751 = vst.msk [vmem:[#allocation2 + $0x8] sm:$0xff] %vm24, %v719
    %752 = vst [vmem:[#allocation2 + $0x10] sm:$0xff] %v720
    %753 = vst.msk [vmem:[#allocation2 + $0x18] sm:$0xff] %vm24, %v721
    %754 = vst [vmem:[#allocation2 + $0x20] sm:$0xff] %v722
    %755 = vst.msk [vmem:[#allocation2 + $0x28] sm:$0xff] %vm24, %v723
    %756 = vst [vmem:[#allocation2 + $0x30] sm:$0xff] %v724
    %757 = vst.msk [vmem:[#allocation2 + $0x38] sm:$0xff] %vm24, %v725
    %758 = vst [vmem:[#allocation2 + $0x40] sm:$0xff] %v726
    %759 = vst.msk [vmem:[#allocation2 + $0x48] sm:$0xff] %vm24, %v727
    %760 = vst [vmem:[#allocation2 + $0x50] sm:$0xff] %v728
    %761 = vst.msk [vmem:[#allocation2 + $0x58] sm:$0xff] %vm24, %v729
    %762 = vst [vmem:[#allocation2 + $0x60] sm:$0xff] %v730
    %763 = vst.msk [vmem:[#allocation2 + $0x68] sm:$0xff] %vm24, %v731
    %764 = vst [vmem:[#allocation2 + $0x70] sm:$0xff] %v732
    %765 = vst.msk [vmem:[#allocation2 + $0x78] sm:$0xff] %vm24, %v733
    %766 = vst [vmem:[#allocation2 + $0x80] sm:$0xff] %v734
    %767 = vst.msk [vmem:[#allocation2 + $0x88] sm:$0xff] %vm24, %v735
    %768 = vst [vmem:[#allocation2 + $0x90] sm:$0xff] %v736
    %769 = vst.msk [vmem:[#allocation2 + $0x98] sm:$0xff] %vm24, %v737
    %770 = vst [vmem:[#allocation2 + $0xa0] sm:$0xff] %v738
    %771 = vst.msk [vmem:[#allocation2 + $0xa8] sm:$0xff] %vm24, %v739
    %772 = vst [vmem:[#allocation2 + $0xb0] sm:$0xff] %v740
    %773 = vst.msk [vmem:[#allocation2 + $0xb8] sm:$0xff] %vm24, %v741
    %774 = vst [vmem:[#allocation2 + $0xc0] sm:$0xff] %v742
    %775 = vst.msk [vmem:[#allocation2 + $0xc8] sm:$0xff] %vm24, %v743
    %776 = vst [vmem:[#allocation2 + $0xd0] sm:$0xff] %v744
    %777 = vst.msk [vmem:[#allocation2 + $0xd8] sm:$0xff] %vm24, %v745
    %778 = vst [vmem:[#allocation2 + $0xe0] sm:$0xff] %v746
    %779 = vst.msk [vmem:[#allocation2 + $0xe8] sm:$0xff] %vm24, %v747
    %780 = vst [vmem:[#allocation2 + $0xf0] sm:$0xff] %v748
    %781 = vst.msk [vmem:[#allocation2 + $0xf8] sm:$0xff] %vm24, %v749
    %v782 = vmul.f32 %v452, %v718
    %v783 = vmul.f32 %v452, %v719
    %v784 = vmul.f32 %v456, %v720
    %v785 = vmul.f32 %v456, %v721
    %v786 = vmul.f32 %v463, %v722
    %v787 = vmul.f32 %v463, %v723
    %v788 = vmul.f32 %v467, %v724
    %v789 = vmul.f32 %v467, %v725
    %v790 = vmul.f32 %v474, %v726
    %v791 = vmul.f32 %v474, %v727
    %v792 = vmul.f32 %v478, %v728
    %v793 = vmul.f32 %v478, %v729
    %v794 = vmul.f32 %v485, %v730
    %v795 = vmul.f32 %v485, %v731
    %v796 = vmul.f32 %v489, %v732
    %v797 = vmul.f32 %v489, %v733
    %v798 = vmul.f32 %v496, %v734
    %v799 = vmul.f32 %v496, %v735
    %v800 = vmul.f32 %v500, %v736
    %v801 = vmul.f32 %v500, %v737
    %v802 = vmul.f32 %v507, %v738
    %v803 = vmul.f32 %v507, %v739
    %v804 = vmul.f32 %v511, %v740
    %v805 = vmul.f32 %v511, %v741
    %v806 = vmul.f32 %v518, %v742
    %v807 = vmul.f32 %v518, %v743
    %v808 = vmul.f32 %v522, %v744
    %v809 = vmul.f32 %v522, %v745
    %v810 = vmul.f32 %v529, %v746
    %v811 = vmul.f32 %v529, %v747
    %v812 = vmul.f32 %v533, %v748
    %v813 = vmul.f32 %v533, %v749
    %v814 = vadd.f32 %v782, %v784
    %v815 = vrot.slane %v814, 4
    %v816 = vadd.f32 %v814, %v815
    %v817 = vrot.slane %v816, 2
    %v818 = vadd.f32 %v816, %v817
    %v819 = vrot.slane %v818, 1
    %v820 = vadd.f32 %v818, %v819
    %v821 = vsel %vm24, %v783, 0.0
    %v822 = vsel %vm24, %v785, 0.0
    %v823 = vadd.f32 %v821, %v822
    %v824 = vrot.slane %v823, 4
    %v825 = vadd.f32 %v823, %v824
    %v826 = vrot.slane %v825, 2
    %v827 = vadd.f32 %v825, %v826
    %v828 = vrot.slane %v827, 1
    %v829 = vadd.f32 %v827, %v828
    %v830 = vadd.f32 %v786, %v788
    %v831 = vrot.slane %v830, 4
    %v832 = vadd.f32 %v830, %v831
    %v833 = vrot.slane %v832, 2
    %v834 = vadd.f32 %v832, %v833
    %v835 = vrot.slane %v834, 1
    %v836 = vadd.f32 %v834, %v835
    %v837 = vsel %vm24, %v787, 0.0
    %v838 = vsel %vm24, %v789, 0.0
    %v839 = vadd.f32 %v837, %v838
    %v840 = vrot.slane %v839, 4
    %v841 = vadd.f32 %v839, %v840
    %v842 = vrot.slane %v841, 2
    %v843 = vadd.f32 %v841, %v842
    %v844 = vrot.slane %v843, 1
    %v845 = vadd.f32 %v843, %v844
    %v846 = vadd.f32 %v790, %v792
    %v847 = vrot.slane %v846, 4
    %v848 = vadd.f32 %v846, %v847
    %v849 = vrot.slane %v848, 2
    %v850 = vadd.f32 %v848, %v849
    %v851 = vrot.slane %v850, 1
    %v852 = vadd.f32 %v850, %v851
    %v853 = vsel %vm24, %v791, 0.0
    %v854 = vsel %vm24, %v793, 0.0
    %v855 = vadd.f32 %v853, %v854
    %v856 = vrot.slane %v855, 4
    %v857 = vadd.f32 %v855, %v856
    %v858 = vrot.slane %v857, 2
    %v859 = vadd.f32 %v857, %v858
    %v860 = vrot.slane %v859, 1
    %v861 = vadd.f32 %v859, %v860
    %v862 = vadd.f32 %v794, %v796
    %v863 = vrot.slane %v862, 4
    %v864 = vadd.f32 %v862, %v863
    %v865 = vrot.slane %v864, 2
    %v866 = vadd.f32 %v864, %v865
    %v867 = vrot.slane %v866, 1
    %v868 = vadd.f32 %v866, %v867
    %v869 = vsel %vm24, %v795, 0.0
    %v870 = vsel %vm24, %v797, 0.0
    %v871 = vadd.f32 %v869, %v870
    %v872 = vrot.slane %v871, 4
    %v873 = vadd.f32 %v871, %v872
    %v874 = vrot.slane %v873, 2
    %v875 = vadd.f32 %v873, %v874
    %v876 = vrot.slane %v875, 1
    %v877 = vadd.f32 %v875, %v876
    %v878 = vadd.f32 %v798, %v800
    %v879 = vrot.slane %v878, 4
    %v880 = vadd.f32 %v878, %v879
    %v881 = vrot.slane %v880, 2
    %v882 = vadd.f32 %v880, %v881
    %v883 = vrot.slane %v882, 1
    %v884 = vadd.f32 %v882, %v883
    %v885 = vsel %vm24, %v799, 0.0
    %v886 = vsel %vm24, %v801, 0.0
    %v887 = vadd.f32 %v885, %v886
    %v888 = vrot.slane %v887, 4
    %v889 = vadd.f32 %v887, %v888
    %v890 = vrot.slane %v889, 2
    %v891 = vadd.f32 %v889, %v890
    %v892 = vrot.slane %v891, 1
    %v893 = vadd.f32 %v891, %v892
    %v894 = vadd.f32 %v802, %v804
    %v895 = vrot.slane %v894, 4
    %v896 = vadd.f32 %v894, %v895
    %v897 = vrot.slane %v896, 2
    %v898 = vadd.f32 %v896, %v897
    %v899 = vrot.slane %v898, 1
    %v900 = vadd.f32 %v898, %v899
    %v901 = vsel %vm24, %v803, 0.0
    %v902 = vsel %vm24, %v805, 0.0
    %v903 = vadd.f32 %v901, %v902
    %v904 = vrot.slane %v903, 4
    %v905 = vadd.f32 %v903, %v904
    %v906 = vrot.slane %v905, 2
    %v907 = vadd.f32 %v905, %v906
    %v908 = vrot.slane %v907, 1
    %v909 = vadd.f32 %v907, %v908
    %v910 = vadd.f32 %v806, %v808
    %v911 = vrot.slane %v910, 4
    %v912 = vadd.f32 %v910, %v911
    %v913 = vrot.slane %v912, 2
    %v914 = vadd.f32 %v912, %v913
    %v915 = vrot.slane %v914, 1
    %v916 = vadd.f32 %v914, %v915
    %v917 = vsel %vm24, %v807, 0.0
    %v918 = vsel %vm24, %v809, 0.0
    %v919 = vadd.f32 %v917, %v918
    %v920 = vrot.slane %v919, 4
    %v921 = vadd.f32 %v919, %v920
    %v922 = vrot.slane %v921, 2
    %v923 = vadd.f32 %v921, %v922
    %v924 = vrot.slane %v923, 1
    %v925 = vadd.f32 %v923, %v924
    %v926 = vadd.f32 %v810, %v812
    %v927 = vrot.slane %v926, 4
    %v928 = vadd.f32 %v926, %v927
    %v929 = vrot.slane %v928, 2
    %v930 = vadd.f32 %v928, %v929
    %v931 = vrot.slane %v930, 1
    %v932 = vadd.f32 %v930, %v931
    %v933 = vsel %vm24, %v811, 0.0
    %v934 = vsel %vm24, %v813, 0.0
    %v935 = vadd.f32 %v933, %v934
    %v936 = vrot.slane %v935, 4
    %v937 = vadd.f32 %v935, %v936
    %v938 = vrot.slane %v937, 2
    %v939 = vadd.f32 %v937, %v938
    %v940 = vrot.slane %v939, 1
    %v941 = vadd.f32 %v939, %v940
    %v942 = vmul.f32 %v88, %v110
    %v943 = vmul.f32 %v89, %v113
    %v944 = vmul.f32 %v90, %v116
    %v945 = vmul.f32 %v91, %v119
    %v946 = vmul.f32 %v92, %v122
    %v947 = vmul.f32 %v93, %v125
    %v948 = vmul.f32 %v94, %v128
    %v949 = vmul.f32 %v95, %v131
    %v958 = vlaneseq
    %v959 = vshrl.u32 %v958, 7
    %v960 = vsub.s32 0, %v959
    %v961 = vrot.slane %v942, %v960
    %v962 = vlaneseq
    %v963 = vshrl.u32 %v962, 7
    %v964 = vsub.s32 1, %v963
    %v965 = vrot.slane %v942, %v964
    %v966 = vlaneseq
    %v967 = vshrl.u32 %v966, 7
    %v968 = vsub.s32 0, %v967
    %v969 = vrot.slane %v943, %v968
    %v970 = vlaneseq
    %v971 = vshrl.u32 %v970, 7
    %v972 = vsub.s32 1, %v971
    %v973 = vrot.slane %v943, %v972
    %v974 = vlaneseq
    %v975 = vshrl.u32 %v974, 7
    %v976 = vsub.s32 0, %v975
    %v977 = vrot.slane %v944, %v976
    %v978 = vlaneseq
    %v979 = vshrl.u32 %v978, 7
    %v980 = vsub.s32 1, %v979
    %v981 = vrot.slane %v944, %v980
    %v982 = vlaneseq
    %v983 = vshrl.u32 %v982, 7
    %v984 = vsub.s32 0, %v983
    %v985 = vrot.slane %v945, %v984
    %v986 = vlaneseq
    %v987 = vshrl.u32 %v986, 7
    %v988 = vsub.s32 1, %v987
    %v989 = vrot.slane %v945, %v988
    %v990 = vlaneseq
    %v991 = vshrl.u32 %v990, 7
    %v992 = vsub.s32 0, %v991
    %v993 = vrot.slane %v946, %v992
    %v994 = vlaneseq
    %v995 = vshrl.u32 %v994, 7
    %v996 = vsub.s32 1, %v995
    %v997 = vrot.slane %v946, %v996
    %v998 = vlaneseq
    %v999 = vshrl.u32 %v998, 7
    %v1000 = vsub.s32 0, %v999
    %v1001 = vrot.slane %v947, %v1000
    %v1002 = vlaneseq
    %v1003 = vshrl.u32 %v1002, 7
    %v1004 = vsub.s32 1, %v1003
    %v1005 = vrot.slane %v947, %v1004
    %v1006 = vlaneseq
    %v1007 = vshrl.u32 %v1006, 7
    %v1008 = vsub.s32 0, %v1007
    %v1009 = vrot.slane %v948, %v1008
    %v1010 = vlaneseq
    %v1011 = vshrl.u32 %v1010, 7
    %v1012 = vsub.s32 1, %v1011
    %v1013 = vrot.slane %v948, %v1012
    %v1014 = vlaneseq
    %v1015 = vshrl.u32 %v1014, 7
    %v1016 = vsub.s32 0, %v1015
    %v1017 = vrot.slane %v949, %v1016
    %v1018 = vlaneseq
    %v1019 = vshrl.u32 %v1018, 7
    %v1020 = vsub.s32 1, %v1019
    %v1021 = vrot.slane %v949, %v1020
    %v1038 = vadd.f32 %v820, %v961
    %v1039 = vadd.f32 %v829, %v965
    %v1040 = vadd.f32 %v836, %v969
    %v1041 = vadd.f32 %v845, %v973
    %v1042 = vadd.f32 %v852, %v977
    %v1043 = vadd.f32 %v861, %v981
    %v1044 = vadd.f32 %v868, %v985
    %v1045 = vadd.f32 %v877, %v989
    %v1046 = vadd.f32 %v884, %v993
    %v1047 = vadd.f32 %v893, %v997
    %v1048 = vadd.f32 %v900, %v1001
    %v1049 = vadd.f32 %v909, %v1005
    %v1050 = vadd.f32 %v916, %v1009
    %v1051 = vadd.f32 %v925, %v1013
    %v1052 = vadd.f32 %v932, %v1017
    %v1053 = vadd.f32 %v941, %v1021
    %v1070 = vcombine.low %v1038, %v1039
    %v1072 = vunpack.c.l.s4 1966171168
    %v1073 = vunpack.c.0.s8 %v1072
    %v1074 = vlaneseq
    %v1075 = vshrl.u32 %v1074, 7
    %v1076 = vsub.s32 %v1073, %v1075
    %v1077 = vrot.slane %v1070, %v1076
    %v1079 = vunpack.c.l.s4 1966171168
    %v1080 = vunpack.c.0.s8 %v1079
    %v1081 = vlaneseq
    %v1082 = vshrl.u32 %v1081, 7
    %v1083 = vsub.s32 %v1080, %v1082
    %v1084 = vrot.slane %v1077, %v1083
    %v1085 = vcombine.low %v1040, %v1041
    %v1087 = vunpack.c.l.s4 1966171168
    %v1088 = vunpack.c.0.s8 %v1087
    %v1089 = vlaneseq
    %v1090 = vshrl.u32 %v1089, 7
    %v1091 = vsub.s32 %v1088, %v1090
    %v1092 = vrot.slane %v1085, %v1091
    %v1094 = vunpack.c.l.s4 1966171168
    %v1095 = vunpack.c.0.s8 %v1094
    %v1096 = vlaneseq
    %v1097 = vshrl.u32 %v1096, 7
    %v1098 = vsub.s32 %v1095, %v1097
    %v1099 = vrot.slane %v1092, %v1098
    %v1100 = vcombine.low %v1042, %v1043
    %v1102 = vunpack.c.l.s4 1966171168
    %v1103 = vunpack.c.0.s8 %v1102
    %v1104 = vlaneseq
    %v1105 = vshrl.u32 %v1104, 7
    %v1106 = vsub.s32 %v1103, %v1105
    %v1107 = vrot.slane %v1100, %v1106
    %v1109 = vunpack.c.l.s4 1966171168
    %v1110 = vunpack.c.0.s8 %v1109
    %v1111 = vlaneseq
    %v1112 = vshrl.u32 %v1111, 7
    %v1113 = vsub.s32 %v1110, %v1112
    %v1114 = vrot.slane %v1107, %v1113
    %v1115 = vcombine.low %v1044, %v1045
    %v1117 = vunpack.c.l.s4 1966171168
    %v1118 = vunpack.c.0.s8 %v1117
    %v1119 = vlaneseq
    %v1120 = vshrl.u32 %v1119, 7
    %v1121 = vsub.s32 %v1118, %v1120
    %v1122 = vrot.slane %v1115, %v1121
    %v1124 = vunpack.c.l.s4 1966171168
    %v1125 = vunpack.c.0.s8 %v1124
    %v1126 = vlaneseq
    %v1127 = vshrl.u32 %v1126, 7
    %v1128 = vsub.s32 %v1125, %v1127
    %v1129 = vrot.slane %v1122, %v1128
    %v1130 = vcombine.low %v1046, %v1047
    %v1132 = vunpack.c.l.s4 1966171168
    %v1133 = vunpack.c.0.s8 %v1132
    %v1134 = vlaneseq
    %v1135 = vshrl.u32 %v1134, 7
    %v1136 = vsub.s32 %v1133, %v1135
    %v1137 = vrot.slane %v1130, %v1136
    %v1139 = vunpack.c.l.s4 1966171168
    %v1140 = vunpack.c.0.s8 %v1139
    %v1141 = vlaneseq
    %v1142 = vshrl.u32 %v1141, 7
    %v1143 = vsub.s32 %v1140, %v1142
    %v1144 = vrot.slane %v1137, %v1143
    %v1145 = vcombine.low %v1048, %v1049
    %v1147 = vunpack.c.l.s4 1966171168
    %v1148 = vunpack.c.0.s8 %v1147
    %v1149 = vlaneseq
    %v1150 = vshrl.u32 %v1149, 7
    %v1151 = vsub.s32 %v1148, %v1150
    %v1152 = vrot.slane %v1145, %v1151
    %v1154 = vunpack.c.l.s4 1966171168
    %v1155 = vunpack.c.0.s8 %v1154
    %v1156 = vlaneseq
    %v1157 = vshrl.u32 %v1156, 7
    %v1158 = vsub.s32 %v1155, %v1157
    %v1159 = vrot.slane %v1152, %v1158
    %v1160 = vcombine.low %v1050, %v1051
    %v1162 = vunpack.c.l.s4 1966171168
    %v1163 = vunpack.c.0.s8 %v1162
    %v1164 = vlaneseq
    %v1165 = vshrl.u32 %v1164, 7
    %v1166 = vsub.s32 %v1163, %v1165
    %v1167 = vrot.slane %v1160, %v1166
    %v1169 = vunpack.c.l.s4 1966171168
    %v1170 = vunpack.c.0.s8 %v1169
    %v1171 = vlaneseq
    %v1172 = vshrl.u32 %v1171, 7
    %v1173 = vsub.s32 %v1170, %v1172
    %v1174 = vrot.slane %v1167, %v1173
    %v1175 = vcombine.low %v1052, %v1053
    %v1177 = vunpack.c.l.s4 1966171168
    %v1178 = vunpack.c.0.s8 %v1177
    %v1179 = vlaneseq
    %v1180 = vshrl.u32 %v1179, 7
    %v1181 = vsub.s32 %v1178, %v1180
    %v1182 = vrot.slane %v1175, %v1181
    %v1184 = vunpack.c.l.s4 1966171168
    %v1185 = vunpack.c.0.s8 %v1184
    %v1186 = vlaneseq
    %v1187 = vshrl.u32 %v1186, 7
    %v1188 = vsub.s32 %v1185, %v1187
    %v1189 = vrot.slane %v1182, %v1188
    %v1198 = vlaneseq
    %vm1199 = vcmp.ge.s32.totalorder %v1198, 0
    %vm1200 = vcmp.lt.s32.totalorder %v1198, 192
    %vm1201 = vmand %vm1199, %vm1200
    %s1202 = scalar_lea.vmem %s6, %s108
    %1203 = vst.msk [vmem:[%s1202] ss:$8 sm:$0x3] %vm1201, %v1084
    %1204 = vst.msk [vmem:[%s1202] ss:$8 sm:$0x0] %vm1201, %v1084
    %s1205 = scalar_lea.vmem %s6, %s111
    %1206 = vst.msk [vmem:[%s1205] ss:$8 sm:$0x3] %vm1201, %v1099
    %1207 = vst.msk [vmem:[%s1205] ss:$8 sm:$0x0] %vm1201, %v1099
    %s1208 = scalar_lea.vmem %s6, %s114
    %1209 = vst.msk [vmem:[%s1208] ss:$8 sm:$0x3] %vm1201, %v1114
    %1210 = vst.msk [vmem:[%s1208] ss:$8 sm:$0x0] %vm1201, %v1114
    %s1211 = scalar_lea.vmem %s6, %s117
    %1212 = vst.msk [vmem:[%s1211] ss:$8 sm:$0x3] %vm1201, %v1129
    %1213 = vst.msk [vmem:[%s1211] ss:$8 sm:$0x0] %vm1201, %v1129
    %s1214 = scalar_lea.vmem %s6, %s120
    %1215 = vst.msk [vmem:[%s1214] ss:$8 sm:$0x3] %vm1201, %v1144
    %1216 = vst.msk [vmem:[%s1214] ss:$8 sm:$0x0] %vm1201, %v1144
    %s1217 = scalar_lea.vmem %s6, %s123
    %1218 = vst.msk [vmem:[%s1217] ss:$8 sm:$0x3] %vm1201, %v1159
    %1219 = vst.msk [vmem:[%s1217] ss:$8 sm:$0x0] %vm1201, %v1159
    %s1220 = scalar_lea.vmem %s6, %s126
    %1221 = vst.msk [vmem:[%s1220] ss:$8 sm:$0x3] %vm1201, %v1174
    %1222 = vst.msk [vmem:[%s1220] ss:$8 sm:$0x0] %vm1201, %v1174
    %s1223 = scalar_lea.vmem %s6, %s129
    %1224 = vst.msk [vmem:[%s1223] ss:$8 sm:$0x3] %vm1201, %v1189
    %1225 = vst.msk [vmem:[%s1223] ss:$8 sm:$0x0] %vm1201, %v1189
  $region30: #{_lambda_.21} parent=0 // loop_footer
    %s101 = sadd.s32 1, %s97
  $region31: #{_lambda_.21} parent=0 // loop_footer_branch
    %96 = sbr.rel target = $region27
  $region32: #{_lambda_.21} parent=0 // loop_exit
    _
  // Predicated region
  $region33: #{_lambda_.21} parent=0 // pred_check
    _
  $region34: #{_lambda_.21} parent=0 // pred_check_branch
    %1227 = sbr.rel (0) target = $region36
  $region35: #{_lambda_.21} parent=0 // pred_region
    _
  $region36: #{_lambda_.21} parent=0 // pred_fallthru
    _
  // Predicated region
  $region37: #{_lambda_.21} parent=0 // pred_check
    _
  $region38: #{_lambda_.21} parent=0 // pred_check_branch
    %1229 = sbr.rel (0) target = $region40
  $region39: #{_lambda_.21} parent=0 // pred_region
    _
  $region40: #{_lambda_.21} parent=0 // pred_fallthru
    _

// kernel: _lambda_.23
$region0: #{_lambda_.23}
  #allocation0 [shape = 'u32[]', space=smem, size = 0x4, offset = 0x4, fixed_abs, tag = 'smem constant byte address 0x4 - core index']
  #allocation1 [shape = 'u32[144,128]{1,0:T(1,128)}', space=vmem, size = 0x12000, scoped, tag = 'internal scratch']
  #allocation2 [shape = 'f32[32,128]{1,0:T(8,128)}', space=vmem, size = 0x4000, scoped, tag = 'scratch operand']
  %s0 = inlined_call_operand.vmem [shape: bf16[32,256], index: 0, kind: input, shape index: {}]
  %s1 = inlined_call_operand.vmem [shape: bf16[256,128], index: 1, kind: input, shape index: {}]
  %s2 = inlined_call_operand.vmem [shape: f32[1,128], index: 2, kind: input, shape index: {}]
  %s3 = inlined_call_operand.vmem [shape: f32[1,128], index: 3, kind: input, shape index: {}]
  %s4 = inlined_call_operand.vmem [shape: f32[32,128], index: 4, kind: output, shape index: {}]
  %s5 = sld [smem:[#allocation0]]
  $region34: #{_lambda_.23} parent=0
    _
  %s7 = ssub.s32 1, %s5
  %s8 = scalar_select 0, %s7, %s5
  // Predicated region
  $region2: #{_lambda_.23} parent=0 // pred_check
    _
  $region3: #{_lambda_.23} parent=0 // pred_check_branch
    %10 = sbr.rel (0) target = $region5
  $region4: #{_lambda_.23} parent=0 // pred_region
    _
  $region5: #{_lambda_.23} parent=0 // pred_fallthru
    _
  // Predicated region
  $region6: #{_lambda_.23} parent=0 // pred_check
    _
  $region7: #{_lambda_.23} parent=0 // pred_check_branch
    %12 = sbr.rel (0) target = $region9
  $region8: #{_lambda_.23} parent=0 // pred_region
    _
  $region9: #{_lambda_.23} parent=0 // pred_fallthru
    _
  // Predicated region
  $region10: #{_lambda_.23} parent=0 // pred_check
    _
  $region11: #{_lambda_.23} parent=0 // pred_check_branch
    %14 = sbr.rel (0) target = $region13
  $region12: #{_lambda_.23} parent=0 // pred_region
    _
  $region13: #{_lambda_.23} parent=0 // pred_fallthru
    _
  // Predicated region
  $region14: #{_lambda_.23} parent=0 // pred_check
    _
  $region15: #{_lambda_.23} parent=0 // pred_check_branch
    %16 = sbr.rel (0) target = $region17
  $region16: #{_lambda_.23} parent=0 // pred_region
    _
  $region17: #{_lambda_.23} parent=0 // pred_fallthru
    _
  %p18 = scmp.eq.s32.totalorder 0, 0
  // Predicated region
  $region18: #{_lambda_.23} parent=0 // pred_check
    %p19 = pneg %p18
  $region19: #{_lambda_.23} parent=0 // pred_check_branch
    %21 = sbr.rel (%p19) target = $region21
  $region20: #{_lambda_.23} parent=0 // pred_region
    %22 = vst [vmem:[#allocation2] sm:$0xff] 0.0
    %23 = vst [vmem:[#allocation2 + $0x8] sm:$0xff] 0.0
    %24 = vst [vmem:[#allocation2 + $0x10] sm:$0xff] 0.0
    %25 = vst [vmem:[#allocation2 + $0x18] sm:$0xff] 0.0
  $region21: #{_lambda_.23} parent=0 // pred_fallthru
    _
  %v26 = vld [vmem:[#allocation2] sm:$0xff]
  %v27 = vld [vmem:[#allocation2 + $0x8] sm:$0xff]
  %v28 = vld [vmem:[#allocation2 + $0x10] sm:$0xff]
  %v29 = vld [vmem:[#allocation2 + $0x18] sm:$0xff]
  %v30 = vld [vmem:[%s0] sm:$0xff]
  %v31 = vld [vmem:[%s0 + $0x8] sm:$0xff]
  %v32 = vld [vmem:[%s0 + $0x10] sm:$0xff]
  %v33 = vld [vmem:[%s0 + $0x18] sm:$0xff]
  %v34 = vld [vmem:[%s1] sm:$0xf]
  %v35 = vld [vmem:[%s1 + $0x4] sm:$0xf]
  %v36 = vld [vmem:[%s1 + $0x8] sm:$0xf]
  %v37 = vld [vmem:[%s1 + $0xc] sm:$0xf]
  %v38 = vld [vmem:[%s1 + $0x10] sm:$0xf]
  %v39 = vld [vmem:[%s1 + $0x14] sm:$0xf]
  %v40 = vld [vmem:[%s1 + $0x18] sm:$0xf]
  %v41 = vld [vmem:[%s1 + $0x1c] sm:$0xf]
  %v42 = vld [vmem:[%s1 + $0x20] sm:$0xf]
  %v43 = vld [vmem:[%s1 + $0x24] sm:$0xf]
  %v44 = vld [vmem:[%s1 + $0x28] sm:$0xf]
  %v45 = vld [vmem:[%s1 + $0x2c] sm:$0xf]
  %v46 = vld [vmem:[%s1 + $0x30] sm:$0xf]
  %v47 = vld [vmem:[%s1 + $0x34] sm:$0xf]
  %v48 = vld [vmem:[%s1 + $0x38] sm:$0xf]
  %v49 = vld [vmem:[%s1 + $0x3c] sm:$0xf]
  %v50 = vld [vmem:[%s1 + $0x40] sm:$0xf]
  %v51 = vld [vmem:[%s1 + $0x44] sm:$0xf]
  %v52 = vld [vmem:[%s1 + $0x48] sm:$0xf]
  %v53 = vld [vmem:[%s1 + $0x4c] sm:$0xf]
  %v54 = vld [vmem:[%s1 + $0x50] sm:$0xf]
  %v55 = vld [vmem:[%s1 + $0x54] sm:$0xf]
  %v56 = vld [vmem:[%s1 + $0x58] sm:$0xf]
  %v57 = vld [vmem:[%s1 + $0x5c] sm:$0xf]
  %v58 = vld [vmem:[%s1 + $0x60] sm:$0xf]
  %v59 = vld [vmem:[%s1 + $0x64] sm:$0xf]
  %v60 = vld [vmem:[%s1 + $0x68] sm:$0xf]
  %v61 = vld [vmem:[%s1 + $0x6c] sm:$0xf]
  %v62 = vld [vmem:[%s1 + $0x70] sm:$0xf]
  %v63 = vld [vmem:[%s1 + $0x74] sm:$0xf]
  %v64 = vld [vmem:[%s1 + $0x78] sm:$0xf]
  %v65 = vld [vmem:[%s1 + $0x7c] sm:$0xf]
  %v70 = vunpack.c.l.b16 %v30
  %v71 = vunpack.c.h.b16 %v30
  %v72 = vunpack.c.l.b16 %v31
  %v73 = vunpack.c.h.b16 %v31
  %v74 = vunpack.c.l.b16 %v32
  %v75 = vunpack.c.h.b16 %v32
  %v76 = vunpack.c.l.b16 %v33
  %v77 = vunpack.c.h.b16 %v33
  %v78 = vpack.c.b16 %v72, %v70
  %v79 = vpack.c.b16 %v73, %v71
  %v80 = vpack.c.b16 %v76, %v74
  %v81 = vpack.c.b16 %v77, %v75
  %v118 = vunpack.c.l.b16 %v34
  %v119 = vunpack.c.l.b16 %v35
  %v120 = vunpack.c.l.b16 %v36
  %v121 = vunpack.c.l.b16 %v37
  %v122 = vunpack.c.l.b16 %v38
  %v123 = vunpack.c.l.b16 %v39
  %v124 = vunpack.c.l.b16 %v40
  %v125 = vunpack.c.l.b16 %v41
  %v126 = vunpack.c.l.b16 %v42
  %v127 = vunpack.c.l.b16 %v43
  %v128 = vunpack.c.l.b16 %v44
  %v129 = vunpack.c.l.b16 %v45
  %v130 = vunpack.c.l.b16 %v46
  %v131 = vunpack.c.l.b16 %v47
  %v132 = vunpack.c.l.b16 %v48
  %v133 = vunpack.c.l.b16 %v49
  %v134 = vunpack.c.l.b16 %v50
  %v135 = vunpack.c.l.b16 %v51
  %v136 = vunpack.c.l.b16 %v52
  %v137 = vunpack.c.l.b16 %v53
  %v138 = vunpack.c.l.b16 %v54
  %v139 = vunpack.c.l.b16 %v55
  %v140 = vunpack.c.l.b16 %v56
  %v141 = vunpack.c.l.b16 %v57
  %v142 = vunpack.c.l.b16 %v58
  %v143 = vunpack.c.l.b16 %v59
  %v144 = vunpack.c.l.b16 %v60
  %v145 = vunpack.c.l.b16 %v61
  %v146 = vunpack.c.l.b16 %v62
  %v147 = vunpack.c.l.b16 %v63
  %v148 = vunpack.c.l.b16 %v64
  %v149 = vunpack.c.l.b16 %v65
  %v150 = vpack.c.b16 %v119, %v118
  %v151 = vpack.c.b16 %v121, %v120
  %v152 = vpack.c.b16 %v123, %v122
  %v153 = vpack.c.b16 %v125, %v124
  %v154 = vpack.c.b16 %v127, %v126
  %v155 = vpack.c.b16 %v129, %v128
  %v156 = vpack.c.b16 %v131, %v130
  %v157 = vpack.c.b16 %v133, %v132
  %v158 = vpack.c.b16 %v135, %v134
  %v159 = vpack.c.b16 %v137, %v136
  %v160 = vpack.c.b16 %v139, %v138
  %v161 = vpack.c.b16 %v141, %v140
  %v162 = vpack.c.b16 %v143, %v142
  %v163 = vpack.c.b16 %v145, %v144
  %v164 = vpack.c.b16 %v147, %v146
  %v165 = vpack.c.b16 %v149, %v148
  %182 = vmatprep.subr.bf16.mxu0 0
  %183 = vmatpush1.bf16.msra.mxu0 %v157
  %184 = vmatprep.subr.bf16.mxu0 0
  %185 = vmatpush1.bf16.msra.mxu0 %v156
  %186 = vmatprep.subr.bf16.mxu0 0
  %187 = vmatpush1.bf16.msra.mxu0 %v155
  %188 = vmatprep.subr.bf16.mxu0 0
  %189 = vmatpush1.bf16.msra.mxu0 %v154
  %190 = vmatprep.subr.bf16.mxu0 0
  %191 = vmatpush1.bf16.msra.mxu0 %v153
  %192 = vmatprep.subr.bf16.mxu0 0
  %193 = vmatpush1.bf16.msra.mxu0 %v152
  %194 = vmatprep.subr.bf16.mxu0 0
  %195 = vmatpush1.bf16.msra.mxu0 %v151
  %196 = vmatprep.subr.bf16.mxu0 0
  %197 = vmatpush1.bf16.msra.mxu0 %v150
  %198 = vmatprep.subr.bf16.mxu0 0
  %199 = vmatpush2.bf16.msra.mxu0 %v165
  %200 = vmatprep.subr.bf16.mxu0 0
  %201 = vmatpush2.bf16.msra.mxu0 %v164
  %202 = vmatprep.subr.bf16.mxu0 0
  %203 = vmatpush2.bf16.msra.mxu0 %v163
  %204 = vmatprep.subr.bf16.mxu0 0
  %205 = vmatpush2.bf16.msra.mxu0 %v162
  %206 = vmatprep.subr.bf16.mxu0 0
  %207 = vmatpush2.bf16.msra.mxu0 %v161
  %208 = vmatprep.subr.bf16.mxu0 0
  %209 = vmatpush2.bf16.msra.mxu0 %v160
  %210 = vmatprep.subr.bf16.mxu0 0
  %211 = vmatpush2.bf16.msra.mxu0 %v159
  %212 = vmatprep.subr.bf16.mxu0 0
  %213 = vmatpush2.bf16.msra.mxu0 %v158
  %214 = vmatprep.mubr.bf16.mxu0 %v79
  %215 = vmatmul.mubr.bf16.gmra.mxu0 %v78
  %v216 = vpop.f32.mrf.mxu0
  %v217 = vadd.f32 0.0, %v216
  %v218 = vpop.f32.mrf.mxu0
  %v219 = vpop.f32.mrf.mxu0
  %v220 = vadd.f32 0.0, %v219
  %v221 = vpop.f32.mrf.mxu0
  %222 = vmatprep.mubr.bf16.mxu0 %v81
  %223 = vmatmul.mubr.bf16.gmra.mxu0 %v80
  %v224 = vpop.f32.mrf.mxu0
  %v225 = vadd.f32 0.0, %v224
  %v226 = vpop.f32.mrf.mxu0
  %v227 = vpop.f32.mrf.mxu0
  %v228 = vadd.f32 0.0, %v227
  %v229 = vpop.f32.mrf.mxu0
  %230 = vdwg.mxu0
  %v231 = vadd.f32 %v26, %v217
  %v232 = vadd.f32 %v27, %v220
  %v233 = vadd.f32 %v28, %v225
  %v234 = vadd.f32 %v29, %v228
  %235 = vst [vmem:[#allocation2] sm:$0xff] %v231
  %236 = vst [vmem:[#allocation2 + $0x8] sm:$0xff] %v232
  %237 = vst [vmem:[#allocation2 + $0x10] sm:$0xff] %v233
  %238 = vst [vmem:[#allocation2 + $0x18] sm:$0xff] %v234
  // Predicated region
  $region22: #{_lambda_.23} parent=0 // pred_check
    %p239 = pneg %p18
  $region23: #{_lambda_.23} parent=0 // pred_check_branch
    %241 = sbr.rel (%p239) target = $region25
  $region24: #{_lambda_.23} parent=0 // pred_region
    %v242 = vld [vmem:[#allocation2] sm:$0xff]
    %v243 = vld [vmem:[#allocation2 + $0x8] sm:$0xff]
    %v244 = vld [vmem:[#allocation2 + $0x10] sm:$0xff]
    %v245 = vld [vmem:[#allocation2 + $0x18] sm:$0xff]
    %v246 = vld [vmem:[%s2] sm:$0x1]
    %v248 = vlaneseq
    %v249 = vshrl.u32 %v248, 7
    %v250 = vsub.s32 0, %v249
    %v251 = vrot.slane %v246, %v250
    %v253 = vmul.f32 %v242, %v251
    %v254 = vmul.f32 %v243, %v251
    %v255 = vmul.f32 %v244, %v251
    %v256 = vmul.f32 %v245, %v251
    %v257 = vld [vmem:[%s3] sm:$0x1]
    %v259 = vlaneseq
    %v260 = vshrl.u32 %v259, 7
    %v261 = vsub.s32 0, %v260
    %v262 = vrot.slane %v257, %v261
    %v264 = vadd.f32 %v253, %v262
    %v265 = vadd.f32 %v254, %v262
    %v266 = vadd.f32 %v255, %v262
    %v267 = vadd.f32 %v256, %v262
    %268 = vst [vmem:[%s4] sm:$0xff] %v264
    %269 = vst [vmem:[%s4 + $0x8] sm:$0xff] %v265
    %270 = vst [vmem:[%s4 + $0x10] sm:$0xff] %v266
    %271 = vst [vmem:[%s4 + $0x18] sm:$0xff] %v267
  $region25: #{_lambda_.23} parent=0 // pred_fallthru
    _
  // Predicated region
  $region26: #{_lambda_.23} parent=0 // pred_check
    _
  $region27: #{_lambda_.23} parent=0 // pred_check_branch
    %273 = sbr.rel (0) target = $region29
  $region28: #{_lambda_.23} parent=0 // pred_region
    _
  $region29: #{_lambda_.23} parent=0 // pred_fallthru
    _
  // Predicated region
  $region30: #{_lambda_.23} parent=0 // pred_check
    _
  $region31: #{_lambda_.23} parent=0 // pred_check_branch
    %275 = sbr.rel (0) target = $region33
  $region32: #{_lambda_.23} parent=0 // pred_region
    _
  $region33: #{_lambda_.23} parent=0 // pred_fallthru
    _

// kernel: _lambda_.25
$region0: #{_lambda_.25}
  #allocation0 [shape = 'u32[]', space=smem, size = 0x4, offset = 0x4, fixed_abs, tag = 'smem constant byte address 0x4 - core index']
  #allocation1 [shape = 'u32[144,128]{1,0:T(1,128)}', space=vmem, size = 0x12000, scoped, tag = 'internal scratch']
  #allocation2 [shape = 'f32[128,128]{1,0:T(8,128)}', space=vmem, size = 0x10000, scoped, tag = 'scratch operand']
  %s0 = inlined_call_operand.vmem [shape: bf16[128,128], index: 0, kind: input, shape index: {}]
  %s1 = inlined_call_operand.vmem [shape: bf16[128,128], index: 1, kind: input, shape index: {}]
  %s2 = inlined_call_operand.vmem [shape: f32[1,128], index: 2, kind: input, shape index: {}]
  %s3 = inlined_call_operand.vmem [shape: f32[1,128], index: 3, kind: input, shape index: {}]
  %s4 = inlined_call_operand.hbm [shape: f32[128,128], index: 4, kind: output, shape index: {}]
  %s5 = sld [smem:[#allocation0]]
  $region34: #{_lambda_.25} parent=0
    _
  %s7 = ssub.s32 1, %s5
  %s8 = scalar_select 0, %s7, %s5
  $region1: #{_lambda_.25} parent=0
    #allocation3 [shape = 'u8[65536]{0}', space=vmem, size = 0x10000, scoped, tag = 'output window, operand 0, single buffered']
    #allocation4 [shape = 's32[1]{0}', space=sflag, size = 0x4, scoped, tag = 'scoped memory for _lambda_.25']
    %9 = vsyncpa [#allocation4], 0
    // Predicated region
    $region2: #{_lambda_.25} parent=1 // pred_check
      _
    $region3: #{_lambda_.25} parent=1 // pred_check_branch
      %11 = sbr.rel (0) target = $region5
    $region4: #{_lambda_.25} parent=1 // pred_region
      _
    $region5: #{_lambda_.25} parent=1 // pred_fallthru
      _
    // Predicated region
    $region6: #{_lambda_.25} parent=1 // pred_check
      _
    $region7: #{_lambda_.25} parent=1 // pred_check_branch
      %13 = sbr.rel (0) target = $region9
    $region8: #{_lambda_.25} parent=1 // pred_region
      _
    $region9: #{_lambda_.25} parent=1 // pred_fallthru
      _
    // Predicated region
    $region10: #{_lambda_.25} parent=1 // pred_check
      _
    $region11: #{_lambda_.25} parent=1 // pred_check_branch
      %15 = sbr.rel (0) target = $region13
    $region12: #{_lambda_.25} parent=1 // pred_region
      _
    $region13: #{_lambda_.25} parent=1 // pred_fallthru
      _
    // Predicated region
    $region14: #{_lambda_.25} parent=1 // pred_check
      _
    $region15: #{_lambda_.25} parent=1 // pred_check_branch
      %17 = sbr.rel (0) target = $region17
    $region16: #{_lambda_.25} parent=1 // pred_region
      _
    $region17: #{_lambda_.25} parent=1 // pred_fallthru
      _
    %p19 = scmp.eq.s32.totalorder 0, 0
    // Predicated region
    $region18: #{_lambda_.25} parent=1 // pred_check
      %p20 = pneg %p19
    $region19: #{_lambda_.25} parent=1 // pred_check_branch
      %22 = sbr.rel (%p20) target = $region21
    $region20: #{_lambda_.25} parent=1 // pred_region
      %23 = vst [vmem:[#allocation2] sm:$0xff] 0.0
      %24 = vst [vmem:[#allocation2 + $0x8] sm:$0xff] 0.0
      %25 = vst [vmem:[#allocation2 + $0x10] sm:$0xff] 0.0
      %26 = vst [vmem:[#allocation2 + $0x18] sm:$0xff] 0.0
      %27 = vst [vmem:[#allocation2 + $0x20] sm:$0xff] 0.0
      %28 = vst [vmem:[#allocation2 + $0x28] sm:$0xff] 0.0
      %29 = vst [vmem:[#allocation2 + $0x30] sm:$0xff] 0.0
      %30 = vst [vmem:[#allocation2 + $0x38] sm:$0xff] 0.0
      %31 = vst [vmem:[#allocation2 + $0x40] sm:$0xff] 0.0
      %32 = vst [vmem:[#allocation2 + $0x48] sm:$0xff] 0.0
      %33 = vst [vmem:[#allocation2 + $0x50] sm:$0xff] 0.0
      %34 = vst [vmem:[#allocation2 + $0x58] sm:$0xff] 0.0
      %35 = vst [vmem:[#allocation2 + $0x60] sm:$0xff] 0.0
      %36 = vst [vmem:[#allocation2 + $0x68] sm:$0xff] 0.0
      %37 = vst [vmem:[#allocation2 + $0x70] sm:$0xff] 0.0
      %38 = vst [vmem:[#allocation2 + $0x78] sm:$0xff] 0.0
    $region21: #{_lambda_.25} parent=1 // pred_fallthru
      _
    %v39 = vld [vmem:[#allocation2] sm:$0xff]
    %v40 = vld [vmem:[#allocation2 + $0x8] sm:$0xff]
    %v41 = vld [vmem:[#allocation2 + $0x10] sm:$0xff]
    %v42 = vld [vmem:[#allocation2 + $0x18] sm:$0xff]
    %v43 = vld [vmem:[#allocation2 + $0x20] sm:$0xff]
    %v44 = vld [vmem:[#allocation2 + $0x28] sm:$0xff]
    %v45 = vld [vmem:[#allocation2 + $0x30] sm:$0xff]
    %v46 = vld [vmem:[#allocation2 + $0x38] sm:$0xff]
    %v47 = vld [vmem:[#allocation2 + $0x40] sm:$0xff]
    %v48 = vld [vmem:[#allocation2 + $0x48] sm:$0xff]
    %v49 = vld [vmem:[#allocation2 + $0x50] sm:$0xff]
    %v50 = vld [vmem:[#allocation2 + $0x58] sm:$0xff]
    %v51 = vld [vmem:[#allocation2 + $0x60] sm:$0xff]
    %v52 = vld [vmem:[#allocation2 + $0x68] sm:$0xff]
    %v53 = vld [vmem:[#allocation2 + $0x70] sm:$0xff]
    %v54 = vld [vmem:[#allocation2 + $0x78] sm:$0xff]
    %v55 = vld [vmem:[%s0] sm:$0xf]
    %v56 = vld [vmem:[%s0 + $0x4] sm:$0xf]
    %v57 = vld [vmem:[%s0 + $0x8] sm:$0xf]
    %v58 = vld [vmem:[%s0 + $0xc] sm:$0xf]
    %v59 = vld [vmem:[%s0 + $0x10] sm:$0xf]
    %v60 = vld [vmem:[%s0 + $0x14] sm:$0xf]
    %v61 = vld [vmem:[%s0 + $0x18] sm:$0xf]
    %v62 = vld [vmem:[%s0 + $0x1c] sm:$0xf]
    %v63 = vld [vmem:[%s0 + $0x20] sm:$0xf]
    %v64 = vld [vmem:[%s0 + $0x24] sm:$0xf]
    %v65 = vld [vmem:[%s0 + $0x28] sm:$0xf]
    %v66 = vld [vmem:[%s0 + $0x2c] sm:$0xf]
    %v67 = vld [vmem:[%s0 + $0x30] sm:$0xf]
    %v68 = vld [vmem:[%s0 + $0x34] sm:$0xf]
    %v69 = vld [vmem:[%s0 + $0x38] sm:$0xf]
    %v70 = vld [vmem:[%s0 + $0x3c] sm:$0xf]
    %v71 = vld [vmem:[%s1] sm:$0xf]
    %v72 = vld [vmem:[%s1 + $0x4] sm:$0xf]
    %v73 = vld [vmem:[%s1 + $0x8] sm:$0xf]
    %v74 = vld [vmem:[%s1 + $0xc] sm:$0xf]
    %v75 = vld [vmem:[%s1 + $0x10] sm:$0xf]
    %v76 = vld [vmem:[%s1 + $0x14] sm:$0xf]
    %v77 = vld [vmem:[%s1 + $0x18] sm:$0xf]
    %v78 = vld [vmem:[%s1 + $0x1c] sm:$0xf]
    %v79 = vld [vmem:[%s1 + $0x20] sm:$0xf]
    %v80 = vld [vmem:[%s1 + $0x24] sm:$0xf]
    %v81 = vld [vmem:[%s1 + $0x28] sm:$0xf]
    %v82 = vld [vmem:[%s1 + $0x2c] sm:$0xf]
    %v83 = vld [vmem:[%s1 + $0x30] sm:$0xf]
    %v84 = vld [vmem:[%s1 + $0x34] sm:$0xf]
    %v85 = vld [vmem:[%s1 + $0x38] sm:$0xf]
    %v86 = vld [vmem:[%s1 + $0x3c] sm:$0xf]
    %v103 = vunpack.c.l.b16 %v55
    %v104 = vunpack.c.l.b16 %v56
    %v105 = vunpack.c.l.b16 %v57
    %v106 = vunpack.c.l.b16 %v58
    %v107 = vunpack.c.l.b16 %v59
    %v108 = vunpack.c.l.b16 %v60
    %v109 = vunpack.c.l.b16 %v61
    %v110 = vunpack.c.l.b16 %v62
    %v111 = vunpack.c.l.b16 %v63
    %v112 = vunpack.c.l.b16 %v64
    %v113 = vunpack.c.l.b16 %v65
    %v114 = vunpack.c.l.b16 %v66
    %v115 = vunpack.c.l.b16 %v67
    %v116 = vunpack.c.l.b16 %v68
    %v117 = vunpack.c.l.b16 %v69
    %v118 = vunpack.c.l.b16 %v70
    %v119 = vpack.c.b16 %v104, %v103
    %v120 = vpack.c.b16 %v106, %v105
    %v121 = vpack.c.b16 %v108, %v107
    %v122 = vpack.c.b16 %v110, %v109
    %v123 = vpack.c.b16 %v112, %v111
    %v124 = vpack.c.b16 %v114, %v113
    %v125 = vpack.c.b16 %v116, %v115
    %v126 = vpack.c.b16 %v118, %v117
    %v151 = vunpack.c.l.b16 %v71
    %v152 = vunpack.c.l.b16 %v72
    %v153 = vunpack.c.l.b16 %v73
    %v154 = vunpack.c.l.b16 %v74
    %v155 = vunpack.c.l.b16 %v75
    %v156 = vunpack.c.l.b16 %v76
    %v157 = vunpack.c.l.b16 %v77
    %v158 = vunpack.c.l.b16 %v78
    %v159 = vunpack.c.l.b16 %v79
    %v160 = vunpack.c.l.b16 %v80
    %v161 = vunpack.c.l.b16 %v81
    %v162 = vunpack.c.l.b16 %v82
    %v163 = vunpack.c.l.b16 %v83
    %v164 = vunpack.c.l.b16 %v84
    %v165 = vunpack.c.l.b16 %v85
    %v166 = vunpack.c.l.b16 %v86
    %v167 = vpack.c.b16 %v152, %v151
    %v168 = vpack.c.b16 %v154, %v153
    %v169 = vpack.c.b16 %v156, %v155
    %v170 = vpack.c.b16 %v158, %v157
    %v171 = vpack.c.b16 %v160, %v159
    %v172 = vpack.c.b16 %v162, %v161
    %v173 = vpack.c.b16 %v164, %v163
    %v174 = vpack.c.b16 %v166, %v165
    %183 = vmatprep.subr.bf16.mxu0 0
    %184 = vmatpush1.bf16.msra.mxu0 %v174
    %185 = vmatprep.subr.bf16.mxu0 0
    %186 = vmatpush1.bf16.msra.mxu0 %v173
    %187 = vmatprep.subr.bf16.mxu0 0
    %188 = vmatpush1.bf16.msra.mxu0 %v172
    %189 = vmatprep.subr.bf16.mxu0 0
    %190 = vmatpush1.bf16.msra.mxu0 %v171
    %191 = vmatprep.subr.bf16.mxu0 0
    %192 = vmatpush1.bf16.msra.mxu0 %v170
    %193 = vmatprep.subr.bf16.mxu0 0
    %194 = vmatpush1.bf16.msra.mxu0 %v169
    %195 = vmatprep.subr.bf16.mxu0 0
    %196 = vmatpush1.bf16.msra.mxu0 %v168
    %197 = vmatprep.subr.bf16.mxu0 0
    %198 = vmatpush1.bf16.msra.mxu0 %v167
    %199 = vmatprep.subr.bf16.mxu0 0
    %200 = vmatpush2.bf16.msra.mxu0 0
    %201 = vmatprep.subr.bf16.mxu0 0
    %202 = vmatpush2.bf16.msra.mxu0 0
    %203 = vmatprep.subr.bf16.mxu0 0
    %204 = vmatpush2.bf16.msra.mxu0 0
    %205 = vmatprep.subr.bf16.mxu0 0
    %206 = vmatpush2.bf16.msra.mxu0 0
    %207 = vmatprep.subr.bf16.mxu0 0
    %208 = vmatpush2.bf16.msra.mxu0 0
    %209 = vmatprep.subr.bf16.mxu0 0
    %210 = vmatpush2.bf16.msra.mxu0 0
    %211 = vmatprep.subr.bf16.mxu0 0
    %212 = vmatpush2.bf16.msra.mxu0 0
    %213 = vmatprep.subr.bf16.mxu0 0
    %214 = vmatpush2.bf16.msra.mxu0 0
    %215 = vmatprep.mubr.bf16.mxu0 0
    %216 = vmatmul.mubr.bf16.gmra.mxu0 %v119
    %v217 = vpop.f32.mrf.mxu0
    %v218 = vadd.f32 0.0, %v217
    %v219 = vpop.f32.mrf.mxu0
    %v220 = vpop.f32.mrf.mxu0
    %v221 = vadd.f32 0.0, %v220
    %v222 = vpop.f32.mrf.mxu0
    %223 = vmatprep.mubr.bf16.mxu0 0
    %224 = vmatmul.mubr.bf16.gmra.mxu0 %v120
    %v225 = vpop.f32.mrf.mxu0
    %v226 = vadd.f32 0.0, %v225
    %v227 = vpop.f32.mrf.mxu0
    %v228 = vpop.f32.mrf.mxu0
    %v229 = vadd.f32 0.0, %v228
    %v230 = vpop.f32.mrf.mxu0
    %231 = vmatprep.mubr.bf16.mxu0 0
    %232 = vmatmul.mubr.bf16.gmra.mxu0 %v121
    %v233 = vpop.f32.mrf.mxu0
    %v234 = vadd.f32 0.0, %v233
    %v235 = vpop.f32.mrf.mxu0
    %v236 = vpop.f32.mrf.mxu0
    %v237 = vadd.f32 0.0, %v236
    %v238 = vpop.f32.mrf.mxu0
    %239 = vmatprep.mubr.bf16.mxu0 0
    %240 = vmatmul.mubr.bf16.gmra.mxu0 %v122
    %v241 = vpop.f32.mrf.mxu0
    %v242 = vadd.f32 0.0, %v241
    %v243 = vpop.f32.mrf.mxu0
    %v244 = vpop.f32.mrf.mxu0
    %v245 = vadd.f32 0.0, %v244
    %v246 = vpop.f32.mrf.mxu0
    %247 = vmatprep.mubr.bf16.mxu0 0
    %248 = vmatmul.mubr.bf16.gmra.mxu0 %v123
    %v249 = vpop.f32.mrf.mxu0
    %v250 = vadd.f32 0.0, %v249
    %v251 = vpop.f32.mrf.mxu0
    %v252 = vpop.f32.mrf.mxu0
    %v253 = vadd.f32 0.0, %v252
    %v254 = vpop.f32.mrf.mxu0
    %255 = vmatprep.mubr.bf16.mxu0 0
    %256 = vmatmul.mubr.bf16.gmra.mxu0 %v124
    %v257 = vpop.f32.mrf.mxu0
    %v258 = vadd.f32 0.0, %v257
    %v259 = vpop.f32.mrf.mxu0
    %v260 = vpop.f32.mrf.mxu0
    %v261 = vadd.f32 0.0, %v260
    %v262 = vpop.f32.mrf.mxu0
    %263 = vmatprep.mubr.bf16.mxu0 0
    %264 = vmatmul.mubr.bf16.gmra.mxu0 %v125
    %v265 = vpop.f32.mrf.mxu0
    %v266 = vadd.f32 0.0, %v265
    %v267 = vpop.f32.mrf.mxu0
    %v268 = vpop.f32.mrf.mxu0
    %v269 = vadd.f32 0.0, %v268
    %v270 = vpop.f32.mrf.mxu0
    %271 = vmatprep.mubr.bf16.mxu0 0
    %272 = vmatmul.mubr.bf16.gmra.mxu0 %v126
    %v273 = vpop.f32.mrf.mxu0
    %v274 = vadd.f32 0.0, %v273
    %v275 = vpop.f32.mrf.mxu0
    %v276 = vpop.f32.mrf.mxu0
    %v277 = vadd.f32 0.0, %v276
    %v278 = vpop.f32.mrf.mxu0
    %279 = vdwg.mxu0
    %v280 = vadd.f32 %v39, %v218
    %v281 = vadd.f32 %v40, %v221
    %v282 = vadd.f32 %v41, %v226
    %v283 = vadd.f32 %v42, %v229
    %v284 = vadd.f32 %v43, %v234
    %v285 = vadd.f32 %v44, %v237
    %v286 = vadd.f32 %v45, %v242
    %v287 = vadd.f32 %v46, %v245
    %v288 = vadd.f32 %v47, %v250
    %v289 = vadd.f32 %v48, %v253
    %v290 = vadd.f32 %v49, %v258
    %v291 = vadd.f32 %v50, %v261
    %v292 = vadd.f32 %v51, %v266
    %v293 = vadd.f32 %v52, %v269
    %v294 = vadd.f32 %v53, %v274
    %v295 = vadd.f32 %v54, %v277
    %296 = vst [vmem:[#allocation2] sm:$0xff] %v280
    %297 = vst [vmem:[#allocation2 + $0x8] sm:$0xff] %v281
    %298 = vst [vmem:[#allocation2 + $0x10] sm:$0xff] %v282
    %299 = vst [vmem:[#allocation2 + $0x18] sm:$0xff] %v283
    %300 = vst [vmem:[#allocation2 + $0x20] sm:$0xff] %v284
    %301 = vst [vmem:[#allocation2 + $0x28] sm:$0xff] %v285
    %302 = vst [vmem:[#allocation2 + $0x30] sm:$0xff] %v286
    %303 = vst [vmem:[#allocation2 + $0x38] sm:$0xff] %v287
    %304 = vst [vmem:[#allocation2 + $0x40] sm:$0xff] %v288
    %305 = vst [vmem:[#allocation2 + $0x48] sm:$0xff] %v289
    %306 = vst [vmem:[#allocation2 + $0x50] sm:$0xff] %v290
    %307 = vst [vmem:[#allocation2 + $0x58] sm:$0xff] %v291
    %308 = vst [vmem:[#allocation2 + $0x60] sm:$0xff] %v292
    %309 = vst [vmem:[#allocation2 + $0x68] sm:$0xff] %v293
    %310 = vst [vmem:[#allocation2 + $0x70] sm:$0xff] %v294
    %311 = vst [vmem:[#allocation2 + $0x78] sm:$0xff] %v295
    // Predicated region
    $region22: #{_lambda_.25} parent=1 // pred_check
      %p312 = pneg %p19
    $region23: #{_lambda_.25} parent=1 // pred_check_branch
      %314 = sbr.rel (%p312) target = $region25
    $region24: #{_lambda_.25} parent=1 // pred_region
      %v315 = vld [vmem:[#allocation2] sm:$0xff]
      %v316 = vld [vmem:[#allocation2 + $0x8] sm:$0xff]
      %v317 = vld [vmem:[#allocation2 + $0x10] sm:$0xff]
      %v318 = vld [vmem:[#allocation2 + $0x18] sm:$0xff]
      %v319 = vld [vmem:[#allocation2 + $0x20] sm:$0xff]
      %v320 = vld [vmem:[#allocation2 + $0x28] sm:$0xff]
      %v321 = vld [vmem:[#allocation2 + $0x30] sm:$0xff]
      %v322 = vld [vmem:[#allocation2 + $0x38] sm:$0xff]
      %v323 = vld [vmem:[#allocation2 + $0x40] sm:$0xff]
      %v324 = vld [vmem:[#allocation2 + $0x48] sm:$0xff]
      %v325 = vld [vmem:[#allocation2 + $0x50] sm:$0xff]
      %v326 = vld [vmem:[#allocation2 + $0x58] sm:$0xff]
      %v327 = vld [vmem:[#allocation2 + $0x60] sm:$0xff]
      %v328 = vld [vmem:[#allocation2 + $0x68] sm:$0xff]
      %v329 = vld [vmem:[#allocation2 + $0x70] sm:$0xff]
      %v330 = vld [vmem:[#allocation2 + $0x78] sm:$0xff]
      %v331 = vld [vmem:[%s2] sm:$0x1]
      %v333 = vlaneseq
      %v334 = vshrl.u32 %v333, 7
      %v335 = vsub.s32 0, %v334
      %v336 = vrot.slane %v331, %v335
      %v338 = vmul.f32 %v315, %v336
      %v339 = vmul.f32 %v316, %v336
      %v340 = vmul.f32 %v317, %v336
      %v341 = vmul.f32 %v318, %v336
      %v342 = vmul.f32 %v319, %v336
      %v343 = vmul.f32 %v320, %v336
      %v344 = vmul.f32 %v321, %v336
      %v345 = vmul.f32 %v322, %v336
      %v346 = vmul.f32 %v323, %v336
      %v347 = vmul.f32 %v324, %v336
      %v348 = vmul.f32 %v325, %v336
      %v349 = vmul.f32 %v326, %v336
      %v350 = vmul.f32 %v327, %v336
      %v351 = vmul.f32 %v328, %v336
      %v352 = vmul.f32 %v329, %v336
      %v353 = vmul.f32 %v330, %v336
      %v354 = vld [vmem:[%s3] sm:$0x1]
      %v356 = vlaneseq
      %v357 = vshrl.u32 %v356, 7
      %v358 = vsub.s32 0, %v357
      %v359 = vrot.slane %v354, %v358
      %v361 = vadd.f32 %v338, %v359
      %v362 = vadd.f32 %v339, %v359
      %v363 = vadd.f32 %v340, %v359
      %v364 = vadd.f32 %v341, %v359
      %v365 = vadd.f32 %v342, %v359
      %v366 = vadd.f32 %v343, %v359
      %v367 = vadd.f32 %v344, %v359
      %v368 = vadd.f32 %v345, %v359
      %v369 = vadd.f32 %v346, %v359
      %v370 = vadd.f32 %v347, %v359
      %v371 = vadd.f32 %v348, %v359
      %v372 = vadd.f32 %v349, %v359
      %v373 = vadd.f32 %v350, %v359
      %v374 = vadd.f32 %v351, %v359
      %v375 = vadd.f32 %v352, %v359
      %v376 = vadd.f32 %v353, %v359
      %377 = vst [vmem:[#allocation3] sm:$0xff] %v361
      %378 = vst [vmem:[#allocation3 + $0x8] sm:$0xff] %v362
      %379 = vst [vmem:[#allocation3 + $0x10] sm:$0xff] %v363
      %380 = vst [vmem:[#allocation3 + $0x18] sm:$0xff] %v364
      %381 = vst [vmem:[#allocation3 + $0x20] sm:$0xff] %v365
      %382 = vst [vmem:[#allocation3 + $0x28] sm:$0xff] %v366
      %383 = vst [vmem:[#allocation3 + $0x30] sm:$0xff] %v367
      %384 = vst [vmem:[#allocation3 + $0x38] sm:$0xff] %v368
      %385 = vst [vmem:[#allocation3 + $0x40] sm:$0xff] %v369
      %386 = vst [vmem:[#allocation3 + $0x48] sm:$0xff] %v370
      %387 = vst [vmem:[#allocation3 + $0x50] sm:$0xff] %v371
      %388 = vst [vmem:[#allocation3 + $0x58] sm:$0xff] %v372
      %389 = vst [vmem:[#allocation3 + $0x60] sm:$0xff] %v373
      %390 = vst [vmem:[#allocation3 + $0x68] sm:$0xff] %v374
      %391 = vst [vmem:[#allocation3 + $0x70] sm:$0xff] %v375
      %392 = vst [vmem:[#allocation3 + $0x78] sm:$0xff] %v376
    $region25: #{_lambda_.25} parent=1 // pred_fallthru
      _
    // Predicated region
    $region26: #{_lambda_.25} parent=1 // pred_check
      _
    $region27: #{_lambda_.25} parent=1 // pred_check_branch
      %394 = sbr.rel (0) target = $region29
    $region28: #{_lambda_.25} parent=1 // pred_region
      %s396 = ssub.s32 2048, 2048
      %397 = vsyncadd [#allocation4], %s396
      %s398 = sshll.u32 [#allocation3], 4
      %s399 = int_to_ptr.vmem [resolvable:$true] %s398
      %404 = dma.vmem_to_hbm [thread:$0]  %s399, 2048, %s4, [#allocation4], 128, 128, 8
    $region29: #{_lambda_.25} parent=1 // pred_fallthru
      _
    // Predicated region
    $region30: #{_lambda_.25} parent=1 // pred_check
      _
    $region31: #{_lambda_.25} parent=1 // pred_check_branch
      %406 = sbr.rel (0) target = $region33
    $region32: #{_lambda_.25} parent=1 // pred_region
      %407 = dma.done [#allocation4], 2048
    $region33: #{_lambda_.25} parent=1 // pred_fallthru
      _
    %408 = vsyncpa [#allocation4], 1

</llo_original>
